<compile_context>
chip_gen: v6e
topology: v6e:2x2x1
jax: 0.10.0
libtpu: 0.0.40
codegen_flags: <defaults>
</compile_context>

<pallas_src>
import functools
import math

import jax
import jax.numpy as jnp
from jax import lax
from jax.experimental import pallas as pl
from jax.experimental.pallas import tpu as pltpu

# ---------------------------------------------------------------------------
# Synthetic "config" (small shapes, deterministic)
# ---------------------------------------------------------------------------
SYMBOLS_LEN = 20          # len(symbols)
NUM_TONES = 4             # num_tones
SEMANTIC_KMEANS_NUM = 32  # semantic_kmeans_num
PAD_ID = 0

TOKEN_SIZE = SYMBOLS_LEN + SEMANTIC_KMEANS_NUM + NUM_TONES   # 56
BOS_ID = TOKEN_SIZE                                          # 56
SEQ_ID = TOKEN_SIZE + 1                                      # 57
EOS_ID = TOKEN_SIZE + 2                                      # 58
VOCAB = TOKEN_SIZE + 3                                       # 59

HIDDEN = 32
N_HEADS = 4
HEAD_DIM = HIDDEN // N_HEADS
INTERMEDIATE = 64
N_LAYERS = 2
RMS_EPS = 1e-6
ROPE_THETA = 10000.0
V_PAD = 128               # lane-dense padded lm_head width (>= VOCAB)
LANE = 128                # TPU lane width; fused-projection chunk stride


# ---------------------------------------------------------------------------
# Fused Pallas kernel: all layers + final norm + lm_head (single invocation)
# ---------------------------------------------------------------------------
def _rmsnorm(h, w, eps=RMS_EPS):
    var = jnp.mean(h * h, axis=-1, keepdims=True)
    return h * lax.rsqrt(var + eps) * w


def _llama_fused_kernel(x_ref, bias_ref, cos_ref, sin_ref, ln1_ref, wqkvr_ref,
                        wo_ref, ln2_ref, wgu_ref, wdown_ref, fnorm_ref,
                        wlm_ref, o_ref, *, n_layers, n_heads, head_dim,
                        hidden, inter):
    N = x_ref.shape[0]                       # B*S flattened rows
    H = hidden
    bf16 = jnp.bfloat16

    cos_p = cos_ref[...]                     # (N, H) f32, per-row RoPE cos
    sin_p = sin_ref[...]                     # (N, H) f32
    bias = bias_ref[...]                     # (N, N) f32 block-diag causal bias
    x = x_ref[...]                           # (N, H) f32 residual stream

    def heads(t):                            # (N, H) -> (N, n_heads, head_dim)
        return t.astype(bf16).reshape(N, n_heads, head_dim)

    # Static (fully unrolled) layer loop -- all weights are VMEM-resident.
    for l in range(n_layers):
        # ---- self attention ----
        h = _rmsnorm(x, ln1_ref[l]).astype(bf16)
        # Fused, lane-aligned [q | k | v | q@R | k@R] projection.  R is the
        # per-head rotate-half permutation and 1/sqrt(head_dim) is folded into
        # the q columns; every chunk sits in its own 128-lane tile, so chunk
        # slices below start at 128-lane boundaries (no XLU lane rotates).
        qkvr = jnp.dot(h, wqkvr_ref[l], preferred_element_type=jnp.float32)
        q = (qkvr[:, 0 * LANE:0 * LANE + H] * cos_p
             + qkvr[:, 3 * LANE:3 * LANE + H] * sin_p)
        k = (qkvr[:, 1 * LANE:1 * LANE + H] * cos_p
             + qkvr[:, 4 * LANE:4 * LANE + H] * sin_p)
        v = qkvr[:, 2 * LANE:2 * LANE + H]

        s = jnp.einsum('qhd,khd->hqk', heads(q), heads(k),
                       preferred_element_type=jnp.float32) + bias
        m = jnp.max(s, axis=-1, keepdims=True)
        p = jnp.exp(s - m)
        p = p * pl.reciprocal(jnp.sum(p, axis=-1, keepdims=True), approx=True)
        ctx = jnp.einsum('hqk,khd->qhd', p.astype(bf16), heads(v),
                         preferred_element_type=jnp.float32)
        attn = jnp.dot(ctx.reshape(N, H).astype(bf16), wo_ref[l],
                       preferred_element_type=jnp.float32)
        x = x + attn

        # ---- SwiGLU MLP (gate|up fused, lane-aligned chunks) ----
        h2 = _rmsnorm(x, ln2_ref[l]).astype(bf16)
        gu = jnp.dot(h2, wgu_ref[l], preferred_element_type=jnp.float32)
        g = gu[:, 0 * LANE:0 * LANE + inter]
        u = gu[:, 1 * LANE:1 * LANE + inter]
        mlp = jnp.dot((g * jax.nn.sigmoid(g) * u).astype(bf16), wdown_ref[l],
                      preferred_element_type=jnp.float32)
        x = x + mlp

    # ---- final norm + lane-dense (128-wide) lm_head ----
    hf = _rmsnorm(x, fnorm_ref[...]).astype(bf16)
    o_ref[...] = jnp.dot(hf, wlm_ref[...], preferred_element_type=jnp.float32)


def fused_forward_call(x2d, bias, cos_f, sin_f, p):
    N, H = x2d.shape
    kernel = functools.partial(_llama_fused_kernel, n_layers=N_LAYERS,
                               n_heads=N_HEADS, head_dim=HEAD_DIM,
                               hidden=HIDDEN, inter=INTERMEDIATE)

    per_layer_flops = (2 * N * H * 5 * LANE                  # fused QKV(+rot)
                       + 4 * N_HEADS * N * N * HEAD_DIM      # scores + ctx
                       + 2 * N * H * H                       # Wo
                       + 2 * N * H * 2 * LANE                # gate|up (padded)
                       + 2 * N * INTERMEDIATE * H)           # down
    flops = N_LAYERS * per_layer_flops + 2 * N * H * V_PAD
    transc = N_LAYERS * (N_HEADS * N * N + N * INTERMEDIATE + 3 * N) + N
    weight_bytes = sum(int(w.size) * w.dtype.itemsize
                       for w in (p['ln1'], p['wqkvr'], p['wo'], p['ln2'],
                                 p['wgu'], p['wdown'], p['final_norm'],
                                 p['wlm']))
    bytes_accessed = weight_bytes + 4 * int(x2d.size + bias.size + cos_f.size
                                            + sin_f.size + N * V_PAD)

    vmem_spec = pl.BlockSpec(memory_space=pltpu.MemorySpace.VMEM)
    return pl.pallas_call(
        kernel,
        out_shape=jax.ShapeDtypeStruct((N, V_PAD), jnp.float32),
        in_specs=[vmem_spec] * 12,
        out_specs=vmem_spec,
        compiler_params=pltpu.CompilerParams(
            vmem_limit_bytes=32 * 1024 * 1024),
        cost_estimate=pl.CostEstimate(flops=int(flops),
                                      transcendentals=int(transc),
                                      bytes_accessed=int(bytes_accessed)),
    )(x2d, bias, cos_f, sin_f, p['ln1'], p['wqkvr'], p['wo'], p['ln2'],
      p['wgu'], p['wdown'], p['final_norm'], p['wlm'])


# ---------------------------------------------------------------------------
# Parameter init (PyTorch shapes: Linear weight = (out, in)) + one-time prep
# ---------------------------------------------------------------------------
def init_params(key):
    def nrm(k, shape, s=0.02):
        return s * jax.random.normal(k, shape, dtype=jnp.float32)

    keys = iter(jax.random.split(key, 8 + N_LAYERS * 16))
    p = {
        'phone_emb': nrm(next(keys), (VOCAB, HIDDEN)),
        'tone_emb': nrm(next(keys), (VOCAB, HIDDEN)),
        'embed_tokens': nrm(next(keys), (VOCAB, HIDDEN)),
        'final_norm': jnp.ones((HIDDEN,), jnp.float32),
        'lm_head': nrm(next(keys), (VOCAB, HIDDEN)),
        'layers': [],
    }
    for _ in range(N_LAYERS):
        p['layers'].append({
            'wq': nrm(next(keys), (HIDDEN, HIDDEN)),
            'wk': nrm(next(keys), (HIDDEN, HIDDEN)),
            'wv': nrm(next(keys), (HIDDEN, HIDDEN)),
            'wo': nrm(next(keys), (HIDDEN, HIDDEN)),
            'ln1': jnp.ones((HIDDEN,), jnp.float32),
            'ln2': jnp.ones((HIDDEN,), jnp.float32),
            'w_gate': nrm(next(keys), (INTERMEDIATE, HIDDEN)),
            'w_up': nrm(next(keys), (INTERMEDIATE, HIDDEN)),
            'w_down': nrm(next(keys), (HIDDEN, INTERMEDIATE)),
        })
    return p


def prepare_params(p):
    """One-time (outside jit) weight layout prep: transpose to (in, out), fold
    rotate-half + score scale into the q/k columns, pad every fused chunk to a
    128-lane tile, fuse gate|up, pad lm_head to 128 lanes, stack per-layer
    weights on a leading layer axis, and cast matmul weights to bf16."""
    H, d, nh = HIDDEN, HEAD_DIM, N_HEADS
    half = d // 2
    # rotate_half(q) == q @ Rh (per head); block-diag over packed heads.
    Rh = jnp.zeros((d, d), jnp.float32)
    Rh = Rh.at[half:, :half].set(-jnp.eye(half, dtype=jnp.float32))
    Rh = Rh.at[:half, half:].set(jnp.eye(half, dtype=jnp.float32))
    Rfull = jnp.kron(jnp.eye(nh, dtype=jnp.float32), Rh)            # (H, H)
    scale = 1.0 / math.sqrt(d)

    def lane_pad(w):   # pad last dim of (H, c<=128) up to one 128-lane tile
        out = jnp.zeros((w.shape[0], LANE), jnp.float32)
        return out.at[:, :w.shape[1]].set(w)

    ln1, ln2, wqkvr, wo, wgu, wdown = [], [], [], [], [], []
    for lp in p['layers']:
        wq_t = lp['wq'].T * scale            # fold 1/sqrt(head_dim) into q
        wk_t = lp['wk'].T
        wv_t = lp['wv'].T
        wqkvr.append(jnp.concatenate(
            [lane_pad(wq_t), lane_pad(wk_t), lane_pad(wv_t),
             lane_pad(wq_t @ Rfull), lane_pad(wk_t @ Rfull)],
            axis=1))                                                 # (H, 5*128)
        wo.append(lp['wo'].T)                                        # (H, H)
        wgu.append(jnp.concatenate(
            [lane_pad(lp['w_gate'].T), lane_pad(lp['w_up'].T)],
            axis=1))                                                 # (H, 2*128)
        wdown.append(lp['w_down'].T)                                 # (I, H)
        ln1.append(lp['ln1'].reshape(1, H))
        ln2.append(lp['ln2'].reshape(1, H))

    wlm_pad = jnp.zeros((H, V_PAD), jnp.float32).at[:, :VOCAB].set(
        p['lm_head'].T)

    bf16 = jnp.bfloat16
    return {
        'phone_emb': p['phone_emb'],
        'tone_emb': p['tone_emb'],
        'embed_tokens': p['embed_tokens'],
        'ln1': jnp.stack(ln1), 'ln2': jnp.stack(ln2),
        'wqkvr': jnp.stack(wqkvr).astype(bf16),
        'wo': jnp.stack(wo).astype(bf16),
        'wgu': jnp.stack(wgu).astype(bf16),
        'wdown': jnp.stack(wdown).astype(bf16),
        'final_norm': p['final_norm'].reshape(1, H),
        'wlm': wlm_pad.astype(bf16),
    }


# ---------------------------------------------------------------------------
# Forward (matches Llama.forward with input_ids=None)
# ---------------------------------------------------------------------------
def build_inputs_embeds(params, phone, tone, semantic):
    B, T = phone.shape
    phone_emb = params['phone_emb'][phone]                       # (B, T, H)
    tone_emb = params['tone_emb'][tone]                          # (B, T, H)
    seq_emb = jnp.broadcast_to(params['phone_emb'][SEQ_ID][None, None, :],
                               (B, 1, HIDDEN))
    bos_emb = jnp.broadcast_to(params['phone_emb'][BOS_ID][None, None, :],
                               (B, 1, HIDDEN))
    eos_emb = jnp.broadcast_to(params['embed_tokens'][EOS_ID][None, None, :],
                               (B, 1, HIDDEN))
    phone_tone_emb = phone_emb + tone_emb
    phone_tone_emb = jnp.concatenate([bos_emb, phone_tone_emb, seq_emb], axis=1)
    semantic_emb = params['embed_tokens'][semantic]
    semantic_emb = jnp.concatenate([semantic_emb, eos_emb], axis=1)
    return jnp.concatenate([phone_tone_emb, semantic_emb], axis=1)


def rope_tables_packed(S):
    inv_freq = 1.0 / (ROPE_THETA ** (
        jnp.arange(0, HEAD_DIM, 2, dtype=jnp.float32) / HEAD_DIM))
    pos = jnp.arange(S, dtype=jnp.float32)
    freqs = pos[:, None] * inv_freq[None, :]
    emb = jnp.concatenate([freqs, freqs], axis=-1)               # (S, head_dim)
    # tile per head so RoPE applies to the packed (S, H) q/k directly
    return (jnp.tile(jnp.cos(emb), (1, N_HEADS)),
            jnp.tile(jnp.sin(emb), (1, N_HEADS)))


def build_attn_bias(B, S):
    """Additive attention bias for the batch-folded (B*S, B*S) score matrix:
    0 where (same batch AND causal), -1e30 elsewhere."""
    N = B * S
    idx = jnp.arange(N, dtype=jnp.int32)
    same_batch = (idx[:, None] // S) == (idx[None, :] // S)
    causal = idx[None, :] <= idx[:, None]
    return jnp.where(same_batch & causal, 0.0, -1e30).astype(jnp.float32)


def llama_forward(prepped, phone, tone, semantic):
    # TODO(synk): attention_mask / labels / past_key_values / input_ids paths
    # of LlamaForCausalLM are not exercised by the input_ids=None branch and
    # are not implemented (block-diag causal mask only; logits are the output).
    x = build_inputs_embeds(prepped, phone, tone, semantic)      # (B, S, H)
    B, S, H = x.shape
    N = B * S
    cos_p, sin_p = rope_tables_packed(S)                         # (S, H)
    cos_f = jnp.tile(cos_p, (B, 1))                              # (N, H)
    sin_f = jnp.tile(sin_p, (B, 1))
    bias = build_attn_bias(B, S)                                 # (N, N)
    logits_pad = fused_forward_call(x.reshape(N, H), bias, cos_f, sin_f,
                                    prepped)                     # (N, 128)
    return logits_pad.reshape(B, S, V_PAD)[:, :, :VOCAB]         # (B, S, V)


# ---------------------------------------------------------------------------
if __name__ == "__main__":
    key = jax.random.PRNGKey(0)
    kp, kt, ks, kw = jax.random.split(key, 4)

    params = init_params(kw)
    prepped = prepare_params(params)        # one-time layout prep (outside jit)

    B, T_PHONE, T_SEM = 2, 5, 8
    phone = jax.random.randint(kp, (B, T_PHONE), 0, SYMBOLS_LEN, dtype=jnp.int32)
    tone = jax.random.randint(kt, (B, T_PHONE), 0, NUM_TONES, dtype=jnp.int32)
    semantic = jax.random.randint(
        ks, (B, T_SEM), SYMBOLS_LEN - 1, SYMBOLS_LEN - 1 + SEMANTIC_KMEANS_NUM,
        dtype=jnp.int32)

    logits = jax.jit(llama_forward)(prepped, phone, tone, semantic)
    jax.block_until_ready(logits)

    expected_seq = (T_PHONE + 2) + (T_SEM + 1)
    assert logits.shape == (B, expected_seq, VOCAB), logits.shape
    assert logits.dtype == jnp.float32
    assert bool(jnp.all(jnp.isfinite(logits)))
    print("KERNEL_OK")
</pallas_src>

<mosaic_0001>
module attributes {stable_mosaic.version = 11 : i64} {
  func.func @_llama_fused_kernel(%arg0: memref<32x32xf32, #tpu.memory_space<vmem>>, %arg1: memref<32x32xf32, #tpu.memory_space<vmem>>, %arg2: memref<32x32xf32, #tpu.memory_space<vmem>>, %arg3: memref<32x32xf32, #tpu.memory_space<vmem>>, %arg4: memref<2x1x32xf32, #tpu.memory_space<vmem>>, %arg5: memref<2x32x640xbf16, #tpu.memory_space<vmem>>, %arg6: memref<2x32x32xbf16, #tpu.memory_space<vmem>>, %arg7: memref<2x1x32xf32, #tpu.memory_space<vmem>>, %arg8: memref<2x32x256xbf16, #tpu.memory_space<vmem>>, %arg9: memref<2x64x32xbf16, #tpu.memory_space<vmem>>, %arg10: memref<1x32xf32, #tpu.memory_space<vmem>>, %arg11: memref<32x128xbf16, #tpu.memory_space<vmem>>, %arg12: memref<32x128xf32, #tpu.memory_space<vmem>>) attributes {dimension_semantics = [], scalar_prefetch = 0 : i64, scratch_operands = 0 : i64, tpu.core_type = #tpu.core_type<tc>} {
    %c0 = arith.constant 0 : index
    %c0_0 = arith.constant 0 : index
    %0 = vector.load %arg2[%c0, %c0_0] : memref<32x32xf32, #tpu.memory_space<vmem>>, vector<32x32xf32>
    %c0_1 = arith.constant 0 : index
    %c0_2 = arith.constant 0 : index
    %1 = vector.load %arg3[%c0_1, %c0_2] : memref<32x32xf32, #tpu.memory_space<vmem>>, vector<32x32xf32>
    %c0_3 = arith.constant 0 : index
    %c0_4 = arith.constant 0 : index
    %2 = vector.load %arg1[%c0_3, %c0_4] : memref<32x32xf32, #tpu.memory_space<vmem>>, vector<32x32xf32>
    %c0_5 = arith.constant 0 : index
    %c0_6 = arith.constant 0 : index
    %3 = vector.load %arg0[%c0_5, %c0_6] : memref<32x32xf32, #tpu.memory_space<vmem>>, vector<32x32xf32>
    %c0_7 = arith.constant 0 : index
    %c0_8 = arith.constant 0 : index
    %c0_9 = arith.constant 0 : index
    %4 = vector.load %arg4[%c0_7, %c0_8, %c0_9] : memref<2x1x32xf32, #tpu.memory_space<vmem>>, vector<1x1x32xf32>
    %5 = vector.shape_cast %4 : vector<1x1x32xf32> to vector<1x32xf32>
    %6 = arith.mulf %3, %3 : vector<32x32xf32>
    %cst = arith.constant dense<0.000000e+00> : vector<32xf32>
    %7 = vector.multi_reduction <add>, %6, %cst [1] : vector<32x32xf32> to vector<32xf32>
    %8 = vector.shape_cast %7 : vector<32xf32> to vector<32x1xf32>
    %cst_10 = arith.constant 3.200000e+01 : f32
    %9 = vector.broadcast %cst_10 : f32 to vector<32x1xf32>
    %10 = arith.divf %8, %9 : vector<32x1xf32>
    %cst_11 = arith.constant 9.99999997E-7 : f32
    %11 = vector.broadcast %cst_11 : f32 to vector<32x1xf32>
    %12 = arith.addf %10, %11 : vector<32x1xf32>
    %13 = math.rsqrt %12 : vector<32x1xf32>
    %14 = vector.broadcast %13 : vector<32x1xf32> to vector<32x32xf32>
    %15 = arith.mulf %3, %14 : vector<32x32xf32>
    %16 = vector.broadcast %5 : vector<1x32xf32> to vector<32x32xf32>
    %17 = arith.mulf %15, %16 : vector<32x32xf32>
    %18 = arith.truncf %17 : vector<32x32xf32> to vector<32x32xbf16>
    %c0_12 = arith.constant 0 : index
    %c0_13 = arith.constant 0 : index
    %c0_14 = arith.constant 0 : index
    %19 = vector.load %arg5[%c0_12, %c0_13, %c0_14] : memref<2x32x640xbf16, #tpu.memory_space<vmem>>, vector<1x32x640xbf16>
    %20 = vector.shape_cast %19 : vector<1x32x640xbf16> to vector<32x640xbf16>
    %cst_15 = arith.constant dense<0.000000e+00> : vector<32x640xf32>
    %21 = tpu.matmul %18, %20, %cst_15 {dimension_numbers = #tpu.dot_dimension_numbers<[1], [0], [0], [1], [0, 0, 1, 1], [], []>} : vector<32x32xbf16>, vector<32x640xbf16>, vector<32x640xf32> -> vector<32x640xf32>
    %22 = vector.extract_strided_slice %21 {offsets = [0, 0], sizes = [32, 32], strides = [1, 1]} : vector<32x640xf32> to vector<32x32xf32>
    %23 = arith.mulf %22, %0 : vector<32x32xf32>
    %24 = vector.extract_strided_slice %21 {offsets = [0, 384], sizes = [32, 32], strides = [1, 1]} : vector<32x640xf32> to vector<32x32xf32>
    %25 = arith.mulf %24, %1 : vector<32x32xf32>
    %26 = arith.addf %23, %25 : vector<32x32xf32>
    %27 = vector.extract_strided_slice %21 {offsets = [0, 128], sizes = [32, 32], strides = [1, 1]} : vector<32x640xf32> to vector<32x32xf32>
    %28 = arith.mulf %27, %0 : vector<32x32xf32>
    %29 = vector.extract_strided_slice %21 {offsets = [0, 512], sizes = [32, 32], strides = [1, 1]} : vector<32x640xf32> to vector<32x32xf32>
    %30 = arith.mulf %29, %1 : vector<32x32xf32>
    %31 = arith.addf %28, %30 : vector<32x32xf32>
    %32 = vector.extract_strided_slice %21 {offsets = [0, 256], sizes = [32, 32], strides = [1, 1]} : vector<32x640xf32> to vector<32x32xf32>
    %33 = arith.truncf %26 : vector<32x32xf32> to vector<32x32xbf16>
    %34 = vector.shape_cast %33 : vector<32x32xbf16> to vector<32x4x8xbf16>
    %35 = arith.truncf %31 : vector<32x32xf32> to vector<32x32xbf16>
    %36 = vector.shape_cast %35 : vector<32x32xbf16> to vector<32x4x8xbf16>
    "tpu.trace_start"() <{level = 10 : i32, message = "qhd,khd->hqk"}> : () -> ()
    %cst_16 = arith.constant dense<0.000000e+00> : vector<4x32x32xf32>
    %37 = tpu.matmul %34, %36, %cst_16 {dimension_numbers = #tpu.dot_dimension_numbers<[2], [2], [0], [0], [0, 1, 0, 0, 1, 0], [1], [1]>} : vector<32x4x8xbf16>, vector<32x4x8xbf16>, vector<4x32x32xf32> -> vector<4x32x32xf32>
    "tpu.trace_stop"() : () -> ()
    %38 = vector.shape_cast %2 : vector<32x32xf32> to vector<1x32x32xf32>
    %39 = vector.broadcast %38 : vector<1x32x32xf32> to vector<4x32x32xf32>
    %40 = arith.addf %37, %39 : vector<4x32x32xf32>
    %cst_17 = arith.constant dense<0xFF800000> : vector<4x32xf32>
    %41 = vector.multi_reduction <maximumf>, %40, %cst_17 [2] : vector<4x32x32xf32> to vector<4x32xf32>
    %42 = vector.shape_cast %41 : vector<4x32xf32> to vector<4x32x1xf32>
    %43 = vector.broadcast %42 : vector<4x32x1xf32> to vector<4x32x32xf32>
    %44 = arith.subf %40, %43 : vector<4x32x32xf32>
    %45 = math.exp %44 : vector<4x32x32xf32>
    %cst_18 = arith.constant dense<0.000000e+00> : vector<4x32xf32>
    %46 = vector.multi_reduction <add>, %45, %cst_18 [2] : vector<4x32x32xf32> to vector<4x32xf32>
    %47 = vector.shape_cast %46 : vector<4x32xf32> to vector<4x32x1xf32>
    %48 = tpu.reciprocal %47 {approx = true} : vector<4x32x1xf32> -> vector<4x32x1xf32>
    %49 = vector.broadcast %48 : vector<4x32x1xf32> to vector<4x32x32xf32>
    %50 = arith.mulf %45, %49 : vector<4x32x32xf32>
    %51 = arith.truncf %50 : vector<4x32x32xf32> to vector<4x32x32xbf16>
    %52 = arith.truncf %32 : vector<32x32xf32> to vector<32x32xbf16>
    %53 = vector.shape_cast %52 : vector<32x32xbf16> to vector<32x4x8xbf16>
    "tpu.trace_start"() <{level = 10 : i32, message = "hqk,khd->qhd"}> : () -> ()
    %cst_19 = arith.constant dense<0.000000e+00> : vector<4x8x32xf32>
    %54 = tpu.matmul %53, %51, %cst_19 {dimension_numbers = #tpu.dot_dimension_numbers<[0], [2], [2], [1], [0, 1, 0, 2, 1, 1], [1], [0]>} : vector<32x4x8xbf16>, vector<4x32x32xbf16>, vector<4x8x32xf32> -> vector<4x8x32xf32>
    %55 = tpu.transpose %54, [2, 0, 1] : vector<4x8x32xf32> -> vector<32x4x8xf32>
    "tpu.trace_stop"() : () -> ()
    %56 = vector.shape_cast %55 : vector<32x4x8xf32> to vector<32x32xf32>
    %57 = arith.truncf %56 : vector<32x32xf32> to vector<32x32xbf16>
    %c0_20 = arith.constant 0 : index
    %c0_21 = arith.constant 0 : index
    %c0_22 = arith.constant 0 : index
    %58 = vector.load %arg6[%c0_20, %c0_21, %c0_22] : memref<2x32x32xbf16, #tpu.memory_space<vmem>>, vector<1x32x32xbf16>
    %59 = vector.shape_cast %58 : vector<1x32x32xbf16> to vector<32x32xbf16>
    %cst_23 = arith.constant dense<0.000000e+00> : vector<32x32xf32>
    %60 = tpu.matmul %57, %59, %cst_23 {dimension_numbers = #tpu.dot_dimension_numbers<[1], [0], [0], [1], [0, 0, 1, 1], [], []>} : vector<32x32xbf16>, vector<32x32xbf16>, vector<32x32xf32> -> vector<32x32xf32>
    %61 = arith.addf %3, %60 : vector<32x32xf32>
    %c0_24 = arith.constant 0 : index
    %c0_25 = arith.constant 0 : index
    %c0_26 = arith.constant 0 : index
    %62 = vector.load %arg7[%c0_24, %c0_25, %c0_26] : memref<2x1x32xf32, #tpu.memory_space<vmem>>, vector<1x1x32xf32>
    %63 = vector.shape_cast %62 : vector<1x1x32xf32> to vector<1x32xf32>
    %64 = arith.mulf %61, %61 : vector<32x32xf32>
    %cst_27 = arith.constant dense<0.000000e+00> : vector<32xf32>
    %65 = vector.multi_reduction <add>, %64, %cst_27 [1] : vector<32x32xf32> to vector<32xf32>
    %66 = vector.shape_cast %65 : vector<32xf32> to vector<32x1xf32>
    %cst_28 = arith.constant 3.200000e+01 : f32
    %67 = vector.broadcast %cst_28 : f32 to vector<32x1xf32>
    %68 = arith.divf %66, %67 : vector<32x1xf32>
    %cst_29 = arith.constant 9.99999997E-7 : f32
    %69 = vector.broadcast %cst_29 : f32 to vector<32x1xf32>
    %70 = arith.addf %68, %69 : vector<32x1xf32>
    %71 = math.rsqrt %70 : vector<32x1xf32>
    %72 = vector.broadcast %71 : vector<32x1xf32> to vector<32x32xf32>
    %73 = arith.mulf %61, %72 : vector<32x32xf32>
    %74 = vector.broadcast %63 : vector<1x32xf32> to vector<32x32xf32>
    %75 = arith.mulf %73, %74 : vector<32x32xf32>
    %76 = arith.truncf %75 : vector<32x32xf32> to vector<32x32xbf16>
    %c0_30 = arith.constant 0 : index
    %c0_31 = arith.constant 0 : index
    %c0_32 = arith.constant 0 : index
    %77 = vector.load %arg8[%c0_30, %c0_31, %c0_32] : memref<2x32x256xbf16, #tpu.memory_space<vmem>>, vector<1x32x256xbf16>
    %78 = vector.shape_cast %77 : vector<1x32x256xbf16> to vector<32x256xbf16>
    %cst_33 = arith.constant dense<0.000000e+00> : vector<32x256xf32>
    %79 = tpu.matmul %76, %78, %cst_33 {dimension_numbers = #tpu.dot_dimension_numbers<[1], [0], [0], [1], [0, 0, 1, 1], [], []>} : vector<32x32xbf16>, vector<32x256xbf16>, vector<32x256xf32> -> vector<32x256xf32>
    %80 = vector.extract_strided_slice %79 {offsets = [0, 0], sizes = [32, 64], strides = [1, 1]} : vector<32x256xf32> to vector<32x64xf32>
    %81 = vector.extract_strided_slice %79 {offsets = [0, 128], sizes = [32, 64], strides = [1, 1]} : vector<32x256xf32> to vector<32x64xf32>
    %82 = arith.negf %80 : vector<32x64xf32>
    %83 = math.exp %82 : vector<32x64xf32>
    %cst_34 = arith.constant 1.000000e+00 : f32
    %84 = vector.broadcast %cst_34 : f32 to vector<32x64xf32>
    %85 = arith.addf %84, %83 : vector<32x64xf32>
    %86 = arith.divf %84, %85 : vector<32x64xf32>
    %87 = arith.mulf %80, %86 : vector<32x64xf32>
    %88 = arith.mulf %87, %81 : vector<32x64xf32>
    %89 = arith.truncf %88 : vector<32x64xf32> to vector<32x64xbf16>
    %c0_35 = arith.constant 0 : index
    %c0_36 = arith.constant 0 : index
    %c0_37 = arith.constant 0 : index
    %90 = vector.load %arg9[%c0_35, %c0_36, %c0_37] : memref<2x64x32xbf16, #tpu.memory_space<vmem>>, vector<1x64x32xbf16>
    %91 = vector.shape_cast %90 : vector<1x64x32xbf16> to vector<64x32xbf16>
    %cst_38 = arith.constant dense<0.000000e+00> : vector<32x32xf32>
    %92 = tpu.matmul %89, %91, %cst_38 {dimension_numbers = #tpu.dot_dimension_numbers<[1], [0], [0], [1], [0, 0, 1, 1], [], []>} : vector<32x64xbf16>, vector<64x32xbf16>, vector<32x32xf32> -> vector<32x32xf32>
    %93 = arith.addf %61, %92 : vector<32x32xf32>
    %c1 = arith.constant 1 : index
    %c0_39 = arith.constant 0 : index
    %c0_40 = arith.constant 0 : index
    %94 = vector.load %arg4[%c1, %c0_39, %c0_40] : memref<2x1x32xf32, #tpu.memory_space<vmem>>, vector<1x1x32xf32>
    %95 = vector.shape_cast %94 : vector<1x1x32xf32> to vector<1x32xf32>
    %96 = arith.mulf %93, %93 : vector<32x32xf32>
    %cst_41 = arith.constant dense<0.000000e+00> : vector<32xf32>
    %97 = vector.multi_reduction <add>, %96, %cst_41 [1] : vector<32x32xf32> to vector<32xf32>
    %98 = vector.shape_cast %97 : vector<32xf32> to vector<32x1xf32>
    %cst_42 = arith.constant 3.200000e+01 : f32
    %99 = vector.broadcast %cst_42 : f32 to vector<32x1xf32>
    %100 = arith.divf %98, %99 : vector<32x1xf32>
    %cst_43 = arith.constant 9.99999997E-7 : f32
    %101 = vector.broadcast %cst_43 : f32 to vector<32x1xf32>
    %102 = arith.addf %100, %101 : vector<32x1xf32>
    %103 = math.rsqrt %102 : vector<32x1xf32>
    %104 = vector.broadcast %103 : vector<32x1xf32> to vector<32x32xf32>
    %105 = arith.mulf %93, %104 : vector<32x32xf32>
    %106 = vector.broadcast %95 : vector<1x32xf32> to vector<32x32xf32>
    %107 = arith.mulf %105, %106 : vector<32x32xf32>
    %108 = arith.truncf %107 : vector<32x32xf32> to vector<32x32xbf16>
    %c1_44 = arith.constant 1 : index
    %c0_45 = arith.constant 0 : index
    %c0_46 = arith.constant 0 : index
    %109 = vector.load %arg5[%c1_44, %c0_45, %c0_46] : memref<2x32x640xbf16, #tpu.memory_space<vmem>>, vector<1x32x640xbf16>
    %110 = vector.shape_cast %109 : vector<1x32x640xbf16> to vector<32x640xbf16>
    %cst_47 = arith.constant dense<0.000000e+00> : vector<32x640xf32>
    %111 = tpu.matmul %108, %110, %cst_47 {dimension_numbers = #tpu.dot_dimension_numbers<[1], [0], [0], [1], [0, 0, 1, 1], [], []>} : vector<32x32xbf16>, vector<32x640xbf16>, vector<32x640xf32> -> vector<32x640xf32>
    %112 = vector.extract_strided_slice %111 {offsets = [0, 0], sizes = [32, 32], strides = [1, 1]} : vector<32x640xf32> to vector<32x32xf32>
    %113 = arith.mulf %112, %0 : vector<32x32xf32>
    %114 = vector.extract_strided_slice %111 {offsets = [0, 384], sizes = [32, 32], strides = [1, 1]} : vector<32x640xf32> to vector<32x32xf32>
    %115 = arith.mulf %114, %1 : vector<32x32xf32>
    %116 = arith.addf %113, %115 : vector<32x32xf32>
    %117 = vector.extract_strided_slice %111 {offsets = [0, 128], sizes = [32, 32], strides = [1, 1]} : vector<32x640xf32> to vector<32x32xf32>
    %118 = arith.mulf %117, %0 : vector<32x32xf32>
    %119 = vector.extract_strided_slice %111 {offsets = [0, 512], sizes = [32, 32], strides = [1, 1]} : vector<32x640xf32> to vector<32x32xf32>
    %120 = arith.mulf %119, %1 : vector<32x32xf32>
    %121 = arith.addf %118, %120 : vector<32x32xf32>
    %122 = vector.extract_strided_slice %111 {offsets = [0, 256], sizes = [32, 32], strides = [1, 1]} : vector<32x640xf32> to vector<32x32xf32>
    %123 = arith.truncf %116 : vector<32x32xf32> to vector<32x32xbf16>
    %124 = vector.shape_cast %123 : vector<32x32xbf16> to vector<32x4x8xbf16>
    %125 = arith.truncf %121 : vector<32x32xf32> to vector<32x32xbf16>
    %126 = vector.shape_cast %125 : vector<32x32xbf16> to vector<32x4x8xbf16>
    "tpu.trace_start"() <{level = 10 : i32, message = "qhd,khd->hqk"}> : () -> ()
    %cst_48 = arith.constant dense<0.000000e+00> : vector<4x32x32xf32>
    %127 = tpu.matmul %124, %126, %cst_48 {dimension_numbers = #tpu.dot_dimension_numbers<[2], [2], [0], [0], [0, 1, 0, 0, 1, 0], [1], [1]>} : vector<32x4x8xbf16>, vector<32x4x8xbf16>, vector<4x32x32xf32> -> vector<4x32x32xf32>
    "tpu.trace_stop"() : () -> ()
    %128 = vector.shape_cast %2 : vector<32x32xf32> to vector<1x32x32xf32>
    %129 = vector.broadcast %128 : vector<1x32x32xf32> to vector<4x32x32xf32>
    %130 = arith.addf %127, %129 : vector<4x32x32xf32>
    %cst_49 = arith.constant dense<0xFF800000> : vector<4x32xf32>
    %131 = vector.multi_reduction <maximumf>, %130, %cst_49 [2] : vector<4x32x32xf32> to vector<4x32xf32>
    %132 = vector.shape_cast %131 : vector<4x32xf32> to vector<4x32x1xf32>
    %133 = vector.broadcast %132 : vector<4x32x1xf32> to vector<4x32x32xf32>
    %134 = arith.subf %130, %133 : vector<4x32x32xf32>
    %135 = math.exp %134 : vector<4x32x32xf32>
    %cst_50 = arith.constant dense<0.000000e+00> : vector<4x32xf32>
    %136 = vector.multi_reduction <add>, %135, %cst_50 [2] : vector<4x32x32xf32> to vector<4x32xf32>
    %137 = vector.shape_cast %136 : vector<4x32xf32> to vector<4x32x1xf32>
    %138 = tpu.reciprocal %137 {approx = true} : vector<4x32x1xf32> -> vector<4x32x1xf32>
    %139 = vector.broadcast %138 : vector<4x32x1xf32> to vector<4x32x32xf32>
    %140 = arith.mulf %135, %139 : vector<4x32x32xf32>
    %141 = arith.truncf %140 : vector<4x32x32xf32> to vector<4x32x32xbf16>
    %142 = arith.truncf %122 : vector<32x32xf32> to vector<32x32xbf16>
    %143 = vector.shape_cast %142 : vector<32x32xbf16> to vector<32x4x8xbf16>
    "tpu.trace_start"() <{level = 10 : i32, message = "hqk,khd->qhd"}> : () -> ()
    %cst_51 = arith.constant dense<0.000000e+00> : vector<4x8x32xf32>
    %144 = tpu.matmul %143, %141, %cst_51 {dimension_numbers = #tpu.dot_dimension_numbers<[0], [2], [2], [1], [0, 1, 0, 2, 1, 1], [1], [0]>} : vector<32x4x8xbf16>, vector<4x32x32xbf16>, vector<4x8x32xf32> -> vector<4x8x32xf32>
    %145 = tpu.transpose %144, [2, 0, 1] : vector<4x8x32xf32> -> vector<32x4x8xf32>
    "tpu.trace_stop"() : () -> ()
    %146 = vector.shape_cast %145 : vector<32x4x8xf32> to vector<32x32xf32>
    %147 = arith.truncf %146 : vector<32x32xf32> to vector<32x32xbf16>
    %c1_52 = arith.constant 1 : index
    %c0_53 = arith.constant 0 : index
    %c0_54 = arith.constant 0 : index
    %148 = vector.load %arg6[%c1_52, %c0_53, %c0_54] : memref<2x32x32xbf16, #tpu.memory_space<vmem>>, vector<1x32x32xbf16>
    %149 = vector.shape_cast %148 : vector<1x32x32xbf16> to vector<32x32xbf16>
    %cst_55 = arith.constant dense<0.000000e+00> : vector<32x32xf32>
    %150 = tpu.matmul %147, %149, %cst_55 {dimension_numbers = #tpu.dot_dimension_numbers<[1], [0], [0], [1], [0, 0, 1, 1], [], []>} : vector<32x32xbf16>, vector<32x32xbf16>, vector<32x32xf32> -> vector<32x32xf32>
    %151 = arith.addf %93, %150 : vector<32x32xf32>
    %c1_56 = arith.constant 1 : index
    %c0_57 = arith.constant 0 : index
    %c0_58 = arith.constant 0 : index
    %152 = vector.load %arg7[%c1_56, %c0_57, %c0_58] : memref<2x1x32xf32, #tpu.memory_space<vmem>>, vector<1x1x32xf32>
    %153 = vector.shape_cast %152 : vector<1x1x32xf32> to vector<1x32xf32>
    %154 = arith.mulf %151, %151 : vector<32x32xf32>
    %cst_59 = arith.constant dense<0.000000e+00> : vector<32xf32>
    %155 = vector.multi_reduction <add>, %154, %cst_59 [1] : vector<32x32xf32> to vector<32xf32>
    %156 = vector.shape_cast %155 : vector<32xf32> to vector<32x1xf32>
    %cst_60 = arith.constant 3.200000e+01 : f32
    %157 = vector.broadcast %cst_60 : f32 to vector<32x1xf32>
    %158 = arith.divf %156, %157 : vector<32x1xf32>
    %cst_61 = arith.constant 9.99999997E-7 : f32
    %159 = vector.broadcast %cst_61 : f32 to vector<32x1xf32>
    %160 = arith.addf %158, %159 : vector<32x1xf32>
    %161 = math.rsqrt %160 : vector<32x1xf32>
    %162 = vector.broadcast %161 : vector<32x1xf32> to vector<32x32xf32>
    %163 = arith.mulf %151, %162 : vector<32x32xf32>
    %164 = vector.broadcast %153 : vector<1x32xf32> to vector<32x32xf32>
    %165 = arith.mulf %163, %164 : vector<32x32xf32>
    %166 = arith.truncf %165 : vector<32x32xf32> to vector<32x32xbf16>
    %c1_62 = arith.constant 1 : index
    %c0_63 = arith.constant 0 : index
    %c0_64 = arith.constant 0 : index
    %167 = vector.load %arg8[%c1_62, %c0_63, %c0_64] : memref<2x32x256xbf16, #tpu.memory_space<vmem>>, vector<1x32x256xbf16>
    %168 = vector.shape_cast %167 : vector<1x32x256xbf16> to vector<32x256xbf16>
    %cst_65 = arith.constant dense<0.000000e+00> : vector<32x256xf32>
    %169 = tpu.matmul %166, %168, %cst_65 {dimension_numbers = #tpu.dot_dimension_numbers<[1], [0], [0], [1], [0, 0, 1, 1], [], []>} : vector<32x32xbf16>, vector<32x256xbf16>, vector<32x256xf32> -> vector<32x256xf32>
    %170 = vector.extract_strided_slice %169 {offsets = [0, 0], sizes = [32, 64], strides = [1, 1]} : vector<32x256xf32> to vector<32x64xf32>
    %171 = vector.extract_strided_slice %169 {offsets = [0, 128], sizes = [32, 64], strides = [1, 1]} : vector<32x256xf32> to vector<32x64xf32>
    %172 = arith.negf %170 : vector<32x64xf32>
    %173 = math.exp %172 : vector<32x64xf32>
    %cst_66 = arith.constant 1.000000e+00 : f32
    %174 = vector.broadcast %cst_66 : f32 to vector<32x64xf32>
    %175 = arith.addf %174, %173 : vector<32x64xf32>
    %176 = arith.divf %174, %175 : vector<32x64xf32>
    %177 = arith.mulf %170, %176 : vector<32x64xf32>
    %178 = arith.mulf %177, %171 : vector<32x64xf32>
    %179 = arith.truncf %178 : vector<32x64xf32> to vector<32x64xbf16>
    %c1_67 = arith.constant 1 : index
    %c0_68 = arith.constant 0 : index
    %c0_69 = arith.constant 0 : index
    %180 = vector.load %arg9[%c1_67, %c0_68, %c0_69] : memref<2x64x32xbf16, #tpu.memory_space<vmem>>, vector<1x64x32xbf16>
    %181 = vector.shape_cast %180 : vector<1x64x32xbf16> to vector<64x32xbf16>
    %cst_70 = arith.constant dense<0.000000e+00> : vector<32x32xf32>
    %182 = tpu.matmul %179, %181, %cst_70 {dimension_numbers = #tpu.dot_dimension_numbers<[1], [0], [0], [1], [0, 0, 1, 1], [], []>} : vector<32x64xbf16>, vector<64x32xbf16>, vector<32x32xf32> -> vector<32x32xf32>
    %183 = arith.addf %151, %182 : vector<32x32xf32>
    %c0_71 = arith.constant 0 : index
    %c0_72 = arith.constant 0 : index
    %184 = vector.load %arg10[%c0_71, %c0_72] : memref<1x32xf32, #tpu.memory_space<vmem>>, vector<1x32xf32>
    %185 = arith.mulf %183, %183 : vector<32x32xf32>
    %cst_73 = arith.constant dense<0.000000e+00> : vector<32xf32>
    %186 = vector.multi_reduction <add>, %185, %cst_73 [1] : vector<32x32xf32> to vector<32xf32>
    %187 = vector.shape_cast %186 : vector<32xf32> to vector<32x1xf32>
    %cst_74 = arith.constant 3.200000e+01 : f32
    %188 = vector.broadcast %cst_74 : f32 to vector<32x1xf32>
    %189 = arith.divf %187, %188 : vector<32x1xf32>
    %cst_75 = arith.constant 9.99999997E-7 : f32
    %190 = vector.broadcast %cst_75 : f32 to vector<32x1xf32>
    %191 = arith.addf %189, %190 : vector<32x1xf32>
    %192 = math.rsqrt %191 : vector<32x1xf32>
    %193 = vector.broadcast %192 : vector<32x1xf32> to vector<32x32xf32>
    %194 = arith.mulf %183, %193 : vector<32x32xf32>
    %195 = vector.broadcast %184 : vector<1x32xf32> to vector<32x32xf32>
    %196 = arith.mulf %194, %195 : vector<32x32xf32>
    %197 = arith.truncf %196 : vector<32x32xf32> to vector<32x32xbf16>
    %c0_76 = arith.constant 0 : index
    %c0_77 = arith.constant 0 : index
    %198 = vector.load %arg11[%c0_76, %c0_77] : memref<32x128xbf16, #tpu.memory_space<vmem>>, vector<32x128xbf16>
    %cst_78 = arith.constant dense<0.000000e+00> : vector<32x128xf32>
    %199 = tpu.matmul %197, %198, %cst_78 {dimension_numbers = #tpu.dot_dimension_numbers<[1], [0], [0], [1], [0, 0, 1, 1], [], []>} : vector<32x32xbf16>, vector<32x128xbf16>, vector<32x128xf32> -> vector<32x128xf32>
    %c0_79 = arith.constant 0 : index
    %c0_80 = arith.constant 0 : index
    %200 = vector.load %arg12[%c0_79, %c0_80] : memref<32x128xf32, #tpu.memory_space<vmem>>, vector<32x128xf32>
    tpu.vector_store %arg12[%c0_79, %c0_80], %199 {strides = array<i32>} : memref<32x128xf32, #tpu.memory_space<vmem>>, vector<32x128xf32>,
    return
  }
}

</mosaic_0001>

<llo_original>
// kernel: llama_forward.1
$region0: #{llama_forward.1}
  #allocation0 [shape = 'u32[]', space=smem, size = 0x4, offset = 0x4, fixed_abs, tag = 'smem constant byte address 0x4 - core index']
  #allocation1 [shape = 'u32[144,128]{1,0:T(1,128)}', space=vmem, size = 0x12000, scoped, tag = 'internal scratch']
  %s0 = inlined_call_operand.vmem [shape: f32[32,32], index: 0, kind: input, shape index: {}]
  %s1 = inlined_call_operand.vmem [shape: f32[32,32], index: 1, kind: input, shape index: {}]
  %s2 = inlined_call_operand.vmem [shape: f32[32,32], index: 2, kind: input, shape index: {}]
  %s3 = inlined_call_operand.vmem [shape: f32[32,32], index: 3, kind: input, shape index: {}]
  %s4 = inlined_call_operand.vmem [shape: f32[2,1,32], index: 4, kind: input, shape index: {}]
  %s5 = inlined_call_operand.vmem [shape: bf16[2,32,640], index: 5, kind: input, shape index: {}]
  %s6 = inlined_call_operand.vmem [shape: bf16[2,32,32], index: 6, kind: input, shape index: {}]
  %s7 = inlined_call_operand.vmem [shape: f32[2,1,32], index: 7, kind: input, shape index: {}]
  %s8 = inlined_call_operand.vmem [shape: bf16[2,32,256], index: 8, kind: input, shape index: {}]
  %s9 = inlined_call_operand.vmem [shape: bf16[2,64,32], index: 9, kind: input, shape index: {}]
  %s10 = inlined_call_operand.vmem [shape: f32[1,32], index: 10, kind: input, shape index: {}]
  %s11 = inlined_call_operand.vmem [shape: bf16[32,128], index: 11, kind: input, shape index: {}]
  %s12 = inlined_call_operand.hbm [shape: f32[32,128], index: 12, kind: output, shape index: {}]
  %s13 = sld [smem:[#allocation0]]
  $region58: #{llama_forward.1} parent=0
    _
  %s15 = ssub.s32 1, %s13
  %s16 = scalar_select 0, %s15, %s13
  $region1: #{llama_forward.1} parent=0
    #allocation2 [shape = 'u8[16384]{0}', space=vmem, size = 0x4000, scoped, tag = 'output window, operand 0, single buffered']
    #allocation3 [shape = 's32[1]{0}', space=sflag, size = 0x4, scoped, tag = 'scoped memory for llama_forward.1']
    %17 = vsyncpa [#allocation3], 0
    // Predicated region
    $region2: #{llama_forward.1} parent=1 // pred_check
      _
    $region3: #{llama_forward.1} parent=1 // pred_check_branch
      %19 = sbr.rel (0) target = $region5
    $region4: #{llama_forward.1} parent=1 // pred_region
      _
    $region5: #{llama_forward.1} parent=1 // pred_fallthru
      _
    // Predicated region
    $region6: #{llama_forward.1} parent=1 // pred_check
      _
    $region7: #{llama_forward.1} parent=1 // pred_check_branch
      %21 = sbr.rel (0) target = $region9
    $region8: #{llama_forward.1} parent=1 // pred_region
      _
    $region9: #{llama_forward.1} parent=1 // pred_fallthru
      _
    // Predicated region
    $region10: #{llama_forward.1} parent=1 // pred_check
      _
    $region11: #{llama_forward.1} parent=1 // pred_check_branch
      %23 = sbr.rel (0) target = $region13
    $region12: #{llama_forward.1} parent=1 // pred_region
      _
    $region13: #{llama_forward.1} parent=1 // pred_fallthru
      _
    // Predicated region
    $region14: #{llama_forward.1} parent=1 // pred_check
      _
    $region15: #{llama_forward.1} parent=1 // pred_check_branch
      %25 = sbr.rel (0) target = $region17
    $region16: #{llama_forward.1} parent=1 // pred_region
      _
    $region17: #{llama_forward.1} parent=1 // pred_fallthru
      _
    // Predicated region
    $region18: #{llama_forward.1} parent=1 // pred_check
      _
    $region19: #{llama_forward.1} parent=1 // pred_check_branch
      %27 = sbr.rel (0) target = $region21
    $region20: #{llama_forward.1} parent=1 // pred_region
      _
    $region21: #{llama_forward.1} parent=1 // pred_fallthru
      _
    // Predicated region
    $region22: #{llama_forward.1} parent=1 // pred_check
      _
    $region23: #{llama_forward.1} parent=1 // pred_check_branch
      %29 = sbr.rel (0) target = $region25
    $region24: #{llama_forward.1} parent=1 // pred_region
      _
    $region25: #{llama_forward.1} parent=1 // pred_fallthru
      _
    // Predicated region
    $region26: #{llama_forward.1} parent=1 // pred_check
      _
    $region27: #{llama_forward.1} parent=1 // pred_check_branch
      %31 = sbr.rel (0) target = $region29
    $region28: #{llama_forward.1} parent=1 // pred_region
      _
    $region29: #{llama_forward.1} parent=1 // pred_fallthru
      _
    // Predicated region
    $region30: #{llama_forward.1} parent=1 // pred_check
      _
    $region31: #{llama_forward.1} parent=1 // pred_check_branch
      %33 = sbr.rel (0) target = $region33
    $region32: #{llama_forward.1} parent=1 // pred_region
      _
    $region33: #{llama_forward.1} parent=1 // pred_fallthru
      _
    // Predicated region
    $region34: #{llama_forward.1} parent=1 // pred_check
      _
    $region35: #{llama_forward.1} parent=1 // pred_check_branch
      %35 = sbr.rel (0) target = $region37
    $region36: #{llama_forward.1} parent=1 // pred_region
      _
    $region37: #{llama_forward.1} parent=1 // pred_fallthru
      _
    // Predicated region
    $region38: #{llama_forward.1} parent=1 // pred_check
      _
    $region39: #{llama_forward.1} parent=1 // pred_check_branch
      %37 = sbr.rel (0) target = $region41
    $region40: #{llama_forward.1} parent=1 // pred_region
      _
    $region41: #{llama_forward.1} parent=1 // pred_fallthru
      _
    // Predicated region
    $region42: #{llama_forward.1} parent=1 // pred_check
      _
    $region43: #{llama_forward.1} parent=1 // pred_check_branch
      %39 = sbr.rel (0) target = $region45
    $region44: #{llama_forward.1} parent=1 // pred_region
      _
    $region45: #{llama_forward.1} parent=1 // pred_fallthru
      _
    // Predicated region
    $region46: #{llama_forward.1} parent=1 // pred_check
      _
    $region47: #{llama_forward.1} parent=1 // pred_check_branch
      %41 = sbr.rel (0) target = $region49
    $region48: #{llama_forward.1} parent=1 // pred_region
      _
    $region49: #{llama_forward.1} parent=1 // pred_fallthru
      _
    %v43 = vld [vmem:[%s2] sm:$0xff]
    %v44 = vld [vmem:[%s2 + $0x8] sm:$0xff]
    %v45 = vld [vmem:[%s2 + $0x10] sm:$0xff]
    %v46 = vld [vmem:[%s2 + $0x18] sm:$0xff]
    %v47 = vld [vmem:[%s3] sm:$0xff]
    %v48 = vld [vmem:[%s3 + $0x8] sm:$0xff]
    %v49 = vld [vmem:[%s3 + $0x10] sm:$0xff]
    %v50 = vld [vmem:[%s3 + $0x18] sm:$0xff]
    %v51 = vld [vmem:[%s1] sm:$0xff]
    %v52 = vld [vmem:[%s1 + $0x8] sm:$0xff]
    %v53 = vld [vmem:[%s1 + $0x10] sm:$0xff]
    %v54 = vld [vmem:[%s1 + $0x18] sm:$0xff]
    %v55 = vld [vmem:[%s0] sm:$0xff]
    %v56 = vld [vmem:[%s0 + $0x8] sm:$0xff]
    %v57 = vld [vmem:[%s0 + $0x10] sm:$0xff]
    %v58 = vld [vmem:[%s0 + $0x18] sm:$0xff]
    %v59 = vld [vmem:[%s4] sm:$0x1]
    %v60 = vmul.f32 %v55, %v55
    %v61 = vmul.f32 %v56, %v56
    %v62 = vmul.f32 %v57, %v57
    %v63 = vmul.f32 %v58, %v58
    %vm64 = vcmask 261120
    %v65 = vsel %vm64, %v60, 0.0
    %66 = vadd.xlane.f32.xlu0 %v65
    %v67 = vpop.xlane.xlu0 %66
    %v68 = vsel %vm64, %v61, 0.0
    %69 = vadd.xlane.f32.xlu0 %v68
    %v70 = vpop.xlane.xlu0 %69
    %v71 = vsel %vm64, %v62, 0.0
    %72 = vadd.xlane.f32.xlu0 %v71
    %v73 = vpop.xlane.xlu0 %72
    %v74 = vsel %vm64, %v63, 0.0
    %75 = vadd.xlane.f32.xlu0 %v74
    %v76 = vpop.xlane.xlu0 %75
    %v77 = vrcp.pop 32.0
    %v78 = vmul.f32 %v67, %v77
    %v79 = vmul.f32 %v70, %v77
    %v80 = vmul.f32 %v73, %v77
    %v81 = vmul.f32 %v76, %v77
    %v82 = vadd.f32 %v78, 1e-06
    %v83 = vadd.f32 %v79, 1e-06
    %v84 = vadd.f32 %v80, 1e-06
    %v85 = vadd.f32 %v81, 1e-06
    %v86 = vrsqrt.pop %v82
    %v87 = vrsqrt.pop %v83
    %v88 = vrsqrt.pop %v84
    %v89 = vrsqrt.pop %v85
    %v90 = vmul.f32 %v55, %v86
    %v91 = vmul.f32 %v56, %v87
    %v92 = vmul.f32 %v57, %v88
    %v93 = vmul.f32 %v58, %v89
    %v95 = vlaneseq
    %v96 = vshrl.u32 %v95, 7
    %v97 = vsub.s32 0, %v96
    %v98 = vrot.slane %v59, %v97
    %v100 = vmul.f32 %v90, %v98
    %v101 = vmul.f32 %v91, %v98
    %v102 = vmul.f32 %v92, %v98
    %v103 = vmul.f32 %v93, %v98
    %v104 = vpack.c.bf16 %v101, %v100
    %v105 = vpack.c.bf16 %v103, %v102
    %v106 = vld [vmem:[%s5] sm:$0xff]
    %v107 = vld [vmem:[%s5 + $0x8] sm:$0xff]
    %v108 = vld [vmem:[%s5 + $0x10] sm:$0xf]
    %v109 = vld [vmem:[%s5 + $0x14] sm:$0xff]
    %v110 = vld [vmem:[%s5 + $0x1c] sm:$0xff]
    %v111 = vld [vmem:[%s5 + $0x24] sm:$0xf]
    %v112 = vld [vmem:[%s5 + $0x28] sm:$0xff]
    %v113 = vld [vmem:[%s5 + $0x30] sm:$0xff]
    %v114 = vld [vmem:[%s5 + $0x38] sm:$0xf]
    %v115 = vld [vmem:[%s5 + $0x3c] sm:$0xff]
    %v116 = vld [vmem:[%s5 + $0x44] sm:$0xff]
    %v117 = vld [vmem:[%s5 + $0x4c] sm:$0xf]
    %v130 = vunpack.c.l.b16 %v106
    %v131 = vunpack.c.h.b16 %v106
    %v132 = vunpack.c.l.b16 %v107
    %v133 = vunpack.c.h.b16 %v107
    %v134 = vunpack.c.l.b16 %v108
    %v135 = vunpack.c.l.b16 %v109
    %v136 = vunpack.c.h.b16 %v109
    %v137 = vunpack.c.l.b16 %v110
    %v138 = vunpack.c.h.b16 %v110
    %v139 = vunpack.c.l.b16 %v111
    %v140 = vunpack.c.l.b16 %v112
    %v141 = vunpack.c.h.b16 %v112
    %v142 = vunpack.c.l.b16 %v113
    %v143 = vunpack.c.h.b16 %v113
    %v144 = vunpack.c.l.b16 %v114
    %v145 = vunpack.c.l.b16 %v115
    %v146 = vunpack.c.h.b16 %v115
    %v147 = vunpack.c.l.b16 %v116
    %v148 = vunpack.c.h.b16 %v116
    %v149 = vunpack.c.l.b16 %v117
    %v150 = vpack.c.b16 %v135, %v130
    %v151 = vpack.c.b16 %v136, %v131
    %v152 = vpack.c.b16 %v137, %v132
    %v153 = vpack.c.b16 %v138, %v133
    %v154 = vpack.c.b16 %v139, %v134
    %v155 = vpack.c.b16 %v145, %v140
    %v156 = vpack.c.b16 %v146, %v141
    %v157 = vpack.c.b16 %v147, %v142
    %v158 = vpack.c.b16 %v148, %v143
    %v159 = vpack.c.b16 %v149, %v144
    %v171 = vsel %vm64, %v104, 0
    %v174 = vsel %vm64, %v105, 0
    %176 = vmatprep.subr.bf16.mxu0 0
    %177 = vmatpush1.bf16.msra.mxu0 0
    %178 = vmatprep.subr.bf16.mxu0 0
    %179 = vmatpush1.bf16.msra.mxu0 0
    %180 = vmatprep.subr.bf16.mxu0 0
    %181 = vmatpush1.bf16.msra.mxu0 0
    %182 = vmatprep.subr.bf16.mxu0 0
    %183 = vmatpush1.bf16.msra.mxu0 0
    %184 = vmatprep.subr.bf16.mxu0 0
    %185 = vmatpush1.bf16.msra.mxu0 0
    %186 = vmatprep.subr.bf16.mxu0 0
    %187 = vmatpush1.bf16.msra.mxu0 0
    %188 = vmatprep.subr.bf16.mxu0 %v156
    %189 = vmatpush1.bf16.msra.mxu0 %v155
    %190 = vmatprep.subr.bf16.mxu0 %v151
    %191 = vmatpush1.bf16.msra.mxu0 %v150
    %192 = vmatprep.subr.bf16.mxu0 0
    %193 = vmatpush2.bf16.msra.mxu0 0
    %194 = vmatprep.subr.bf16.mxu0 0
    %195 = vmatpush2.bf16.msra.mxu0 0
    %196 = vmatprep.subr.bf16.mxu0 0
    %197 = vmatpush2.bf16.msra.mxu0 0
    %198 = vmatprep.subr.bf16.mxu0 0
    %199 = vmatpush2.bf16.msra.mxu0 0
    %200 = vmatprep.subr.bf16.mxu0 0
    %201 = vmatpush2.bf16.msra.mxu0 0
    %202 = vmatprep.subr.bf16.mxu0 0
    %203 = vmatpush2.bf16.msra.mxu0 0
    %204 = vmatprep.subr.bf16.mxu0 0
    %205 = vmatpush2.bf16.msra.mxu0 0
    %206 = vmatprep.subr.bf16.mxu0 0
    %207 = vmatpush2.bf16.msra.mxu0 0
    %208 = vmatprep.mubr.bf16.mxu0 0
    %209 = vmatmul.mubr.bf16.gmra.mxu0 %v171
    %v210 = vpop.f32.mrf.mxu0
    %v211 = vadd.f32 0.0, %v210
    %v212 = vpop.f32.mrf.mxu0
    %v213 = vadd.f32 0.0, %v212
    %v214 = vpop.f32.mrf.mxu0
    %v215 = vadd.f32 0.0, %v214
    %v216 = vpop.f32.mrf.mxu0
    %v217 = vadd.f32 0.0, %v216
    %218 = vmatprep.mubr.bf16.mxu0 0
    %219 = vmatmul.mubr.bf16.gmra.mxu0 %v174
    %v220 = vpop.f32.mrf.mxu0
    %v221 = vadd.f32 0.0, %v220
    %v222 = vpop.f32.mrf.mxu0
    %v223 = vadd.f32 0.0, %v222
    %v224 = vpop.f32.mrf.mxu0
    %v225 = vadd.f32 0.0, %v224
    %v226 = vpop.f32.mrf.mxu0
    %v227 = vadd.f32 0.0, %v226
    %228 = vdwg.mxu0
    %229 = vmatprep.subr.bf16.mxu0 0
    %230 = vmatpush1.bf16.msra.mxu0 0
    %231 = vmatprep.subr.bf16.mxu0 0
    %232 = vmatpush1.bf16.msra.mxu0 0
    %233 = vmatprep.subr.bf16.mxu0 0
    %234 = vmatpush1.bf16.msra.mxu0 0
    %235 = vmatprep.subr.bf16.mxu0 0
    %236 = vmatpush1.bf16.msra.mxu0 0
    %237 = vmatprep.subr.bf16.mxu0 0
    %238 = vmatpush1.bf16.msra.mxu0 0
    %239 = vmatprep.subr.bf16.mxu0 0
    %240 = vmatpush1.bf16.msra.mxu0 0
    %241 = vmatprep.subr.bf16.mxu0 %v158
    %242 = vmatpush1.bf16.msra.mxu0 %v157
    %243 = vmatprep.subr.bf16.mxu0 %v153
    %244 = vmatpush1.bf16.msra.mxu0 %v152
    %245 = vmatprep.subr.bf16.mxu0 0
    %246 = vmatpush2.bf16.msra.mxu0 0
    %247 = vmatprep.subr.bf16.mxu0 0
    %248 = vmatpush2.bf16.msra.mxu0 0
    %249 = vmatprep.subr.bf16.mxu0 0
    %250 = vmatpush2.bf16.msra.mxu0 0
    %251 = vmatprep.subr.bf16.mxu0 0
    %252 = vmatpush2.bf16.msra.mxu0 0
    %253 = vmatprep.subr.bf16.mxu0 0
    %254 = vmatpush2.bf16.msra.mxu0 0
    %255 = vmatprep.subr.bf16.mxu0 0
    %256 = vmatpush2.bf16.msra.mxu0 0
    %257 = vmatprep.subr.bf16.mxu0 0
    %258 = vmatpush2.bf16.msra.mxu0 0
    %259 = vmatprep.subr.bf16.mxu0 0
    %260 = vmatpush2.bf16.msra.mxu0 0
    %261 = vmatprep.mubr.bf16.mxu0 0
    %262 = vmatmul.mubr.bf16.gmra.mxu0 %v171
    %v263 = vpop.f32.mrf.mxu0
    %v264 = vadd.f32 0.0, %v263
    %v265 = vpop.f32.mrf.mxu0
    %v266 = vadd.f32 0.0, %v265
    %v267 = vpop.f32.mrf.mxu0
    %v268 = vadd.f32 0.0, %v267
    %v269 = vpop.f32.mrf.mxu0
    %v270 = vadd.f32 0.0, %v269
    %271 = vmatprep.mubr.bf16.mxu0 0
    %272 = vmatmul.mubr.bf16.gmra.mxu0 %v174
    %v273 = vpop.f32.mrf.mxu0
    %v274 = vadd.f32 0.0, %v273
    %v275 = vpop.f32.mrf.mxu0
    %v276 = vadd.f32 0.0, %v275
    %v277 = vpop.f32.mrf.mxu0
    %v278 = vadd.f32 0.0, %v277
    %v279 = vpop.f32.mrf.mxu0
    %v280 = vadd.f32 0.0, %v279
    %281 = vdwg.mxu0
    %282 = vmatprep.subr.bf16.mxu0 0
    %283 = vmatpush1.bf16.msra.mxu0 0
    %284 = vmatprep.subr.bf16.mxu0 0
    %285 = vmatpush1.bf16.msra.mxu0 0
    %286 = vmatprep.subr.bf16.mxu0 0
    %287 = vmatpush1.bf16.msra.mxu0 0
    %288 = vmatprep.subr.bf16.mxu0 0
    %289 = vmatpush1.bf16.msra.mxu0 0
    %290 = vmatprep.subr.bf16.mxu0 0
    %291 = vmatpush1.bf16.msra.mxu0 0
    %292 = vmatprep.subr.bf16.mxu0 0
    %293 = vmatpush1.bf16.msra.mxu0 0
    %294 = vmatprep.subr.bf16.mxu0 0
    %295 = vmatpush1.bf16.msra.mxu0 %v159
    %296 = vmatprep.subr.bf16.mxu0 0
    %297 = vmatpush1.bf16.msra.mxu0 %v154
    %298 = vmatprep.subr.bf16.mxu0 0
    %299 = vmatpush2.bf16.msra.mxu0 0
    %300 = vmatprep.subr.bf16.mxu0 0
    %301 = vmatpush2.bf16.msra.mxu0 0
    %302 = vmatprep.subr.bf16.mxu0 0
    %303 = vmatpush2.bf16.msra.mxu0 0
    %304 = vmatprep.subr.bf16.mxu0 0
    %305 = vmatpush2.bf16.msra.mxu0 0
    %306 = vmatprep.subr.bf16.mxu0 0
    %307 = vmatpush2.bf16.msra.mxu0 0
    %308 = vmatprep.subr.bf16.mxu0 0
    %309 = vmatpush2.bf16.msra.mxu0 0
    %310 = vmatprep.subr.bf16.mxu0 0
    %311 = vmatpush2.bf16.msra.mxu0 0
    %312 = vmatprep.subr.bf16.mxu0 0
    %313 = vmatpush2.bf16.msra.mxu0 0
    %314 = vmatprep.mubr.bf16.mxu0 0
    %315 = vmatmul.mubr.bf16.gmra.mxu0 %v171
    %v316 = vpop.f32.mrf.mxu0
    %v317 = vadd.f32 0.0, %v316
    %v318 = vpop.f32.mrf.mxu0
    %v319 = vpop.f32.mrf.mxu0
    %v320 = vadd.f32 0.0, %v319
    %v321 = vpop.f32.mrf.mxu0
    %322 = vmatprep.mubr.bf16.mxu0 0
    %323 = vmatmul.mubr.bf16.gmra.mxu0 %v174
    %v324 = vpop.f32.mrf.mxu0
    %v325 = vadd.f32 0.0, %v324
    %v326 = vpop.f32.mrf.mxu0
    %v327 = vpop.f32.mrf.mxu0
    %v328 = vadd.f32 0.0, %v327
    %v329 = vpop.f32.mrf.mxu0
    %330 = vdwg.mxu0
    %v331 = vmul.f32 %v211, %v43
    %v332 = vmul.f32 %v215, %v44
    %v333 = vmul.f32 %v221, %v45
    %v334 = vmul.f32 %v225, %v46
    %v335 = vmul.f32 %v266, %v47
    %v336 = vmul.f32 %v270, %v48
    %v337 = vmul.f32 %v276, %v49
    %v338 = vmul.f32 %v280, %v50
    %v339 = vadd.f32 %v331, %v335
    %v340 = vadd.f32 %v332, %v336
    %v341 = vadd.f32 %v333, %v337
    %v342 = vadd.f32 %v334, %v338
    %v343 = vmul.f32 %v213, %v43
    %v344 = vmul.f32 %v217, %v44
    %v345 = vmul.f32 %v223, %v45
    %v346 = vmul.f32 %v227, %v46
    %v347 = vmul.f32 %v317, %v47
    %v348 = vmul.f32 %v320, %v48
    %v349 = vmul.f32 %v325, %v49
    %v350 = vmul.f32 %v328, %v50
    %v351 = vadd.f32 %v343, %v347
    %v352 = vadd.f32 %v344, %v348
    %v353 = vadd.f32 %v345, %v349
    %v354 = vadd.f32 %v346, %v350
    %v355 = vpack.c.bf16 %v340, %v339
    %v356 = vpack.c.bf16 %v342, %v341
    %359 = vrot.lane.b32.xlu0 %v355, 120
    %v360 = vpop.permute.xlu0 %359
    %361 = vrot.lane.b32.xlu0 %v356, 120
    %v362 = vpop.permute.xlu0 %361
    %363 = vrot.lane.b32.xlu0 %v355, 112
    %v364 = vpop.permute.xlu0 %363
    %365 = vrot.lane.b32.xlu0 %v356, 112
    %v366 = vpop.permute.xlu0 %365
    %367 = vrot.lane.b32.xlu0 %v355, 104
    %v368 = vpop.permute.xlu0 %367
    %369 = vrot.lane.b32.xlu0 %v356, 104
    %v370 = vpop.permute.xlu0 %369
    %v371 = vpack.c.bf16 %v352, %v351
    %v372 = vpack.c.bf16 %v354, %v353
    %375 = vrot.lane.b32.xlu0 %v371, 120
    %v376 = vpop.permute.xlu0 %375
    %377 = vrot.lane.b32.xlu0 %v372, 120
    %v378 = vpop.permute.xlu0 %377
    %381 = vrot.lane.b32.xlu0 %v371, 112
    %v382 = vpop.permute.xlu0 %381
    %383 = vrot.lane.b32.xlu0 %v372, 112
    %v384 = vpop.permute.xlu0 %383
    %387 = vrot.lane.b32.xlu0 %v371, 104
    %v388 = vpop.permute.xlu0 %387
    %389 = vrot.lane.b32.xlu0 %v372, 104
    %v390 = vpop.permute.xlu0 %389
    %393 = vxpose.xlu0.c.b16.start [1/8] %v371, 128
    %394 = vxpose.xlu0.c.b16.cont [2/8] %v372, 128
    %395 = vxpose.xlu0.c.b16.cont [3/8] 0, 128
    %396 = vxpose.xlu0.c.b16.cont [4/8] 0, 128
    %397 = vxpose.xlu0.c.b16.cont [5/8] 0, 128
    %398 = vxpose.xlu0.c.b16.cont [6/8] 0, 128
    %399 = vxpose.xlu0.c.b16.cont [7/8] 0, 128
    %400 = vxpose.xlu0.c.b16.end [8/8] 0, 128
    %v401 = vpop.trf.xlu0
    %v402 = vpop.trf.xlu0
    %v403 = vpop.trf.xlu0
    %v404 = vpop.trf.xlu0
    %v405 = vpop.trf.xlu0
    %v406 = vpop.trf.xlu0
    %v407 = vpop.trf.xlu0
    %v408 = vpop.trf.xlu0
    %409 = vxpose.xlu0.c.b16.start [1/8] %v376, 128
    %410 = vxpose.xlu0.c.b16.cont [2/8] %v378, 128
    %411 = vxpose.xlu0.c.b16.cont [3/8] 0, 128
    %412 = vxpose.xlu0.c.b16.cont [4/8] 0, 128
    %413 = vxpose.xlu0.c.b16.cont [5/8] 0, 128
    %414 = vxpose.xlu0.c.b16.cont [6/8] 0, 128
    %415 = vxpose.xlu0.c.b16.cont [7/8] 0, 128
    %416 = vxpose.xlu0.c.b16.end [8/8] 0, 128
    %v417 = vpop.trf.xlu0
    %v418 = vpop.trf.xlu0
    %v419 = vpop.trf.xlu0
    %v420 = vpop.trf.xlu0
    %v421 = vpop.trf.xlu0
    %v422 = vpop.trf.xlu0
    %v423 = vpop.trf.xlu0
    %v424 = vpop.trf.xlu0
    %425 = vxpose.xlu0.c.b16.start [1/8] %v382, 128
    %426 = vxpose.xlu0.c.b16.cont [2/8] %v384, 128
    %427 = vxpose.xlu0.c.b16.cont [3/8] 0, 128
    %428 = vxpose.xlu0.c.b16.cont [4/8] 0, 128
    %429 = vxpose.xlu0.c.b16.cont [5/8] 0, 128
    %430 = vxpose.xlu0.c.b16.cont [6/8] 0, 128
    %431 = vxpose.xlu0.c.b16.cont [7/8] 0, 128
    %432 = vxpose.xlu0.c.b16.end [8/8] 0, 128
    %v433 = vpop.trf.xlu0
    %v434 = vpop.trf.xlu0
    %v435 = vpop.trf.xlu0
    %v436 = vpop.trf.xlu0
    %v437 = vpop.trf.xlu0
    %v438 = vpop.trf.xlu0
    %v439 = vpop.trf.xlu0
    %v440 = vpop.trf.xlu0
    %441 = vxpose.xlu0.c.b16.start [1/8] %v388, 128
    %442 = vxpose.xlu0.c.b16.cont [2/8] %v390, 128
    %443 = vxpose.xlu0.c.b16.cont [3/8] 0, 128
    %444 = vxpose.xlu0.c.b16.cont [4/8] 0, 128
    %445 = vxpose.xlu0.c.b16.cont [5/8] 0, 128
    %446 = vxpose.xlu0.c.b16.cont [6/8] 0, 128
    %447 = vxpose.xlu0.c.b16.cont [7/8] 0, 128
    %448 = vxpose.xlu0.c.b16.end [8/8] 0, 128
    %v449 = vpop.trf.xlu0
    %v450 = vpop.trf.xlu0
    %v451 = vpop.trf.xlu0
    %v452 = vpop.trf.xlu0
    %v453 = vpop.trf.xlu0
    %v454 = vpop.trf.xlu0
    %v455 = vpop.trf.xlu0
    %v456 = vpop.trf.xlu0
    %vm457 = vcmask 64512
    %v459 = vsel %vm457, %v355, 0
    %v462 = vsel %vm457, %v356, 0
    %vm464 = vcmask 1043456
    %v466 = vsel %vm464, %v401, 0
    %468 = vmatprep.subr.bf16.mxu0 0
    %469 = vmatpush1.bf16.msra.mxu0 0
    %470 = vmatprep.subr.bf16.mxu0 0
    %471 = vmatpush1.bf16.msra.mxu0 0
    %472 = vmatprep.subr.bf16.mxu0 0
    %473 = vmatpush1.bf16.msra.mxu0 0
    %474 = vmatprep.subr.bf16.mxu0 0
    %475 = vmatpush1.bf16.msra.mxu0 0
    %476 = vmatprep.subr.bf16.mxu0 0
    %477 = vmatpush1.bf16.msra.mxu0 0
    %478 = vmatprep.subr.bf16.mxu0 0
    %479 = vmatpush1.bf16.msra.mxu0 0
    %480 = vmatprep.subr.bf16.mxu0 0
    %481 = vmatpush1.bf16.msra.mxu0 0
    %482 = vmatprep.subr.bf16.mxu0 0
    %483 = vmatpush1.bf16.msra.mxu0 %v466
    %484 = vmatprep.subr.bf16.mxu0 0
    %485 = vmatpush2.bf16.msra.mxu0 0
    %486 = vmatprep.subr.bf16.mxu0 0
    %487 = vmatpush2.bf16.msra.mxu0 0
    %488 = vmatprep.subr.bf16.mxu0 0
    %489 = vmatpush2.bf16.msra.mxu0 0
    %490 = vmatprep.subr.bf16.mxu0 0
    %491 = vmatpush2.bf16.msra.mxu0 0
    %492 = vmatprep.subr.bf16.mxu0 0
    %493 = vmatpush2.bf16.msra.mxu0 0
    %494 = vmatprep.subr.bf16.mxu0 0
    %495 = vmatpush2.bf16.msra.mxu0 0
    %496 = vmatprep.subr.bf16.mxu0 0
    %497 = vmatpush2.bf16.msra.mxu0 0
    %498 = vmatprep.subr.bf16.mxu0 0
    %499 = vmatpush2.bf16.msra.mxu0 0
    %500 = vmatprep.mubr.bf16.mxu0 0
    %501 = vmatmul.mubr.bf16.gmra.mxu0 %v459
    %v502 = vpop.f32.mrf.mxu0
    %v503 = vadd.f32 %v51, %v502
    %v504 = vpop.f32.mrf.mxu0
    %v505 = vpop.f32.mrf.mxu0
    %v506 = vadd.f32 %v52, %v505
    %v507 = vpop.f32.mrf.mxu0
    %508 = vmatprep.mubr.bf16.mxu0 0
    %509 = vmatmul.mubr.bf16.gmra.mxu0 %v462
    %v510 = vpop.f32.mrf.mxu0
    %v511 = vadd.f32 %v53, %v510
    %v512 = vpop.f32.mrf.mxu0
    %v513 = vpop.f32.mrf.mxu0
    %v514 = vadd.f32 %v54, %v513
    %v515 = vpop.f32.mrf.mxu0
    %516 = vdwg.mxu0
    %v518 = vsel %vm457, %v360, 0
    %v521 = vsel %vm457, %v362, 0
    %v524 = vsel %vm464, %v417, 0
    %526 = vmatprep.subr.bf16.mxu0 0
    %527 = vmatpush1.bf16.msra.mxu0 0
    %528 = vmatprep.subr.bf16.mxu0 0
    %529 = vmatpush1.bf16.msra.mxu0 0
    %530 = vmatprep.subr.bf16.mxu0 0
    %531 = vmatpush1.bf16.msra.mxu0 0
    %532 = vmatprep.subr.bf16.mxu0 0
    %533 = vmatpush1.bf16.msra.mxu0 0
    %534 = vmatprep.subr.bf16.mxu0 0
    %535 = vmatpush1.bf16.msra.mxu0 0
    %536 = vmatprep.subr.bf16.mxu0 0
    %537 = vmatpush1.bf16.msra.mxu0 0
    %538 = vmatprep.subr.bf16.mxu0 0
    %539 = vmatpush1.bf16.msra.mxu0 0
    %540 = vmatprep.subr.bf16.mxu0 0
    %541 = vmatpush1.bf16.msra.mxu0 %v524
    %542 = vmatprep.subr.bf16.mxu0 0
    %543 = vmatpush2.bf16.msra.mxu0 0
    %544 = vmatprep.subr.bf16.mxu0 0
    %545 = vmatpush2.bf16.msra.mxu0 0
    %546 = vmatprep.subr.bf16.mxu0 0
    %547 = vmatpush2.bf16.msra.mxu0 0
    %548 = vmatprep.subr.bf16.mxu0 0
    %549 = vmatpush2.bf16.msra.mxu0 0
    %550 = vmatprep.subr.bf16.mxu0 0
    %551 = vmatpush2.bf16.msra.mxu0 0
    %552 = vmatprep.subr.bf16.mxu0 0
    %553 = vmatpush2.bf16.msra.mxu0 0
    %554 = vmatprep.subr.bf16.mxu0 0
    %555 = vmatpush2.bf16.msra.mxu0 0
    %556 = vmatprep.subr.bf16.mxu0 0
    %557 = vmatpush2.bf16.msra.mxu0 0
    %558 = vmatprep.mubr.bf16.mxu0 0
    %559 = vmatmul.mubr.bf16.gmra.mxu0 %v518
    %v560 = vpop.f32.mrf.mxu0
    %v561 = vadd.f32 %v51, %v560
    %v562 = vpop.f32.mrf.mxu0
    %v563 = vpop.f32.mrf.mxu0
    %v564 = vadd.f32 %v52, %v563
    %v565 = vpop.f32.mrf.mxu0
    %566 = vmatprep.mubr.bf16.mxu0 0
    %567 = vmatmul.mubr.bf16.gmra.mxu0 %v521
    %v568 = vpop.f32.mrf.mxu0
    %v569 = vadd.f32 %v53, %v568
    %v570 = vpop.f32.mrf.mxu0
    %v571 = vpop.f32.mrf.mxu0
    %v572 = vadd.f32 %v54, %v571
    %v573 = vpop.f32.mrf.mxu0
    %574 = vdwg.mxu0
    %v576 = vsel %vm457, %v364, 0
    %v579 = vsel %vm457, %v366, 0
    %v582 = vsel %vm464, %v433, 0
    %584 = vmatprep.subr.bf16.mxu0 0
    %585 = vmatpush1.bf16.msra.mxu0 0
    %586 = vmatprep.subr.bf16.mxu0 0
    %587 = vmatpush1.bf16.msra.mxu0 0
    %588 = vmatprep.subr.bf16.mxu0 0
    %589 = vmatpush1.bf16.msra.mxu0 0
    %590 = vmatprep.subr.bf16.mxu0 0
    %591 = vmatpush1.bf16.msra.mxu0 0
    %592 = vmatprep.subr.bf16.mxu0 0
    %593 = vmatpush1.bf16.msra.mxu0 0
    %594 = vmatprep.subr.bf16.mxu0 0
    %595 = vmatpush1.bf16.msra.mxu0 0
    %596 = vmatprep.subr.bf16.mxu0 0
    %597 = vmatpush1.bf16.msra.mxu0 0
    %598 = vmatprep.subr.bf16.mxu0 0
    %599 = vmatpush1.bf16.msra.mxu0 %v582
    %600 = vmatprep.subr.bf16.mxu0 0
    %601 = vmatpush2.bf16.msra.mxu0 0
    %602 = vmatprep.subr.bf16.mxu0 0
    %603 = vmatpush2.bf16.msra.mxu0 0
    %604 = vmatprep.subr.bf16.mxu0 0
    %605 = vmatpush2.bf16.msra.mxu0 0
    %606 = vmatprep.subr.bf16.mxu0 0
    %607 = vmatpush2.bf16.msra.mxu0 0
    %608 = vmatprep.subr.bf16.mxu0 0
    %609 = vmatpush2.bf16.msra.mxu0 0
    %610 = vmatprep.subr.bf16.mxu0 0
    %611 = vmatpush2.bf16.msra.mxu0 0
    %612 = vmatprep.subr.bf16.mxu0 0
    %613 = vmatpush2.bf16.msra.mxu0 0
    %614 = vmatprep.subr.bf16.mxu0 0
    %615 = vmatpush2.bf16.msra.mxu0 0
    %616 = vmatprep.mubr.bf16.mxu0 0
    %617 = vmatmul.mubr.bf16.gmra.mxu0 %v576
    %v618 = vpop.f32.mrf.mxu0
    %v619 = vadd.f32 %v51, %v618
    %v620 = vpop.f32.mrf.mxu0
    %v621 = vpop.f32.mrf.mxu0
    %v622 = vadd.f32 %v52, %v621
    %v623 = vpop.f32.mrf.mxu0
    %624 = vmatprep.mubr.bf16.mxu0 0
    %625 = vmatmul.mubr.bf16.gmra.mxu0 %v579
    %v626 = vpop.f32.mrf.mxu0
    %v627 = vadd.f32 %v53, %v626
    %v628 = vpop.f32.mrf.mxu0
    %v629 = vpop.f32.mrf.mxu0
    %v630 = vadd.f32 %v54, %v629
    %v631 = vpop.f32.mrf.mxu0
    %632 = vdwg.mxu0
    %v634 = vsel %vm457, %v368, 0
    %v637 = vsel %vm457, %v370, 0
    %v640 = vsel %vm464, %v449, 0
    %642 = vmatprep.subr.bf16.mxu0 0
    %643 = vmatpush1.bf16.msra.mxu0 0
    %644 = vmatprep.subr.bf16.mxu0 0
    %645 = vmatpush1.bf16.msra.mxu0 0
    %646 = vmatprep.subr.bf16.mxu0 0
    %647 = vmatpush1.bf16.msra.mxu0 0
    %648 = vmatprep.subr.bf16.mxu0 0
    %649 = vmatpush1.bf16.msra.mxu0 0
    %650 = vmatprep.subr.bf16.mxu0 0
    %651 = vmatpush1.bf16.msra.mxu0 0
    %652 = vmatprep.subr.bf16.mxu0 0
    %653 = vmatpush1.bf16.msra.mxu0 0
    %654 = vmatprep.subr.bf16.mxu0 0
    %655 = vmatpush1.bf16.msra.mxu0 0
    %656 = vmatprep.subr.bf16.mxu0 0
    %657 = vmatpush1.bf16.msra.mxu0 %v640
    %658 = vmatprep.subr.bf16.mxu0 0
    %659 = vmatpush2.bf16.msra.mxu0 0
    %660 = vmatprep.subr.bf16.mxu0 0
    %661 = vmatpush2.bf16.msra.mxu0 0
    %662 = vmatprep.subr.bf16.mxu0 0
    %663 = vmatpush2.bf16.msra.mxu0 0
    %664 = vmatprep.subr.bf16.mxu0 0
    %665 = vmatpush2.bf16.msra.mxu0 0
    %666 = vmatprep.subr.bf16.mxu0 0
    %667 = vmatpush2.bf16.msra.mxu0 0
    %668 = vmatprep.subr.bf16.mxu0 0
    %669 = vmatpush2.bf16.msra.mxu0 0
    %670 = vmatprep.subr.bf16.mxu0 0
    %671 = vmatpush2.bf16.msra.mxu0 0
    %672 = vmatprep.subr.bf16.mxu0 0
    %673 = vmatpush2.bf16.msra.mxu0 0
    %674 = vmatprep.mubr.bf16.mxu0 0
    %675 = vmatmul.mubr.bf16.gmra.mxu0 %v634
    %v676 = vpop.f32.mrf.mxu0
    %v677 = vadd.f32 %v51, %v676
    %v678 = vpop.f32.mrf.mxu0
    %v679 = vpop.f32.mrf.mxu0
    %v680 = vadd.f32 %v52, %v679
    %v681 = vpop.f32.mrf.mxu0
    %682 = vmatprep.mubr.bf16.mxu0 0
    %683 = vmatmul.mubr.bf16.gmra.mxu0 %v637
    %v684 = vpop.f32.mrf.mxu0
    %v685 = vadd.f32 %v53, %v684
    %v686 = vpop.f32.mrf.mxu0
    %v687 = vpop.f32.mrf.mxu0
    %v688 = vadd.f32 %v54, %v687
    %v689 = vpop.f32.mrf.mxu0
    %690 = vdwg.mxu0
    %v691 = vsel %vm64, %v503, -inf
    %692 = vmax.xlane.f32.xlu0 %v691
    %v693 = vpop.xlane.xlu0 %692
    %v694 = vsel %vm64, %v506, -inf
    %695 = vmax.xlane.f32.xlu0 %v694
    %v696 = vpop.xlane.xlu0 %695
    %v697 = vsel %vm64, %v511, -inf
    %698 = vmax.xlane.f32.xlu0 %v697
    %v699 = vpop.xlane.xlu0 %698
    %v700 = vsel %vm64, %v514, -inf
    %701 = vmax.xlane.f32.xlu0 %v700
    %v702 = vpop.xlane.xlu0 %701
    %v703 = vsel %vm64, %v561, -inf
    %704 = vmax.xlane.f32.xlu0 %v703
    %v705 = vpop.xlane.xlu0 %704
    %v706 = vsel %vm64, %v564, -inf
    %707 = vmax.xlane.f32.xlu0 %v706
    %v708 = vpop.xlane.xlu0 %707
    %v709 = vsel %vm64, %v569, -inf
    %710 = vmax.xlane.f32.xlu0 %v709
    %v711 = vpop.xlane.xlu0 %710
    %v712 = vsel %vm64, %v572, -inf
    %713 = vmax.xlane.f32.xlu0 %v712
    %v714 = vpop.xlane.xlu0 %713
    %v715 = vsel %vm64, %v619, -inf
    %716 = vmax.xlane.f32.xlu0 %v715
    %v717 = vpop.xlane.xlu0 %716
    %v718 = vsel %vm64, %v622, -inf
    %719 = vmax.xlane.f32.xlu0 %v718
    %v720 = vpop.xlane.xlu0 %719
    %v721 = vsel %vm64, %v627, -inf
    %722 = vmax.xlane.f32.xlu0 %v721
    %v723 = vpop.xlane.xlu0 %722
    %v724 = vsel %vm64, %v630, -inf
    %725 = vmax.xlane.f32.xlu0 %v724
    %v726 = vpop.xlane.xlu0 %725
    %v727 = vsel %vm64, %v677, -inf
    %728 = vmax.xlane.f32.xlu0 %v727
    %v729 = vpop.xlane.xlu0 %728
    %v730 = vsel %vm64, %v680, -inf
    %731 = vmax.xlane.f32.xlu0 %v730
    %v732 = vpop.xlane.xlu0 %731
    %v733 = vsel %vm64, %v685, -inf
    %734 = vmax.xlane.f32.xlu0 %v733
    %v735 = vpop.xlane.xlu0 %734
    %v736 = vsel %vm64, %v688, -inf
    %737 = vmax.xlane.f32.xlu0 %v736
    %v738 = vpop.xlane.xlu0 %737
    %v739 = vsub.f32 %v503, %v693
    %v740 = vsub.f32 %v506, %v696
    %v741 = vsub.f32 %v511, %v699
    %v742 = vsub.f32 %v514, %v702
    %v743 = vsub.f32 %v561, %v705
    %v744 = vsub.f32 %v564, %v708
    %v745 = vsub.f32 %v569, %v711
    %v746 = vsub.f32 %v572, %v714
    %v747 = vsub.f32 %v619, %v717
    %v748 = vsub.f32 %v622, %v720
    %v749 = vsub.f32 %v627, %v723
    %v750 = vsub.f32 %v630, %v726
    %v751 = vsub.f32 %v677, %v729
    %v752 = vsub.f32 %v680, %v732
    %v753 = vsub.f32 %v685, %v735
    %v754 = vsub.f32 %v688, %v738
    %v755 = vmul.f32 %v739, 1.442695
    %v756 = vpow.pop %v755
    %v757 = vmul.f32 %v740, 1.442695
    %v758 = vpow.pop %v757
    %v759 = vmul.f32 %v741, 1.442695
    %v760 = vpow.pop %v759
    %v761 = vmul.f32 %v742, 1.442695
    %v762 = vpow.pop %v761
    %v763 = vmul.f32 %v743, 1.442695
    %v764 = vpow.pop %v763
    %v765 = vmul.f32 %v744, 1.442695
    %v766 = vpow.pop %v765
    %v767 = vmul.f32 %v745, 1.442695
    %v768 = vpow.pop %v767
    %v769 = vmul.f32 %v746, 1.442695
    %v770 = vpow.pop %v769
    %v771 = vmul.f32 %v747, 1.442695
    %v772 = vpow.pop %v771
    %v773 = vmul.f32 %v748, 1.442695
    %v774 = vpow.pop %v773
    %v775 = vmul.f32 %v749, 1.442695
    %v776 = vpow.pop %v775
    %v777 = vmul.f32 %v750, 1.442695
    %v778 = vpow.pop %v777
    %v779 = vmul.f32 %v751, 1.442695
    %v780 = vpow.pop %v779
    %v781 = vmul.f32 %v752, 1.442695
    %v782 = vpow.pop %v781
    %v783 = vmul.f32 %v753, 1.442695
    %v784 = vpow.pop %v783
    %v785 = vmul.f32 %v754, 1.442695
    %v786 = vpow.pop %v785
    %v787 = vsel %vm64, %v756, 0.0
    %788 = vadd.xlane.f32.xlu0 %v787
    %v789 = vpop.xlane.xlu0 %788
    %v790 = vsel %vm64, %v758, 0.0
    %791 = vadd.xlane.f32.xlu0 %v790
    %v792 = vpop.xlane.xlu0 %791
    %v793 = vsel %vm64, %v760, 0.0
    %794 = vadd.xlane.f32.xlu0 %v793
    %v795 = vpop.xlane.xlu0 %794
    %v796 = vsel %vm64, %v762, 0.0
    %797 = vadd.xlane.f32.xlu0 %v796
    %v798 = vpop.xlane.xlu0 %797
    %v799 = vsel %vm64, %v764, 0.0
    %800 = vadd.xlane.f32.xlu0 %v799
    %v801 = vpop.xlane.xlu0 %800
    %v802 = vsel %vm64, %v766, 0.0
    %803 = vadd.xlane.f32.xlu0 %v802
    %v804 = vpop.xlane.xlu0 %803
    %v805 = vsel %vm64, %v768, 0.0
    %806 = vadd.xlane.f32.xlu0 %v805
    %v807 = vpop.xlane.xlu0 %806
    %v808 = vsel %vm64, %v770, 0.0
    %809 = vadd.xlane.f32.xlu0 %v808
    %v810 = vpop.xlane.xlu0 %809
    %v811 = vsel %vm64, %v772, 0.0
    %812 = vadd.xlane.f32.xlu0 %v811
    %v813 = vpop.xlane.xlu0 %812
    %v814 = vsel %vm64, %v774, 0.0
    %815 = vadd.xlane.f32.xlu0 %v814
    %v816 = vpop.xlane.xlu0 %815
    %v817 = vsel %vm64, %v776, 0.0
    %818 = vadd.xlane.f32.xlu0 %v817
    %v819 = vpop.xlane.xlu0 %818
    %v820 = vsel %vm64, %v778, 0.0
    %821 = vadd.xlane.f32.xlu0 %v820
    %v822 = vpop.xlane.xlu0 %821
    %v823 = vsel %vm64, %v780, 0.0
    %824 = vadd.xlane.f32.xlu0 %v823
    %v825 = vpop.xlane.xlu0 %824
    %v826 = vsel %vm64, %v782, 0.0
    %827 = vadd.xlane.f32.xlu0 %v826
    %v828 = vpop.xlane.xlu0 %827
    %v829 = vsel %vm64, %v784, 0.0
    %830 = vadd.xlane.f32.xlu0 %v829
    %v831 = vpop.xlane.xlu0 %830
    %v832 = vsel %vm64, %v786, 0.0
    %833 = vadd.xlane.f32.xlu0 %v832
    %v834 = vpop.xlane.xlu0 %833
    %v835 = vrcp.pop %v789
    %v836 = vrcp.pop %v792
    %v837 = vrcp.pop %v795
    %v838 = vrcp.pop %v798
    %v839 = vrcp.pop %v801
    %v840 = vrcp.pop %v804
    %v841 = vrcp.pop %v807
    %v842 = vrcp.pop %v810
    %v843 = vrcp.pop %v813
    %v844 = vrcp.pop %v816
    %v845 = vrcp.pop %v819
    %v846 = vrcp.pop %v822
    %v847 = vrcp.pop %v825
    %v848 = vrcp.pop %v828
    %v849 = vrcp.pop %v831
    %v850 = vrcp.pop %v834
    %v851 = vmul.f32 %v756, %v835
    %v852 = vmul.f32 %v758, %v836
    %v853 = vmul.f32 %v760, %v837
    %v854 = vmul.f32 %v762, %v838
    %v855 = vmul.f32 %v764, %v839
    %v856 = vmul.f32 %v766, %v840
    %v857 = vmul.f32 %v768, %v841
    %v858 = vmul.f32 %v770, %v842
    %v859 = vmul.f32 %v772, %v843
    %v860 = vmul.f32 %v774, %v844
    %v861 = vmul.f32 %v776, %v845
    %v862 = vmul.f32 %v778, %v846
    %v863 = vmul.f32 %v780, %v847
    %v864 = vmul.f32 %v782, %v848
    %v865 = vmul.f32 %v784, %v849
    %v866 = vmul.f32 %v786, %v850
    %v867 = vpack.c.bf16 %v852, %v851
    %v868 = vpack.c.bf16 %v854, %v853
    %v869 = vpack.c.bf16 %v856, %v855
    %v870 = vpack.c.bf16 %v858, %v857
    %v871 = vpack.c.bf16 %v860, %v859
    %v872 = vpack.c.bf16 %v862, %v861
    %v873 = vpack.c.bf16 %v864, %v863
    %v874 = vpack.c.bf16 %v866, %v865
    %v875 = vpack.c.bf16 %v268, %v264
    %v876 = vpack.c.bf16 %v278, %v274
    %879 = vrot.lane.b32.xlu0 %v875, 120
    %v880 = vpop.permute.xlu0 %879
    %881 = vrot.lane.b32.xlu0 %v876, 120
    %v882 = vpop.permute.xlu0 %881
    %885 = vrot.lane.b32.xlu0 %v875, 112
    %v886 = vpop.permute.xlu0 %885
    %887 = vrot.lane.b32.xlu0 %v876, 112
    %v888 = vpop.permute.xlu0 %887
    %891 = vrot.lane.b32.xlu0 %v875, 104
    %v892 = vpop.permute.xlu0 %891
    %893 = vrot.lane.b32.xlu0 %v876, 104
    %v894 = vpop.permute.xlu0 %893
    %897 = vxpose.xlu0.c.b16.start [1/8] %v875, 128
    %898 = vxpose.xlu0.c.b16.cont [2/8] %v876, 128
    %899 = vxpose.xlu0.c.b16.cont [3/8] 0, 128
    %900 = vxpose.xlu0.c.b16.cont [4/8] 0, 128
    %901 = vxpose.xlu0.c.b16.cont [5/8] 0, 128
    %902 = vxpose.xlu0.c.b16.cont [6/8] 0, 128
    %903 = vxpose.xlu0.c.b16.cont [7/8] 0, 128
    %904 = vxpose.xlu0.c.b16.end [8/8] 0, 128
    %v905 = vpop.trf.xlu0
    %v906 = vpop.trf.xlu0
    %v907 = vpop.trf.xlu0
    %v908 = vpop.trf.xlu0
    %v909 = vpop.trf.xlu0
    %v910 = vpop.trf.xlu0
    %v911 = vpop.trf.xlu0
    %v912 = vpop.trf.xlu0
    %913 = vxpose.xlu0.c.b16.start [1/8] %v880, 128
    %914 = vxpose.xlu0.c.b16.cont [2/8] %v882, 128
    %915 = vxpose.xlu0.c.b16.cont [3/8] 0, 128
    %916 = vxpose.xlu0.c.b16.cont [4/8] 0, 128
    %917 = vxpose.xlu0.c.b16.cont [5/8] 0, 128
    %918 = vxpose.xlu0.c.b16.cont [6/8] 0, 128
    %919 = vxpose.xlu0.c.b16.cont [7/8] 0, 128
    %920 = vxpose.xlu0.c.b16.end [8/8] 0, 128
    %v921 = vpop.trf.xlu0
    %v922 = vpop.trf.xlu0
    %v923 = vpop.trf.xlu0
    %v924 = vpop.trf.xlu0
    %v925 = vpop.trf.xlu0
    %v926 = vpop.trf.xlu0
    %v927 = vpop.trf.xlu0
    %v928 = vpop.trf.xlu0
    %929 = vxpose.xlu0.c.b16.start [1/8] %v886, 128
    %930 = vxpose.xlu0.c.b16.cont [2/8] %v888, 128
    %931 = vxpose.xlu0.c.b16.cont [3/8] 0, 128
    %932 = vxpose.xlu0.c.b16.cont [4/8] 0, 128
    %933 = vxpose.xlu0.c.b16.cont [5/8] 0, 128
    %934 = vxpose.xlu0.c.b16.cont [6/8] 0, 128
    %935 = vxpose.xlu0.c.b16.cont [7/8] 0, 128
    %936 = vxpose.xlu0.c.b16.end [8/8] 0, 128
    %v937 = vpop.trf.xlu0
    %v938 = vpop.trf.xlu0
    %v939 = vpop.trf.xlu0
    %v940 = vpop.trf.xlu0
    %v941 = vpop.trf.xlu0
    %v942 = vpop.trf.xlu0
    %v943 = vpop.trf.xlu0
    %v944 = vpop.trf.xlu0
    %945 = vxpose.xlu0.c.b16.start [1/8] %v892, 128
    %946 = vxpose.xlu0.c.b16.cont [2/8] %v894, 128
    %947 = vxpose.xlu0.c.b16.cont [3/8] 0, 128
    %948 = vxpose.xlu0.c.b16.cont [4/8] 0, 128
    %949 = vxpose.xlu0.c.b16.cont [5/8] 0, 128
    %950 = vxpose.xlu0.c.b16.cont [6/8] 0, 128
    %951 = vxpose.xlu0.c.b16.cont [7/8] 0, 128
    %952 = vxpose.xlu0.c.b16.end [8/8] 0, 128
    %v953 = vpop.trf.xlu0
    %v954 = vpop.trf.xlu0
    %v955 = vpop.trf.xlu0
    %v956 = vpop.trf.xlu0
    %v957 = vpop.trf.xlu0
    %v958 = vpop.trf.xlu0
    %v959 = vpop.trf.xlu0
    %v960 = vpop.trf.xlu0
    %v962 = vsel %vm64, %v905, 0
    %v965 = vsel %vm64, %v867, 0
    %v968 = vsel %vm64, %v868, 0
    %970 = vmatprep.subr.bf16.mxu0 0
    %971 = vmatpush1.bf16.xpose.msra.mxu0 0
    %972 = vmatprep.subr.bf16.mxu0 0
    %973 = vmatpush1.bf16.xpose.msra.mxu0 0
    %974 = vmatprep.subr.bf16.mxu0 0
    %975 = vmatpush1.bf16.xpose.msra.mxu0 0
    %976 = vmatprep.subr.bf16.mxu0 0
    %977 = vmatpush1.bf16.xpose.msra.mxu0 0
    %978 = vmatprep.subr.bf16.mxu0 0
    %979 = vmatpush1.bf16.xpose.msra.mxu0 0
    %980 = vmatprep.subr.bf16.mxu0 0
    %981 = vmatpush1.bf16.xpose.msra.mxu0 0
    %982 = vmatprep.subr.bf16.mxu0 0
    %983 = vmatpush1.bf16.xpose.msra.mxu0 %v968
    %984 = vmatprep.subr.bf16.mxu0 0
    %985 = vmatpush1.bf16.xpose.msra.mxu0 %v965
    %986 = vmatprep.subr.bf16.mxu0 0
    %987 = vmatpush2.bf16.xpose.msra.mxu0 0
    %988 = vmatprep.subr.bf16.mxu0 0
    %989 = vmatpush2.bf16.xpose.msra.mxu0 0
    %990 = vmatprep.subr.bf16.mxu0 0
    %991 = vmatpush2.bf16.xpose.msra.mxu0 0
    %992 = vmatprep.subr.bf16.mxu0 0
    %993 = vmatpush2.bf16.xpose.msra.mxu0 0
    %994 = vmatprep.subr.bf16.mxu0 0
    %995 = vmatpush2.bf16.xpose.msra.mxu0 0
    %996 = vmatprep.subr.bf16.mxu0 0
    %997 = vmatpush2.bf16.xpose.msra.mxu0 0
    %998 = vmatprep.subr.bf16.mxu0 0
    %999 = vmatpush2.bf16.xpose.msra.mxu0 0
    %1000 = vmatprep.subr.bf16.mxu0 0
    %1001 = vmatpush2.bf16.xpose.msra.mxu0 0
    %1002 = vmatprep.mubr.bf16.mxu0 0
    %1003 = vmatmul.mubr.bf16.gmra.mxu0 %v962
    %v1004 = vpop.f32.mrf.mxu0
    %v1005 = vadd.f32 0.0, %v1004
    %v1006 = vpop.f32.mrf.mxu0
    %v1007 = vpop.f32.mrf.mxu0
    %v1008 = vpop.f32.mrf.mxu0
    %1009 = vdwg.mxu0
    %v1011 = vsel %vm64, %v921, 0
    %v1014 = vsel %vm64, %v869, 0
    %v1017 = vsel %vm64, %v870, 0
    %1019 = vmatprep.subr.bf16.mxu0 0
    %1020 = vmatpush1.bf16.xpose.msra.mxu0 0
    %1021 = vmatprep.subr.bf16.mxu0 0
    %1022 = vmatpush1.bf16.xpose.msra.mxu0 0
    %1023 = vmatprep.subr.bf16.mxu0 0
    %1024 = vmatpush1.bf16.xpose.msra.mxu0 0
    %1025 = vmatprep.subr.bf16.mxu0 0
    %1026 = vmatpush1.bf16.xpose.msra.mxu0 0
    %1027 = vmatprep.subr.bf16.mxu0 0
    %1028 = vmatpush1.bf16.xpose.msra.mxu0 0
    %1029 = vmatprep.subr.bf16.mxu0 0
    %1030 = vmatpush1.bf16.xpose.msra.mxu0 0
    %1031 = vmatprep.subr.bf16.mxu0 0
    %1032 = vmatpush1.bf16.xpose.msra.mxu0 %v1017
    %1033 = vmatprep.subr.bf16.mxu0 0
    %1034 = vmatpush1.bf16.xpose.msra.mxu0 %v1014
    %1035 = vmatprep.subr.bf16.mxu0 0
    %1036 = vmatpush2.bf16.xpose.msra.mxu0 0
    %1037 = vmatprep.subr.bf16.mxu0 0
    %1038 = vmatpush2.bf16.xpose.msra.mxu0 0
    %1039 = vmatprep.subr.bf16.mxu0 0
    %1040 = vmatpush2.bf16.xpose.msra.mxu0 0
    %1041 = vmatprep.subr.bf16.mxu0 0
    %1042 = vmatpush2.bf16.xpose.msra.mxu0 0
    %1043 = vmatprep.subr.bf16.mxu0 0
    %1044 = vmatpush2.bf16.xpose.msra.mxu0 0
    %1045 = vmatprep.subr.bf16.mxu0 0
    %1046 = vmatpush2.bf16.xpose.msra.mxu0 0
    %1047 = vmatprep.subr.bf16.mxu0 0
    %1048 = vmatpush2.bf16.xpose.msra.mxu0 0
    %1049 = vmatprep.subr.bf16.mxu0 0
    %1050 = vmatpush2.bf16.xpose.msra.mxu0 0
    %1051 = vmatprep.mubr.bf16.mxu0 0
    %1052 = vmatmul.mubr.bf16.gmra.mxu0 %v1011
    %v1053 = vpop.f32.mrf.mxu0
    %v1054 = vadd.f32 0.0, %v1053
    %v1055 = vpop.f32.mrf.mxu0
    %v1056 = vpop.f32.mrf.mxu0
    %v1057 = vpop.f32.mrf.mxu0
    %1058 = vdwg.mxu0
    %v1060 = vsel %vm64, %v937, 0
    %v1063 = vsel %vm64, %v871, 0
    %v1066 = vsel %vm64, %v872, 0
    %1068 = vmatprep.subr.bf16.mxu0 0
    %1069 = vmatpush1.bf16.xpose.msra.mxu0 0
    %1070 = vmatprep.subr.bf16.mxu0 0
    %1071 = vmatpush1.bf16.xpose.msra.mxu0 0
    %1072 = vmatprep.subr.bf16.mxu0 0
    %1073 = vmatpush1.bf16.xpose.msra.mxu0 0
    %1074 = vmatprep.subr.bf16.mxu0 0
    %1075 = vmatpush1.bf16.xpose.msra.mxu0 0
    %1076 = vmatprep.subr.bf16.mxu0 0
    %1077 = vmatpush1.bf16.xpose.msra.mxu0 0
    %1078 = vmatprep.subr.bf16.mxu0 0
    %1079 = vmatpush1.bf16.xpose.msra.mxu0 0
    %1080 = vmatprep.subr.bf16.mxu0 0
    %1081 = vmatpush1.bf16.xpose.msra.mxu0 %v1066
    %1082 = vmatprep.subr.bf16.mxu0 0
    %1083 = vmatpush1.bf16.xpose.msra.mxu0 %v1063
    %1084 = vmatprep.subr.bf16.mxu0 0
    %1085 = vmatpush2.bf16.xpose.msra.mxu0 0
    %1086 = vmatprep.subr.bf16.mxu0 0
    %1087 = vmatpush2.bf16.xpose.msra.mxu0 0
    %1088 = vmatprep.subr.bf16.mxu0 0
    %1089 = vmatpush2.bf16.xpose.msra.mxu0 0
    %1090 = vmatprep.subr.bf16.mxu0 0
    %1091 = vmatpush2.bf16.xpose.msra.mxu0 0
    %1092 = vmatprep.subr.bf16.mxu0 0
    %1093 = vmatpush2.bf16.xpose.msra.mxu0 0
    %1094 = vmatprep.subr.bf16.mxu0 0
    %1095 = vmatpush2.bf16.xpose.msra.mxu0 0
    %1096 = vmatprep.subr.bf16.mxu0 0
    %1097 = vmatpush2.bf16.xpose.msra.mxu0 0
    %1098 = vmatprep.subr.bf16.mxu0 0
    %1099 = vmatpush2.bf16.xpose.msra.mxu0 0
    %1100 = vmatprep.mubr.bf16.mxu0 0
    %1101 = vmatmul.mubr.bf16.gmra.mxu0 %v1060
    %v1102 = vpop.f32.mrf.mxu0
    %v1103 = vadd.f32 0.0, %v1102
    %v1104 = vpop.f32.mrf.mxu0
    %v1105 = vpop.f32.mrf.mxu0
    %v1106 = vpop.f32.mrf.mxu0
    %1107 = vdwg.mxu0
    %v1109 = vsel %vm64, %v953, 0
    %v1112 = vsel %vm64, %v873, 0
    %v1115 = vsel %vm64, %v874, 0
    %1117 = vmatprep.subr.bf16.mxu0 0
    %1118 = vmatpush1.bf16.xpose.msra.mxu0 0
    %1119 = vmatprep.subr.bf16.mxu0 0
    %1120 = vmatpush1.bf16.xpose.msra.mxu0 0
    %1121 = vmatprep.subr.bf16.mxu0 0
    %1122 = vmatpush1.bf16.xpose.msra.mxu0 0
    %1123 = vmatprep.subr.bf16.mxu0 0
    %1124 = vmatpush1.bf16.xpose.msra.mxu0 0
    %1125 = vmatprep.subr.bf16.mxu0 0
    %1126 = vmatpush1.bf16.xpose.msra.mxu0 0
    %1127 = vmatprep.subr.bf16.mxu0 0
    %1128 = vmatpush1.bf16.xpose.msra.mxu0 0
    %1129 = vmatprep.subr.bf16.mxu0 0
    %1130 = vmatpush1.bf16.xpose.msra.mxu0 %v1115
    %1131 = vmatprep.subr.bf16.mxu0 0
    %1132 = vmatpush1.bf16.xpose.msra.mxu0 %v1112
    %1133 = vmatprep.subr.bf16.mxu0 0
    %1134 = vmatpush2.bf16.xpose.msra.mxu0 0
    %1135 = vmatprep.subr.bf16.mxu0 0
    %1136 = vmatpush2.bf16.xpose.msra.mxu0 0
    %1137 = vmatprep.subr.bf16.mxu0 0
    %1138 = vmatpush2.bf16.xpose.msra.mxu0 0
    %1139 = vmatprep.subr.bf16.mxu0 0
    %1140 = vmatpush2.bf16.xpose.msra.mxu0 0
    %1141 = vmatprep.subr.bf16.mxu0 0
    %1142 = vmatpush2.bf16.xpose.msra.mxu0 0
    %1143 = vmatprep.subr.bf16.mxu0 0
    %1144 = vmatpush2.bf16.xpose.msra.mxu0 0
    %1145 = vmatprep.subr.bf16.mxu0 0
    %1146 = vmatpush2.bf16.xpose.msra.mxu0 0
    %1147 = vmatprep.subr.bf16.mxu0 0
    %1148 = vmatpush2.bf16.xpose.msra.mxu0 0
    %1149 = vmatprep.mubr.bf16.mxu0 0
    %1150 = vmatmul.mubr.bf16.gmra.mxu0 %v1109
    %v1151 = vpop.f32.mrf.mxu0
    %v1152 = vadd.f32 0.0, %v1151
    %v1153 = vpop.f32.mrf.mxu0
    %v1154 = vpop.f32.mrf.mxu0
    %v1155 = vpop.f32.mrf.mxu0
    %1156 = vdwg.mxu0
    %1157 = vxpose.xlu0.b32.start [1/16] %v1005, 128
    %1158 = vxpose.xlu0.b32.cont [2/16] 0.0, 128
    %1159 = vxpose.xlu0.b32.cont [3/16] 0.0, 128
    %1160 = vxpose.xlu0.b32.cont [4/16] 0.0, 128
    %1161 = vxpose.xlu0.b32.cont [5/16] 0.0, 128
    %1162 = vxpose.xlu0.b32.cont [6/16] 0.0, 128
    %1163 = vxpose.xlu0.b32.cont [7/16] 0.0, 128
    %1164 = vxpose.xlu0.b32.cont [8/16] 0.0, 128
    %1165 = vxpose.xlu0.b32.cont [9/16] 0.0, 128
    %1166 = vxpose.xlu0.b32.cont [10/16] 0.0, 128
    %1167 = vxpose.xlu0.b32.cont [11/16] 0.0, 128
    %1168 = vxpose.xlu0.b32.cont [12/16] 0.0, 128
    %1169 = vxpose.xlu0.b32.cont [13/16] 0.0, 128
    %1170 = vxpose.xlu0.b32.cont [14/16] 0.0, 128
    %1171 = vxpose.xlu0.b32.cont [15/16] 0.0, 128
    %1172 = vxpose.xlu0.b32.end [16/16] 0.0, 128
    %v1173 = vpop.trf.xlu0
    %v1174 = vpop.trf.xlu0
    %v1175 = vpop.trf.xlu0
    %v1176 = vpop.trf.xlu0
    %v1177 = vpop.trf.xlu0
    %v1178 = vpop.trf.xlu0
    %v1179 = vpop.trf.xlu0
    %v1180 = vpop.trf.xlu0
    %v1181 = vpop.trf.xlu0
    %v1182 = vpop.trf.xlu0
    %v1183 = vpop.trf.xlu0
    %v1184 = vpop.trf.xlu0
    %v1185 = vpop.trf.xlu0
    %v1186 = vpop.trf.xlu0
    %v1187 = vpop.trf.xlu0
    %v1188 = vpop.trf.xlu0
    %1189 = vxpose.xlu0.b32.start [1/16] %v1054, 128
    %1190 = vxpose.xlu0.b32.cont [2/16] 0.0, 128
    %1191 = vxpose.xlu0.b32.cont [3/16] 0.0, 128
    %1192 = vxpose.xlu0.b32.cont [4/16] 0.0, 128
    %1193 = vxpose.xlu0.b32.cont [5/16] 0.0, 128
    %1194 = vxpose.xlu0.b32.cont [6/16] 0.0, 128
    %1195 = vxpose.xlu0.b32.cont [7/16] 0.0, 128
    %1196 = vxpose.xlu0.b32.cont [8/16] 0.0, 128
    %1197 = vxpose.xlu0.b32.cont [9/16] 0.0, 128
    %1198 = vxpose.xlu0.b32.cont [10/16] 0.0, 128
    %1199 = vxpose.xlu0.b32.cont [11/16] 0.0, 128
    %1200 = vxpose.xlu0.b32.cont [12/16] 0.0, 128
    %1201 = vxpose.xlu0.b32.cont [13/16] 0.0, 128
    %1202 = vxpose.xlu0.b32.cont [14/16] 0.0, 128
    %1203 = vxpose.xlu0.b32.cont [15/16] 0.0, 128
    %1204 = vxpose.xlu0.b32.end [16/16] 0.0, 128
    %v1205 = vpop.trf.xlu0
    %v1206 = vpop.trf.xlu0
    %v1207 = vpop.trf.xlu0
    %v1208 = vpop.trf.xlu0
    %v1209 = vpop.trf.xlu0
    %v1210 = vpop.trf.xlu0
    %v1211 = vpop.trf.xlu0
    %v1212 = vpop.trf.xlu0
    %v1213 = vpop.trf.xlu0
    %v1214 = vpop.trf.xlu0
    %v1215 = vpop.trf.xlu0
    %v1216 = vpop.trf.xlu0
    %v1217 = vpop.trf.xlu0
    %v1218 = vpop.trf.xlu0
    %v1219 = vpop.trf.xlu0
    %v1220 = vpop.trf.xlu0
    %1221 = vxpose.xlu0.b32.start [1/16] %v1103, 128
    %1222 = vxpose.xlu0.b32.cont [2/16] 0.0, 128
    %1223 = vxpose.xlu0.b32.cont [3/16] 0.0, 128
    %1224 = vxpose.xlu0.b32.cont [4/16] 0.0, 128
    %1225 = vxpose.xlu0.b32.cont [5/16] 0.0, 128
    %1226 = vxpose.xlu0.b32.cont [6/16] 0.0, 128
    %1227 = vxpose.xlu0.b32.cont [7/16] 0.0, 128
    %1228 = vxpose.xlu0.b32.cont [8/16] 0.0, 128
    %1229 = vxpose.xlu0.b32.cont [9/16] 0.0, 128
    %1230 = vxpose.xlu0.b32.cont [10/16] 0.0, 128
    %1231 = vxpose.xlu0.b32.cont [11/16] 0.0, 128
    %1232 = vxpose.xlu0.b32.cont [12/16] 0.0, 128
    %1233 = vxpose.xlu0.b32.cont [13/16] 0.0, 128
    %1234 = vxpose.xlu0.b32.cont [14/16] 0.0, 128
    %1235 = vxpose.xlu0.b32.cont [15/16] 0.0, 128
    %1236 = vxpose.xlu0.b32.end [16/16] 0.0, 128
    %v1237 = vpop.trf.xlu0
    %v1238 = vpop.trf.xlu0
    %v1239 = vpop.trf.xlu0
    %v1240 = vpop.trf.xlu0
    %v1241 = vpop.trf.xlu0
    %v1242 = vpop.trf.xlu0
    %v1243 = vpop.trf.xlu0
    %v1244 = vpop.trf.xlu0
    %v1245 = vpop.trf.xlu0
    %v1246 = vpop.trf.xlu0
    %v1247 = vpop.trf.xlu0
    %v1248 = vpop.trf.xlu0
    %v1249 = vpop.trf.xlu0
    %v1250 = vpop.trf.xlu0
    %v1251 = vpop.trf.xlu0
    %v1252 = vpop.trf.xlu0
    %1253 = vxpose.xlu0.b32.start [1/16] %v1152, 128
    %1254 = vxpose.xlu0.b32.cont [2/16] 0.0, 128
    %1255 = vxpose.xlu0.b32.cont [3/16] 0.0, 128
    %1256 = vxpose.xlu0.b32.cont [4/16] 0.0, 128
    %1257 = vxpose.xlu0.b32.cont [5/16] 0.0, 128
    %1258 = vxpose.xlu0.b32.cont [6/16] 0.0, 128
    %1259 = vxpose.xlu0.b32.cont [7/16] 0.0, 128
    %1260 = vxpose.xlu0.b32.cont [8/16] 0.0, 128
    %1261 = vxpose.xlu0.b32.cont [9/16] 0.0, 128
    %1262 = vxpose.xlu0.b32.cont [10/16] 0.0, 128
    %1263 = vxpose.xlu0.b32.cont [11/16] 0.0, 128
    %1264 = vxpose.xlu0.b32.cont [12/16] 0.0, 128
    %1265 = vxpose.xlu0.b32.cont [13/16] 0.0, 128
    %1266 = vxpose.xlu0.b32.cont [14/16] 0.0, 128
    %1267 = vxpose.xlu0.b32.cont [15/16] 0.0, 128
    %1268 = vxpose.xlu0.b32.end [16/16] 0.0, 128
    %v1269 = vpop.trf.xlu0
    %v1270 = vpop.trf.xlu0
    %v1271 = vpop.trf.xlu0
    %v1272 = vpop.trf.xlu0
    %v1273 = vpop.trf.xlu0
    %v1274 = vpop.trf.xlu0
    %v1275 = vpop.trf.xlu0
    %v1276 = vpop.trf.xlu0
    %v1277 = vpop.trf.xlu0
    %v1278 = vpop.trf.xlu0
    %v1279 = vpop.trf.xlu0
    %v1280 = vpop.trf.xlu0
    %v1281 = vpop.trf.xlu0
    %v1282 = vpop.trf.xlu0
    %v1283 = vpop.trf.xlu0
    %v1284 = vpop.trf.xlu0
    %v1285 = vcombine.low %v1173, %v1237
    %v1286 = vcombine.high %v1173, %v1237
    %v1288 = vunpack.c.l.s4 1983009808
    %v1289 = vunpack.c.0.s8 %v1288
    %v1290 = vlaneseq
    %v1291 = vshrl.u32 %v1290, 7
    %v1292 = vsub.s32 %v1289, %v1291
    %v1293 = vrot.slane %v1285, %v1292
    %v1295 = vunpack.c.l.s4 1983009808
    %v1296 = vunpack.c.0.s8 %v1295
    %v1297 = vlaneseq
    %v1298 = vshrl.u32 %v1297, 7
    %v1299 = vsub.s32 %v1296, %v1298
    %v1300 = vrot.slane %v1286, %v1299
    %v1301 = vcombine.low %v1205, %v1269
    %v1302 = vcombine.high %v1205, %v1269
    %v1304 = vunpack.c.l.s4 1983009808
    %v1305 = vunpack.c.0.s8 %v1304
    %v1306 = vlaneseq
    %v1307 = vshrl.u32 %v1306, 7
    %v1308 = vsub.s32 %v1305, %v1307
    %v1309 = vrot.slane %v1301, %v1308
    %v1311 = vunpack.c.l.s4 1983009808
    %v1312 = vunpack.c.0.s8 %v1311
    %v1313 = vlaneseq
    %v1314 = vshrl.u32 %v1313, 7
    %v1315 = vsub.s32 %v1312, %v1314
    %v1316 = vrot.slane %v1302, %v1315
    %v1317 = vcombine.low %v1293, %v1309
    %v1318 = vcombine.high %v1293, %v1309
    %v1320 = vunpack.c.l.s4 1934713408
    %v1321 = vunpack.c.0.s8 %v1320
    %v1322 = vlaneseq
    %v1323 = vshrl.u32 %v1322, 7
    %v1324 = vsub.s32 %v1321, %v1323
    %v1325 = vrot.slane %v1317, %v1324
    %v1327 = vunpack.c.l.s4 1934713408
    %v1328 = vunpack.c.0.s8 %v1327
    %v1329 = vlaneseq
    %v1330 = vshrl.u32 %v1329, 7
    %v1331 = vsub.s32 %v1328, %v1330
    %v1332 = vrot.slane %v1318, %v1331
    %v1333 = vcombine.low %v1300, %v1316
    %v1334 = vcombine.high %v1300, %v1316
    %v1336 = vunpack.c.l.s4 1934713408
    %v1337 = vunpack.c.0.s8 %v1336
    %v1338 = vlaneseq
    %v1339 = vshrl.u32 %v1338, 7
    %v1340 = vsub.s32 %v1337, %v1339
    %v1341 = vrot.slane %v1333, %v1340
    %v1343 = vunpack.c.l.s4 1934713408
    %v1344 = vunpack.c.0.s8 %v1343
    %v1345 = vlaneseq
    %v1346 = vshrl.u32 %v1345, 7
    %v1347 = vsub.s32 %v1344, %v1346
    %v1348 = vrot.slane %v1334, %v1347
    %v1349 = vcombine.high %v1325, 0.0
    %v1350 = vcombine.high %v1332, 0.0
    %v1351 = vcombine.high %v1341, 0.0
    %v1352 = vcombine.high %v1348, 0.0
    %v1353 = vcombine.low %v1174, %v1238
    %v1354 = vcombine.high %v1174, %v1238
    %v1356 = vunpack.c.l.s4 1983009808
    %v1357 = vunpack.c.0.s8 %v1356
    %v1358 = vlaneseq
    %v1359 = vshrl.u32 %v1358, 7
    %v1360 = vsub.s32 %v1357, %v1359
    %v1361 = vrot.slane %v1353, %v1360
    %v1363 = vunpack.c.l.s4 1983009808
    %v1364 = vunpack.c.0.s8 %v1363
    %v1365 = vlaneseq
    %v1366 = vshrl.u32 %v1365, 7
    %v1367 = vsub.s32 %v1364, %v1366
    %v1368 = vrot.slane %v1354, %v1367
    %v1369 = vcombine.low %v1206, %v1270
    %v1370 = vcombine.high %v1206, %v1270
    %v1372 = vunpack.c.l.s4 1983009808
    %v1373 = vunpack.c.0.s8 %v1372
    %v1374 = vlaneseq
    %v1375 = vshrl.u32 %v1374, 7
    %v1376 = vsub.s32 %v1373, %v1375
    %v1377 = vrot.slane %v1369, %v1376
    %v1379 = vunpack.c.l.s4 1983009808
    %v1380 = vunpack.c.0.s8 %v1379
    %v1381 = vlaneseq
    %v1382 = vshrl.u32 %v1381, 7
    %v1383 = vsub.s32 %v1380, %v1382
    %v1384 = vrot.slane %v1370, %v1383
    %v1385 = vcombine.low %v1361, %v1377
    %v1386 = vcombine.high %v1361, %v1377
    %v1388 = vunpack.c.l.s4 1934713408
    %v1389 = vunpack.c.0.s8 %v1388
    %v1390 = vlaneseq
    %v1391 = vshrl.u32 %v1390, 7
    %v1392 = vsub.s32 %v1389, %v1391
    %v1393 = vrot.slane %v1385, %v1392
    %v1395 = vunpack.c.l.s4 1934713408
    %v1396 = vunpack.c.0.s8 %v1395
    %v1397 = vlaneseq
    %v1398 = vshrl.u32 %v1397, 7
    %v1399 = vsub.s32 %v1396, %v1398
    %v1400 = vrot.slane %v1386, %v1399
    %v1401 = vcombine.low %v1368, %v1384
    %v1402 = vcombine.high %v1368, %v1384
    %v1404 = vunpack.c.l.s4 1934713408
    %v1405 = vunpack.c.0.s8 %v1404
    %v1406 = vlaneseq
    %v1407 = vshrl.u32 %v1406, 7
    %v1408 = vsub.s32 %v1405, %v1407
    %v1409 = vrot.slane %v1401, %v1408
    %v1411 = vunpack.c.l.s4 1934713408
    %v1412 = vunpack.c.0.s8 %v1411
    %v1413 = vlaneseq
    %v1414 = vshrl.u32 %v1413, 7
    %v1415 = vsub.s32 %v1412, %v1414
    %v1416 = vrot.slane %v1402, %v1415
    %v1417 = vcombine.high %v1393, 0.0
    %v1418 = vcombine.high %v1400, 0.0
    %v1419 = vcombine.high %v1409, 0.0
    %v1420 = vcombine.high %v1416, 0.0
    %v1421 = vcombine.low %v1175, %v1239
    %v1422 = vcombine.high %v1175, %v1239
    %v1424 = vunpack.c.l.s4 1983009808
    %v1425 = vunpack.c.0.s8 %v1424
    %v1426 = vlaneseq
    %v1427 = vshrl.u32 %v1426, 7
    %v1428 = vsub.s32 %v1425, %v1427
    %v1429 = vrot.slane %v1421, %v1428
    %v1431 = vunpack.c.l.s4 1983009808
    %v1432 = vunpack.c.0.s8 %v1431
    %v1433 = vlaneseq
    %v1434 = vshrl.u32 %v1433, 7
    %v1435 = vsub.s32 %v1432, %v1434
    %v1436 = vrot.slane %v1422, %v1435
    %v1437 = vcombine.low %v1207, %v1271
    %v1438 = vcombine.high %v1207, %v1271
    %v1440 = vunpack.c.l.s4 1983009808
    %v1441 = vunpack.c.0.s8 %v1440
    %v1442 = vlaneseq
    %v1443 = vshrl.u32 %v1442, 7
    %v1444 = vsub.s32 %v1441, %v1443
    %v1445 = vrot.slane %v1437, %v1444
    %v1447 = vunpack.c.l.s4 1983009808
    %v1448 = vunpack.c.0.s8 %v1447
    %v1449 = vlaneseq
    %v1450 = vshrl.u32 %v1449, 7
    %v1451 = vsub.s32 %v1448, %v1450
    %v1452 = vrot.slane %v1438, %v1451
    %v1453 = vcombine.low %v1429, %v1445
    %v1454 = vcombine.high %v1429, %v1445
    %v1456 = vunpack.c.l.s4 1934713408
    %v1457 = vunpack.c.0.s8 %v1456
    %v1458 = vlaneseq
    %v1459 = vshrl.u32 %v1458, 7
    %v1460 = vsub.s32 %v1457, %v1459
    %v1461 = vrot.slane %v1453, %v1460
    %v1463 = vunpack.c.l.s4 1934713408
    %v1464 = vunpack.c.0.s8 %v1463
    %v1465 = vlaneseq
    %v1466 = vshrl.u32 %v1465, 7
    %v1467 = vsub.s32 %v1464, %v1466
    %v1468 = vrot.slane %v1454, %v1467
    %v1469 = vcombine.low %v1436, %v1452
    %v1470 = vcombine.high %v1436, %v1452
    %v1472 = vunpack.c.l.s4 1934713408
    %v1473 = vunpack.c.0.s8 %v1472
    %v1474 = vlaneseq
    %v1475 = vshrl.u32 %v1474, 7
    %v1476 = vsub.s32 %v1473, %v1475
    %v1477 = vrot.slane %v1469, %v1476
    %v1479 = vunpack.c.l.s4 1934713408
    %v1480 = vunpack.c.0.s8 %v1479
    %v1481 = vlaneseq
    %v1482 = vshrl.u32 %v1481, 7
    %v1483 = vsub.s32 %v1480, %v1482
    %v1484 = vrot.slane %v1470, %v1483
    %v1485 = vcombine.high %v1461, 0.0
    %v1486 = vcombine.high %v1468, 0.0
    %v1487 = vcombine.high %v1477, 0.0
    %v1488 = vcombine.high %v1484, 0.0
    %v1489 = vcombine.low %v1176, %v1240
    %v1490 = vcombine.high %v1176, %v1240
    %v1492 = vunpack.c.l.s4 1983009808
    %v1493 = vunpack.c.0.s8 %v1492
    %v1494 = vlaneseq
    %v1495 = vshrl.u32 %v1494, 7
    %v1496 = vsub.s32 %v1493, %v1495
    %v1497 = vrot.slane %v1489, %v1496
    %v1499 = vunpack.c.l.s4 1983009808
    %v1500 = vunpack.c.0.s8 %v1499
    %v1501 = vlaneseq
    %v1502 = vshrl.u32 %v1501, 7
    %v1503 = vsub.s32 %v1500, %v1502
    %v1504 = vrot.slane %v1490, %v1503
    %v1505 = vcombine.low %v1208, %v1272
    %v1506 = vcombine.high %v1208, %v1272
    %v1508 = vunpack.c.l.s4 1983009808
    %v1509 = vunpack.c.0.s8 %v1508
    %v1510 = vlaneseq
    %v1511 = vshrl.u32 %v1510, 7
    %v1512 = vsub.s32 %v1509, %v1511
    %v1513 = vrot.slane %v1505, %v1512
    %v1515 = vunpack.c.l.s4 1983009808
    %v1516 = vunpack.c.0.s8 %v1515
    %v1517 = vlaneseq
    %v1518 = vshrl.u32 %v1517, 7
    %v1519 = vsub.s32 %v1516, %v1518
    %v1520 = vrot.slane %v1506, %v1519
    %v1521 = vcombine.low %v1497, %v1513
    %v1522 = vcombine.high %v1497, %v1513
    %v1524 = vunpack.c.l.s4 1934713408
    %v1525 = vunpack.c.0.s8 %v1524
    %v1526 = vlaneseq
    %v1527 = vshrl.u32 %v1526, 7
    %v1528 = vsub.s32 %v1525, %v1527
    %v1529 = vrot.slane %v1521, %v1528
    %v1531 = vunpack.c.l.s4 1934713408
    %v1532 = vunpack.c.0.s8 %v1531
    %v1533 = vlaneseq
    %v1534 = vshrl.u32 %v1533, 7
    %v1535 = vsub.s32 %v1532, %v1534
    %v1536 = vrot.slane %v1522, %v1535
    %v1537 = vcombine.low %v1504, %v1520
    %v1538 = vcombine.high %v1504, %v1520
    %v1540 = vunpack.c.l.s4 1934713408
    %v1541 = vunpack.c.0.s8 %v1540
    %v1542 = vlaneseq
    %v1543 = vshrl.u32 %v1542, 7
    %v1544 = vsub.s32 %v1541, %v1543
    %v1545 = vrot.slane %v1537, %v1544
    %v1547 = vunpack.c.l.s4 1934713408
    %v1548 = vunpack.c.0.s8 %v1547
    %v1549 = vlaneseq
    %v1550 = vshrl.u32 %v1549, 7
    %v1551 = vsub.s32 %v1548, %v1550
    %v1552 = vrot.slane %v1538, %v1551
    %v1553 = vcombine.high %v1529, 0.0
    %v1554 = vcombine.high %v1536, 0.0
    %v1555 = vcombine.high %v1545, 0.0
    %v1556 = vcombine.high %v1552, 0.0
    %v1557 = vcombine.low %v1325, %v1332
    %v1559 = vunpack.c.l.s4 1983009808
    %v1560 = vunpack.c.0.s8 %v1559
    %v1561 = vlaneseq
    %v1562 = vshrl.u32 %v1561, 7
    %v1563 = vsub.s32 %v1560, %v1562
    %v1564 = vrot.slane %v1557, %v1563
    %v1565 = vcombine.low %v1349, %v1350
    %v1567 = vunpack.c.l.s4 1983009808
    %v1568 = vunpack.c.0.s8 %v1567
    %v1569 = vlaneseq
    %v1570 = vshrl.u32 %v1569, 7
    %v1571 = vsub.s32 %v1568, %v1570
    %v1572 = vrot.slane %v1565, %v1571
    %v1573 = vcombine.low %v1341, %v1348
    %v1575 = vunpack.c.l.s4 1983009808
    %v1576 = vunpack.c.0.s8 %v1575
    %v1577 = vlaneseq
    %v1578 = vshrl.u32 %v1577, 7
    %v1579 = vsub.s32 %v1576, %v1578
    %v1580 = vrot.slane %v1573, %v1579
    %v1581 = vcombine.low %v1351, %v1352
    %v1583 = vunpack.c.l.s4 1983009808
    %v1584 = vunpack.c.0.s8 %v1583
    %v1585 = vlaneseq
    %v1586 = vshrl.u32 %v1585, 7
    %v1587 = vsub.s32 %v1584, %v1586
    %v1588 = vrot.slane %v1581, %v1587
    %v1589 = vcombine.low %v1564, %v1572
    %v1590 = vcombine.high %v1564, %v1572
    %v1592 = vunpack.c.l.s4 1934713408
    %v1593 = vunpack.c.0.s8 %v1592
    %v1594 = vlaneseq
    %v1595 = vshrl.u32 %v1594, 7
    %v1596 = vsub.s32 %v1593, %v1595
    %v1597 = vrot.slane %v1589, %v1596
    %v1599 = vunpack.c.l.s4 1934713408
    %v1600 = vunpack.c.0.s8 %v1599
    %v1601 = vlaneseq
    %v1602 = vshrl.u32 %v1601, 7
    %v1603 = vsub.s32 %v1600, %v1602
    %v1604 = vrot.slane %v1590, %v1603
    %v1605 = vcombine.low %v1580, %v1588
    %v1606 = vcombine.high %v1580, %v1588
    %v1608 = vunpack.c.l.s4 1934713408
    %v1609 = vunpack.c.0.s8 %v1608
    %v1610 = vlaneseq
    %v1611 = vshrl.u32 %v1610, 7
    %v1612 = vsub.s32 %v1609, %v1611
    %v1613 = vrot.slane %v1605, %v1612
    %v1615 = vunpack.c.l.s4 1934713408
    %v1616 = vunpack.c.0.s8 %v1615
    %v1617 = vlaneseq
    %v1618 = vshrl.u32 %v1617, 7
    %v1619 = vsub.s32 %v1616, %v1618
    %v1620 = vrot.slane %v1606, %v1619
    %v1621 = vcombine.low %v1597, %v1613
    %v1622 = vcombine.high %v1597, %v1613
    %v1623 = vcombine.low %v1604, %v1620
    %v1624 = vcombine.high %v1604, %v1620
    %v1625 = vcombine.low %v1393, %v1400
    %v1627 = vunpack.c.l.s4 1983009808
    %v1628 = vunpack.c.0.s8 %v1627
    %v1629 = vlaneseq
    %v1630 = vshrl.u32 %v1629, 7
    %v1631 = vsub.s32 %v1628, %v1630
    %v1632 = vrot.slane %v1625, %v1631
    %v1633 = vcombine.low %v1417, %v1418
    %v1635 = vunpack.c.l.s4 1983009808
    %v1636 = vunpack.c.0.s8 %v1635
    %v1637 = vlaneseq
    %v1638 = vshrl.u32 %v1637, 7
    %v1639 = vsub.s32 %v1636, %v1638
    %v1640 = vrot.slane %v1633, %v1639
    %v1641 = vcombine.low %v1409, %v1416
    %v1643 = vunpack.c.l.s4 1983009808
    %v1644 = vunpack.c.0.s8 %v1643
    %v1645 = vlaneseq
    %v1646 = vshrl.u32 %v1645, 7
    %v1647 = vsub.s32 %v1644, %v1646
    %v1648 = vrot.slane %v1641, %v1647
    %v1649 = vcombine.low %v1419, %v1420
    %v1651 = vunpack.c.l.s4 1983009808
    %v1652 = vunpack.c.0.s8 %v1651
    %v1653 = vlaneseq
    %v1654 = vshrl.u32 %v1653, 7
    %v1655 = vsub.s32 %v1652, %v1654
    %v1656 = vrot.slane %v1649, %v1655
    %v1657 = vcombine.low %v1632, %v1640
    %v1658 = vcombine.high %v1632, %v1640
    %v1660 = vunpack.c.l.s4 1934713408
    %v1661 = vunpack.c.0.s8 %v1660
    %v1662 = vlaneseq
    %v1663 = vshrl.u32 %v1662, 7
    %v1664 = vsub.s32 %v1661, %v1663
    %v1665 = vrot.slane %v1657, %v1664
    %v1667 = vunpack.c.l.s4 1934713408
    %v1668 = vunpack.c.0.s8 %v1667
    %v1669 = vlaneseq
    %v1670 = vshrl.u32 %v1669, 7
    %v1671 = vsub.s32 %v1668, %v1670
    %v1672 = vrot.slane %v1658, %v1671
    %v1673 = vcombine.low %v1648, %v1656
    %v1674 = vcombine.high %v1648, %v1656
    %v1676 = vunpack.c.l.s4 1934713408
    %v1677 = vunpack.c.0.s8 %v1676
    %v1678 = vlaneseq
    %v1679 = vshrl.u32 %v1678, 7
    %v1680 = vsub.s32 %v1677, %v1679
    %v1681 = vrot.slane %v1673, %v1680
    %v1683 = vunpack.c.l.s4 1934713408
    %v1684 = vunpack.c.0.s8 %v1683
    %v1685 = vlaneseq
    %v1686 = vshrl.u32 %v1685, 7
    %v1687 = vsub.s32 %v1684, %v1686
    %v1688 = vrot.slane %v1674, %v1687
    %v1689 = vcombine.low %v1665, %v1681
    %v1690 = vcombine.high %v1665, %v1681
    %v1691 = vcombine.low %v1672, %v1688
    %v1692 = vcombine.high %v1672, %v1688
    %v1693 = vcombine.low %v1461, %v1468
    %v1695 = vunpack.c.l.s4 1983009808
    %v1696 = vunpack.c.0.s8 %v1695
    %v1697 = vlaneseq
    %v1698 = vshrl.u32 %v1697, 7
    %v1699 = vsub.s32 %v1696, %v1698
    %v1700 = vrot.slane %v1693, %v1699
    %v1701 = vcombine.low %v1485, %v1486
    %v1703 = vunpack.c.l.s4 1983009808
    %v1704 = vunpack.c.0.s8 %v1703
    %v1705 = vlaneseq
    %v1706 = vshrl.u32 %v1705, 7
    %v1707 = vsub.s32 %v1704, %v1706
    %v1708 = vrot.slane %v1701, %v1707
    %v1709 = vcombine.low %v1477, %v1484
    %v1711 = vunpack.c.l.s4 1983009808
    %v1712 = vunpack.c.0.s8 %v1711
    %v1713 = vlaneseq
    %v1714 = vshrl.u32 %v1713, 7
    %v1715 = vsub.s32 %v1712, %v1714
    %v1716 = vrot.slane %v1709, %v1715
    %v1717 = vcombine.low %v1487, %v1488
    %v1719 = vunpack.c.l.s4 1983009808
    %v1720 = vunpack.c.0.s8 %v1719
    %v1721 = vlaneseq
    %v1722 = vshrl.u32 %v1721, 7
    %v1723 = vsub.s32 %v1720, %v1722
    %v1724 = vrot.slane %v1717, %v1723
    %v1725 = vcombine.low %v1700, %v1708
    %v1726 = vcombine.high %v1700, %v1708
    %v1728 = vunpack.c.l.s4 1934713408
    %v1729 = vunpack.c.0.s8 %v1728
    %v1730 = vlaneseq
    %v1731 = vshrl.u32 %v1730, 7
    %v1732 = vsub.s32 %v1729, %v1731
    %v1733 = vrot.slane %v1725, %v1732
    %v1735 = vunpack.c.l.s4 1934713408
    %v1736 = vunpack.c.0.s8 %v1735
    %v1737 = vlaneseq
    %v1738 = vshrl.u32 %v1737, 7
    %v1739 = vsub.s32 %v1736, %v1738
    %v1740 = vrot.slane %v1726, %v1739
    %v1741 = vcombine.low %v1716, %v1724
    %v1742 = vcombine.high %v1716, %v1724
    %v1744 = vunpack.c.l.s4 1934713408
    %v1745 = vunpack.c.0.s8 %v1744
    %v1746 = vlaneseq
    %v1747 = vshrl.u32 %v1746, 7
    %v1748 = vsub.s32 %v1745, %v1747
    %v1749 = vrot.slane %v1741, %v1748
    %v1751 = vunpack.c.l.s4 1934713408
    %v1752 = vunpack.c.0.s8 %v1751
    %v1753 = vlaneseq
    %v1754 = vshrl.u32 %v1753, 7
    %v1755 = vsub.s32 %v1752, %v1754
    %v1756 = vrot.slane %v1742, %v1755
    %v1757 = vcombine.low %v1733, %v1749
    %v1758 = vcombine.high %v1733, %v1749
    %v1759 = vcombine.low %v1740, %v1756
    %v1760 = vcombine.high %v1740, %v1756
    %v1761 = vcombine.low %v1529, %v1536
    %v1763 = vunpack.c.l.s4 1983009808
    %v1764 = vunpack.c.0.s8 %v1763
    %v1765 = vlaneseq
    %v1766 = vshrl.u32 %v1765, 7
    %v1767 = vsub.s32 %v1764, %v1766
    %v1768 = vrot.slane %v1761, %v1767
    %v1769 = vcombine.low %v1553, %v1554
    %v1771 = vunpack.c.l.s4 1983009808
    %v1772 = vunpack.c.0.s8 %v1771
    %v1773 = vlaneseq
    %v1774 = vshrl.u32 %v1773, 7
    %v1775 = vsub.s32 %v1772, %v1774
    %v1776 = vrot.slane %v1769, %v1775
    %v1777 = vcombine.low %v1545, %v1552
    %v1779 = vunpack.c.l.s4 1983009808
    %v1780 = vunpack.c.0.s8 %v1779
    %v1781 = vlaneseq
    %v1782 = vshrl.u32 %v1781, 7
    %v1783 = vsub.s32 %v1780, %v1782
    %v1784 = vrot.slane %v1777, %v1783
    %v1785 = vcombine.low %v1555, %v1556
    %v1787 = vunpack.c.l.s4 1983009808
    %v1788 = vunpack.c.0.s8 %v1787
    %v1789 = vlaneseq
    %v1790 = vshrl.u32 %v1789, 7
    %v1791 = vsub.s32 %v1788, %v1790
    %v1792 = vrot.slane %v1785, %v1791
    %v1793 = vcombine.low %v1768, %v1776
    %v1794 = vcombine.high %v1768, %v1776
    %v1796 = vunpack.c.l.s4 1934713408
    %v1797 = vunpack.c.0.s8 %v1796
    %v1798 = vlaneseq
    %v1799 = vshrl.u32 %v1798, 7
    %v1800 = vsub.s32 %v1797, %v1799
    %v1801 = vrot.slane %v1793, %v1800
    %v1803 = vunpack.c.l.s4 1934713408
    %v1804 = vunpack.c.0.s8 %v1803
    %v1805 = vlaneseq
    %v1806 = vshrl.u32 %v1805, 7
    %v1807 = vsub.s32 %v1804, %v1806
    %v1808 = vrot.slane %v1794, %v1807
    %v1809 = vcombine.low %v1784, %v1792
    %v1810 = vcombine.high %v1784, %v1792
    %v1812 = vunpack.c.l.s4 1934713408
    %v1813 = vunpack.c.0.s8 %v1812
    %v1814 = vlaneseq
    %v1815 = vshrl.u32 %v1814, 7
    %v1816 = vsub.s32 %v1813, %v1815
    %v1817 = vrot.slane %v1809, %v1816
    %v1819 = vunpack.c.l.s4 1934713408
    %v1820 = vunpack.c.0.s8 %v1819
    %v1821 = vlaneseq
    %v1822 = vshrl.u32 %v1821, 7
    %v1823 = vsub.s32 %v1820, %v1822
    %v1824 = vrot.slane %v1810, %v1823
    %v1825 = vcombine.low %v1801, %v1817
    %v1826 = vcombine.high %v1801, %v1817
    %v1827 = vcombine.low %v1808, %v1824
    %v1828 = vcombine.high %v1808, %v1824
    %1833 = vrot.lane.b32.xlu0 %v1622, 8
    %v1834 = vpop.permute.xlu0 %1833
    %1835 = vrot.lane.b32.xlu0 %v1690, 8
    %v1836 = vpop.permute.xlu0 %1835
    %1837 = vrot.lane.b32.xlu0 %v1758, 8
    %v1838 = vpop.permute.xlu0 %1837
    %1839 = vrot.lane.b32.xlu0 %v1826, 8
    %v1840 = vpop.permute.xlu0 %1839
    %1849 = vrot.lane.b32.xlu0 %v1623, 16
    %v1850 = vpop.permute.xlu0 %1849
    %1851 = vrot.lane.b32.xlu0 %v1691, 16
    %v1852 = vpop.permute.xlu0 %1851
    %1853 = vrot.lane.b32.xlu0 %v1759, 16
    %v1854 = vpop.permute.xlu0 %1853
    %1855 = vrot.lane.b32.xlu0 %v1827, 16
    %v1856 = vpop.permute.xlu0 %1855
    %1865 = vrot.lane.b32.xlu0 %v1624, 24
    %v1866 = vpop.permute.xlu0 %1865
    %1867 = vrot.lane.b32.xlu0 %v1692, 24
    %v1868 = vpop.permute.xlu0 %1867
    %1869 = vrot.lane.b32.xlu0 %v1760, 24
    %v1870 = vpop.permute.xlu0 %1869
    %1871 = vrot.lane.b32.xlu0 %v1828, 24
    %v1872 = vpop.permute.xlu0 %1871
    %v1877 = vsel %vm457, %v1621, %v1834
    %v1878 = vsel %vm457, %v1689, %v1836
    %v1879 = vsel %vm457, %v1757, %v1838
    %v1880 = vsel %vm457, %v1825, %v1840
    %vm1881 = vcmask 130048
    %v1882 = vsel %vm1881, %v1877, %v1850
    %v1883 = vsel %vm1881, %v1878, %v1852
    %v1884 = vsel %vm1881, %v1879, %v1854
    %v1885 = vsel %vm1881, %v1880, %v1856
    %vm1886 = vcmask 195584
    %v1887 = vsel %vm1886, %v1882, %v1866
    %v1888 = vsel %vm1886, %v1883, %v1868
    %v1889 = vsel %vm1886, %v1884, %v1870
    %v1890 = vsel %vm1886, %v1885, %v1872
    %v1891 = vpack.c.bf16 %v1888, %v1887
    %v1892 = vpack.c.bf16 %v1890, %v1889
    %v1893 = vld [vmem:[%s6] sm:$0xf]
    %v1894 = vld [vmem:[%s6 + $0x4] sm:$0xf]
    %v1895 = vld [vmem:[%s6 + $0x8] sm:$0xf]
    %v1896 = vld [vmem:[%s6 + $0xc] sm:$0xf]
    %v1901 = vunpack.c.l.b16 %v1893
    %v1902 = vunpack.c.l.b16 %v1894
    %v1903 = vunpack.c.l.b16 %v1895
    %v1904 = vunpack.c.l.b16 %v1896
    %v1905 = vpack.c.b16 %v1902, %v1901
    %v1906 = vpack.c.b16 %v1904, %v1903
    %v1910 = vsel %vm64, %v1891, 0
    %v1913 = vsel %vm64, %v1892, 0
    %1915 = vmatprep.subr.bf16.mxu0 0
    %1916 = vmatpush1.bf16.msra.mxu0 0
    %1917 = vmatprep.subr.bf16.mxu0 0
    %1918 = vmatpush1.bf16.msra.mxu0 0
    %1919 = vmatprep.subr.bf16.mxu0 0
    %1920 = vmatpush1.bf16.msra.mxu0 0
    %1921 = vmatprep.subr.bf16.mxu0 0
    %1922 = vmatpush1.bf16.msra.mxu0 0
    %1923 = vmatprep.subr.bf16.mxu0 0
    %1924 = vmatpush1.bf16.msra.mxu0 0
    %1925 = vmatprep.subr.bf16.mxu0 0
    %1926 = vmatpush1.bf16.msra.mxu0 0
    %1927 = vmatprep.subr.bf16.mxu0 0
    %1928 = vmatpush1.bf16.msra.mxu0 %v1906
    %1929 = vmatprep.subr.bf16.mxu0 0
    %1930 = vmatpush1.bf16.msra.mxu0 %v1905
    %1931 = vmatprep.subr.bf16.mxu0 0
    %1932 = vmatpush2.bf16.msra.mxu0 0
    %1933 = vmatprep.subr.bf16.mxu0 0
    %1934 = vmatpush2.bf16.msra.mxu0 0
    %1935 = vmatprep.subr.bf16.mxu0 0
    %1936 = vmatpush2.bf16.msra.mxu0 0
    %1937 = vmatprep.subr.bf16.mxu0 0
    %1938 = vmatpush2.bf16.msra.mxu0 0
    %1939 = vmatprep.subr.bf16.mxu0 0
    %1940 = vmatpush2.bf16.msra.mxu0 0
    %1941 = vmatprep.subr.bf16.mxu0 0
    %1942 = vmatpush2.bf16.msra.mxu0 0
    %1943 = vmatprep.subr.bf16.mxu0 0
    %1944 = vmatpush2.bf16.msra.mxu0 0
    %1945 = vmatprep.subr.bf16.mxu0 0
    %1946 = vmatpush2.bf16.msra.mxu0 0
    %1947 = vmatprep.mubr.bf16.mxu0 0
    %1948 = vmatmul.mubr.bf16.gmra.mxu0 %v1910
    %v1949 = vpop.f32.mrf.mxu0
    %v1950 = vadd.f32 0.0, %v1949
    %v1951 = vpop.f32.mrf.mxu0
    %v1952 = vpop.f32.mrf.mxu0
    %v1953 = vadd.f32 0.0, %v1952
    %v1954 = vpop.f32.mrf.mxu0
    %1955 = vmatprep.mubr.bf16.mxu0 0
    %1956 = vmatmul.mubr.bf16.gmra.mxu0 %v1913
    %v1957 = vpop.f32.mrf.mxu0
    %v1958 = vadd.f32 0.0, %v1957
    %v1959 = vpop.f32.mrf.mxu0
    %v1960 = vpop.f32.mrf.mxu0
    %v1961 = vadd.f32 0.0, %v1960
    %v1962 = vpop.f32.mrf.mxu0
    %1963 = vdwg.mxu0
    %v1964 = vadd.f32 %v55, %v1950
    %v1965 = vadd.f32 %v56, %v1953
    %v1966 = vadd.f32 %v57, %v1958
    %v1967 = vadd.f32 %v58, %v1961
    %v1968 = vld [vmem:[%s7] sm:$0x1]
    %v1969 = vmul.f32 %v1964, %v1964
    %v1970 = vmul.f32 %v1965, %v1965
    %v1971 = vmul.f32 %v1966, %v1966
    %v1972 = vmul.f32 %v1967, %v1967
    %v1973 = vsel %vm64, %v1969, 0.0
    %1974 = vadd.xlane.f32.xlu0 %v1973
    %v1975 = vpop.xlane.xlu0 %1974
    %v1976 = vsel %vm64, %v1970, 0.0
    %1977 = vadd.xlane.f32.xlu0 %v1976
    %v1978 = vpop.xlane.xlu0 %1977
    %v1979 = vsel %vm64, %v1971, 0.0
    %1980 = vadd.xlane.f32.xlu0 %v1979
    %v1981 = vpop.xlane.xlu0 %1980
    %v1982 = vsel %vm64, %v1972, 0.0
    %1983 = vadd.xlane.f32.xlu0 %v1982
    %v1984 = vpop.xlane.xlu0 %1983
    %v1985 = vmul.f32 %v1975, %v77
    %v1986 = vmul.f32 %v1978, %v77
    %v1987 = vmul.f32 %v1981, %v77
    %v1988 = vmul.f32 %v1984, %v77
    %v1989 = vadd.f32 %v1985, 1e-06
    %v1990 = vadd.f32 %v1986, 1e-06
    %v1991 = vadd.f32 %v1987, 1e-06
    %v1992 = vadd.f32 %v1988, 1e-06
    %v1993 = vrsqrt.pop %v1989
    %v1994 = vrsqrt.pop %v1990
    %v1995 = vrsqrt.pop %v1991
    %v1996 = vrsqrt.pop %v1992
    %v1997 = vmul.f32 %v1964, %v1993
    %v1998 = vmul.f32 %v1965, %v1994
    %v1999 = vmul.f32 %v1966, %v1995
    %v2000 = vmul.f32 %v1967, %v1996
    %v2002 = vlaneseq
    %v2003 = vshrl.u32 %v2002, 7
    %v2004 = vsub.s32 0, %v2003
    %v2005 = vrot.slane %v1968, %v2004
    %v2007 = vmul.f32 %v1997, %v2005
    %v2008 = vmul.f32 %v1998, %v2005
    %v2009 = vmul.f32 %v1999, %v2005
    %v2010 = vmul.f32 %v2000, %v2005
    %v2011 = vpack.c.bf16 %v2008, %v2007
    %v2012 = vpack.c.bf16 %v2010, %v2009
    %v2013 = vld [vmem:[%s8] sm:$0xff]
    %v2014 = vld [vmem:[%s8 + $0x8] sm:$0xff]
    %v2015 = vld [vmem:[%s8 + $0x10] sm:$0xff]
    %v2016 = vld [vmem:[%s8 + $0x18] sm:$0xff]
    %v2021 = vunpack.c.l.b16 %v2013
    %v2022 = vunpack.c.h.b16 %v2013
    %v2023 = vunpack.c.l.b16 %v2014
    %v2024 = vunpack.c.h.b16 %v2014
    %v2025 = vunpack.c.l.b16 %v2015
    %v2026 = vunpack.c.h.b16 %v2015
    %v2027 = vunpack.c.l.b16 %v2016
    %v2028 = vunpack.c.h.b16 %v2016
    %v2029 = vpack.c.b16 %v2023, %v2021
    %v2030 = vpack.c.b16 %v2024, %v2022
    %v2031 = vpack.c.b16 %v2027, %v2025
    %v2032 = vpack.c.b16 %v2028, %v2026
    %v2038 = vsel %vm64, %v2011, 0
    %v2041 = vsel %vm64, %v2012, 0
    %2043 = vmatprep.subr.bf16.mxu0 0
    %2044 = vmatpush1.bf16.msra.mxu0 0
    %2045 = vmatprep.subr.bf16.mxu0 0
    %2046 = vmatpush1.bf16.msra.mxu0 0
    %2047 = vmatprep.subr.bf16.mxu0 0
    %2048 = vmatpush1.bf16.msra.mxu0 0
    %2049 = vmatprep.subr.bf16.mxu0 0
    %2050 = vmatpush1.bf16.msra.mxu0 0
    %2051 = vmatprep.subr.bf16.mxu0 0
    %2052 = vmatpush1.bf16.msra.mxu0 0
    %2053 = vmatprep.subr.bf16.mxu0 0
    %2054 = vmatpush1.bf16.msra.mxu0 0
    %2055 = vmatprep.subr.bf16.mxu0 %v2032
    %2056 = vmatpush1.bf16.msra.mxu0 %v2031
    %2057 = vmatprep.subr.bf16.mxu0 %v2030
    %2058 = vmatpush1.bf16.msra.mxu0 %v2029
    %2059 = vmatprep.subr.bf16.mxu0 0
    %2060 = vmatpush2.bf16.msra.mxu0 0
    %2061 = vmatprep.subr.bf16.mxu0 0
    %2062 = vmatpush2.bf16.msra.mxu0 0
    %2063 = vmatprep.subr.bf16.mxu0 0
    %2064 = vmatpush2.bf16.msra.mxu0 0
    %2065 = vmatprep.subr.bf16.mxu0 0
    %2066 = vmatpush2.bf16.msra.mxu0 0
    %2067 = vmatprep.subr.bf16.mxu0 0
    %2068 = vmatpush2.bf16.msra.mxu0 0
    %2069 = vmatprep.subr.bf16.mxu0 0
    %2070 = vmatpush2.bf16.msra.mxu0 0
    %2071 = vmatprep.subr.bf16.mxu0 0
    %2072 = vmatpush2.bf16.msra.mxu0 0
    %2073 = vmatprep.subr.bf16.mxu0 0
    %2074 = vmatpush2.bf16.msra.mxu0 0
    %2075 = vmatprep.mubr.bf16.mxu0 0
    %2076 = vmatmul.mubr.bf16.gmra.mxu0 %v2038
    %v2077 = vpop.f32.mrf.mxu0
    %v2078 = vadd.f32 0.0, %v2077
    %v2079 = vpop.f32.mrf.mxu0
    %v2080 = vadd.f32 0.0, %v2079
    %v2081 = vpop.f32.mrf.mxu0
    %v2082 = vadd.f32 0.0, %v2081
    %v2083 = vpop.f32.mrf.mxu0
    %v2084 = vadd.f32 0.0, %v2083
    %2085 = vmatprep.mubr.bf16.mxu0 0
    %2086 = vmatmul.mubr.bf16.gmra.mxu0 %v2041
    %v2087 = vpop.f32.mrf.mxu0
    %v2088 = vadd.f32 0.0, %v2087
    %v2089 = vpop.f32.mrf.mxu0
    %v2090 = vadd.f32 0.0, %v2089
    %v2091 = vpop.f32.mrf.mxu0
    %v2092 = vadd.f32 0.0, %v2091
    %v2093 = vpop.f32.mrf.mxu0
    %v2094 = vadd.f32 0.0, %v2093
    %2095 = vdwg.mxu0
    %v2096 = vxor.u32 %v2078, 2147483648
    %v2097 = vxor.u32 %v2082, 2147483648
    %v2098 = vxor.u32 %v2088, 2147483648
    %v2099 = vxor.u32 %v2092, 2147483648
    %v2100 = vmul.f32 %v2096, 1.442695
    %v2101 = vpow.pop %v2100
    %v2102 = vmul.f32 %v2097, 1.442695
    %v2103 = vpow.pop %v2102
    %v2104 = vmul.f32 %v2098, 1.442695
    %v2105 = vpow.pop %v2104
    %v2106 = vmul.f32 %v2099, 1.442695
    %v2107 = vpow.pop %v2106
    %v2108 = vadd.f32 %v2101, 1.0
    %v2109 = vadd.f32 %v2103, 1.0
    %v2110 = vadd.f32 %v2105, 1.0
    %v2111 = vadd.f32 %v2107, 1.0
    %v2112 = vrcp.pop %v2108
    %v2113 = vmul.f32 1.0, %v2112
    %v2114 = vrcp.pop %v2109
    %v2115 = vmul.f32 1.0, %v2114
    %v2116 = vrcp.pop %v2110
    %v2117 = vmul.f32 1.0, %v2116
    %v2118 = vrcp.pop %v2111
    %v2119 = vmul.f32 1.0, %v2118
    %v2120 = vmul.f32 %v2078, %v2113
    %v2121 = vmul.f32 %v2082, %v2115
    %v2122 = vmul.f32 %v2088, %v2117
    %v2123 = vmul.f32 %v2092, %v2119
    %v2124 = vmul.f32 %v2120, %v2080
    %v2125 = vmul.f32 %v2121, %v2084
    %v2126 = vmul.f32 %v2122, %v2090
    %v2127 = vmul.f32 %v2123, %v2094
    %v2128 = vpack.c.bf16 %v2125, %v2124
    %v2129 = vpack.c.bf16 %v2127, %v2126
    %v2130 = vld [vmem:[%s9] sm:$0xf]
    %v2131 = vld [vmem:[%s9 + $0x4] sm:$0xf]
    %v2132 = vld [vmem:[%s9 + $0x8] sm:$0xf]
    %v2133 = vld [vmem:[%s9 + $0xc] sm:$0xf]
    %v2134 = vld [vmem:[%s9 + $0x10] sm:$0xf]
    %v2135 = vld [vmem:[%s9 + $0x14] sm:$0xf]
    %v2136 = vld [vmem:[%s9 + $0x18] sm:$0xf]
    %v2137 = vld [vmem:[%s9 + $0x1c] sm:$0xf]
    %v2146 = vunpack.c.l.b16 %v2130
    %v2147 = vunpack.c.l.b16 %v2131
    %v2148 = vunpack.c.l.b16 %v2132
    %v2149 = vunpack.c.l.b16 %v2133
    %v2150 = vunpack.c.l.b16 %v2134
    %v2151 = vunpack.c.l.b16 %v2135
    %v2152 = vunpack.c.l.b16 %v2136
    %v2153 = vunpack.c.l.b16 %v2137
    %v2154 = vpack.c.b16 %v2147, %v2146
    %v2155 = vpack.c.b16 %v2149, %v2148
    %v2156 = vpack.c.b16 %v2151, %v2150
    %v2157 = vpack.c.b16 %v2153, %v2152
    %vm2162 = vcmask 523264
    %v2164 = vsel %vm2162, %v2128, 0
    %v2167 = vsel %vm2162, %v2129, 0
    %2169 = vmatprep.subr.bf16.mxu0 0
    %2170 = vmatpush1.bf16.msra.mxu0 0
    %2171 = vmatprep.subr.bf16.mxu0 0
    %2172 = vmatpush1.bf16.msra.mxu0 0
    %2173 = vmatprep.subr.bf16.mxu0 0
    %2174 = vmatpush1.bf16.msra.mxu0 0
    %2175 = vmatprep.subr.bf16.mxu0 0
    %2176 = vmatpush1.bf16.msra.mxu0 0
    %2177 = vmatprep.subr.bf16.mxu0 0
    %2178 = vmatpush1.bf16.msra.mxu0 %v2157
    %2179 = vmatprep.subr.bf16.mxu0 0
    %2180 = vmatpush1.bf16.msra.mxu0 %v2156
    %2181 = vmatprep.subr.bf16.mxu0 0
    %2182 = vmatpush1.bf16.msra.mxu0 %v2155
    %2183 = vmatprep.subr.bf16.mxu0 0
    %2184 = vmatpush1.bf16.msra.mxu0 %v2154
    %2185 = vmatprep.subr.bf16.mxu0 0
    %2186 = vmatpush2.bf16.msra.mxu0 0
    %2187 = vmatprep.subr.bf16.mxu0 0
    %2188 = vmatpush2.bf16.msra.mxu0 0
    %2189 = vmatprep.subr.bf16.mxu0 0
    %2190 = vmatpush2.bf16.msra.mxu0 0
    %2191 = vmatprep.subr.bf16.mxu0 0
    %2192 = vmatpush2.bf16.msra.mxu0 0
    %2193 = vmatprep.subr.bf16.mxu0 0
    %2194 = vmatpush2.bf16.msra.mxu0 0
    %2195 = vmatprep.subr.bf16.mxu0 0
    %2196 = vmatpush2.bf16.msra.mxu0 0
    %2197 = vmatprep.subr.bf16.mxu0 0
    %2198 = vmatpush2.bf16.msra.mxu0 0
    %2199 = vmatprep.subr.bf16.mxu0 0
    %2200 = vmatpush2.bf16.msra.mxu0 0
    %2201 = vmatprep.mubr.bf16.mxu0 0
    %2202 = vmatmul.mubr.bf16.gmra.mxu0 %v2164
    %v2203 = vpop.f32.mrf.mxu0
    %v2204 = vadd.f32 0.0, %v2203
    %v2205 = vpop.f32.mrf.mxu0
    %v2206 = vpop.f32.mrf.mxu0
    %v2207 = vadd.f32 0.0, %v2206
    %v2208 = vpop.f32.mrf.mxu0
    %2209 = vmatprep.mubr.bf16.mxu0 0
    %2210 = vmatmul.mubr.bf16.gmra.mxu0 %v2167
    %v2211 = vpop.f32.mrf.mxu0
    %v2212 = vadd.f32 0.0, %v2211
    %v2213 = vpop.f32.mrf.mxu0
    %v2214 = vpop.f32.mrf.mxu0
    %v2215 = vadd.f32 0.0, %v2214
    %v2216 = vpop.f32.mrf.mxu0
    %2217 = vdwg.mxu0
    %v2218 = vadd.f32 %v1964, %v2204
    %v2219 = vadd.f32 %v1965, %v2207
    %v2220 = vadd.f32 %v1966, %v2212
    %v2221 = vadd.f32 %v1967, %v2215
    %s2222 = scalar_lea.vmem %s4, 1
    %v2223 = vld [vmem:[%s2222] sm:$0x1]
    %v2224 = vmul.f32 %v2218, %v2218
    %v2225 = vmul.f32 %v2219, %v2219
    %v2226 = vmul.f32 %v2220, %v2220
    %v2227 = vmul.f32 %v2221, %v2221
    %v2228 = vsel %vm64, %v2224, 0.0
    %2229 = vadd.xlane.f32.xlu0 %v2228
    %v2230 = vpop.xlane.xlu0 %2229
    %v2231 = vsel %vm64, %v2225, 0.0
    %2232 = vadd.xlane.f32.xlu0 %v2231
    %v2233 = vpop.xlane.xlu0 %2232
    %v2234 = vsel %vm64, %v2226, 0.0
    %2235 = vadd.xlane.f32.xlu0 %v2234
    %v2236 = vpop.xlane.xlu0 %2235
    %v2237 = vsel %vm64, %v2227, 0.0
    %2238 = vadd.xlane.f32.xlu0 %v2237
    %v2239 = vpop.xlane.xlu0 %2238
    %v2240 = vmul.f32 %v2230, %v77
    %v2241 = vmul.f32 %v2233, %v77
    %v2242 = vmul.f32 %v2236, %v77
    %v2243 = vmul.f32 %v2239, %v77
    %v2244 = vadd.f32 %v2240, 1e-06
    %v2245 = vadd.f32 %v2241, 1e-06
    %v2246 = vadd.f32 %v2242, 1e-06
    %v2247 = vadd.f32 %v2243, 1e-06
    %v2248 = vrsqrt.pop %v2244
    %v2249 = vrsqrt.pop %v2245
    %v2250 = vrsqrt.pop %v2246
    %v2251 = vrsqrt.pop %v2247
    %v2252 = vmul.f32 %v2218, %v2248
    %v2253 = vmul.f32 %v2219, %v2249
    %v2254 = vmul.f32 %v2220, %v2250
    %v2255 = vmul.f32 %v2221, %v2251
    %v2257 = vlaneseq
    %v2258 = vshrl.u32 %v2257, 7
    %v2259 = vsub.s32 0, %v2258
    %v2260 = vrot.slane %v2223, %v2259
    %v2262 = vmul.f32 %v2252, %v2260
    %v2263 = vmul.f32 %v2253, %v2260
    %v2264 = vmul.f32 %v2254, %v2260
    %v2265 = vmul.f32 %v2255, %v2260
    %v2266 = vpack.c.bf16 %v2263, %v2262
    %v2267 = vpack.c.bf16 %v2265, %v2264
    %s2268 = scalar_lea.vmem %s5, 80
    %v2269 = vld [vmem:[%s2268] sm:$0xff]
    %v2270 = vld [vmem:[%s2268 + $0x8] sm:$0xff]
    %v2271 = vld [vmem:[%s2268 + $0x10] sm:$0xf]
    %v2272 = vld [vmem:[%s2268 + $0x14] sm:$0xff]
    %v2273 = vld [vmem:[%s2268 + $0x1c] sm:$0xff]
    %v2274 = vld [vmem:[%s2268 + $0x24] sm:$0xf]
    %v2275 = vld [vmem:[%s2268 + $0x28] sm:$0xff]
    %v2276 = vld [vmem:[%s2268 + $0x30] sm:$0xff]
    %v2277 = vld [vmem:[%s2268 + $0x38] sm:$0xf]
    %v2278 = vld [vmem:[%s2268 + $0x3c] sm:$0xff]
    %v2279 = vld [vmem:[%s2268 + $0x44] sm:$0xff]
    %v2280 = vld [vmem:[%s2268 + $0x4c] sm:$0xf]
    %v2293 = vunpack.c.l.b16 %v2269
    %v2294 = vunpack.c.h.b16 %v2269
    %v2295 = vunpack.c.l.b16 %v2270
    %v2296 = vunpack.c.h.b16 %v2270
    %v2297 = vunpack.c.l.b16 %v2271
    %v2298 = vunpack.c.l.b16 %v2272
    %v2299 = vunpack.c.h.b16 %v2272
    %v2300 = vunpack.c.l.b16 %v2273
    %v2301 = vunpack.c.h.b16 %v2273
    %v2302 = vunpack.c.l.b16 %v2274
    %v2303 = vunpack.c.l.b16 %v2275
    %v2304 = vunpack.c.h.b16 %v2275
    %v2305 = vunpack.c.l.b16 %v2276
    %v2306 = vunpack.c.h.b16 %v2276
    %v2307 = vunpack.c.l.b16 %v2277
    %v2308 = vunpack.c.l.b16 %v2278
    %v2309 = vunpack.c.h.b16 %v2278
    %v2310 = vunpack.c.l.b16 %v2279
    %v2311 = vunpack.c.h.b16 %v2279
    %v2312 = vunpack.c.l.b16 %v2280
    %v2313 = vpack.c.b16 %v2298, %v2293
    %v2314 = vpack.c.b16 %v2299, %v2294
    %v2315 = vpack.c.b16 %v2300, %v2295
    %v2316 = vpack.c.b16 %v2301, %v2296
    %v2317 = vpack.c.b16 %v2302, %v2297
    %v2318 = vpack.c.b16 %v2308, %v2303
    %v2319 = vpack.c.b16 %v2309, %v2304
    %v2320 = vpack.c.b16 %v2310, %v2305
    %v2321 = vpack.c.b16 %v2311, %v2306
    %v2322 = vpack.c.b16 %v2312, %v2307
    %v2334 = vsel %vm64, %v2266, 0
    %v2337 = vsel %vm64, %v2267, 0
    %2339 = vmatprep.subr.bf16.mxu0 0
    %2340 = vmatpush1.bf16.msra.mxu0 0
    %2341 = vmatprep.subr.bf16.mxu0 0
    %2342 = vmatpush1.bf16.msra.mxu0 0
    %2343 = vmatprep.subr.bf16.mxu0 0
    %2344 = vmatpush1.bf16.msra.mxu0 0
    %2345 = vmatprep.subr.bf16.mxu0 0
    %2346 = vmatpush1.bf16.msra.mxu0 0
    %2347 = vmatprep.subr.bf16.mxu0 0
    %2348 = vmatpush1.bf16.msra.mxu0 0
    %2349 = vmatprep.subr.bf16.mxu0 0
    %2350 = vmatpush1.bf16.msra.mxu0 0
    %2351 = vmatprep.subr.bf16.mxu0 %v2319
    %2352 = vmatpush1.bf16.msra.mxu0 %v2318
    %2353 = vmatprep.subr.bf16.mxu0 %v2314
    %2354 = vmatpush1.bf16.msra.mxu0 %v2313
    %2355 = vmatprep.subr.bf16.mxu0 0
    %2356 = vmatpush2.bf16.msra.mxu0 0
    %2357 = vmatprep.subr.bf16.mxu0 0
    %2358 = vmatpush2.bf16.msra.mxu0 0
    %2359 = vmatprep.subr.bf16.mxu0 0
    %2360 = vmatpush2.bf16.msra.mxu0 0
    %2361 = vmatprep.subr.bf16.mxu0 0
    %2362 = vmatpush2.bf16.msra.mxu0 0
    %2363 = vmatprep.subr.bf16.mxu0 0
    %2364 = vmatpush2.bf16.msra.mxu0 0
    %2365 = vmatprep.subr.bf16.mxu0 0
    %2366 = vmatpush2.bf16.msra.mxu0 0
    %2367 = vmatprep.subr.bf16.mxu0 0
    %2368 = vmatpush2.bf16.msra.mxu0 0
    %2369 = vmatprep.subr.bf16.mxu0 0
    %2370 = vmatpush2.bf16.msra.mxu0 0
    %2371 = vmatprep.mubr.bf16.mxu0 0
    %2372 = vmatmul.mubr.bf16.gmra.mxu0 %v2334
    %v2373 = vpop.f32.mrf.mxu0
    %v2374 = vadd.f32 0.0, %v2373
    %v2375 = vpop.f32.mrf.mxu0
    %v2376 = vadd.f32 0.0, %v2375
    %v2377 = vpop.f32.mrf.mxu0
    %v2378 = vadd.f32 0.0, %v2377
    %v2379 = vpop.f32.mrf.mxu0
    %v2380 = vadd.f32 0.0, %v2379
    %2381 = vmatprep.mubr.bf16.mxu0 0
    %2382 = vmatmul.mubr.bf16.gmra.mxu0 %v2337
    %v2383 = vpop.f32.mrf.mxu0
    %v2384 = vadd.f32 0.0, %v2383
    %v2385 = vpop.f32.mrf.mxu0
    %v2386 = vadd.f32 0.0, %v2385
    %v2387 = vpop.f32.mrf.mxu0
    %v2388 = vadd.f32 0.0, %v2387
    %v2389 = vpop.f32.mrf.mxu0
    %v2390 = vadd.f32 0.0, %v2389
    %2391 = vdwg.mxu0
    %2392 = vmatprep.subr.bf16.mxu0 0
    %2393 = vmatpush1.bf16.msra.mxu0 0
    %2394 = vmatprep.subr.bf16.mxu0 0
    %2395 = vmatpush1.bf16.msra.mxu0 0
    %2396 = vmatprep.subr.bf16.mxu0 0
    %2397 = vmatpush1.bf16.msra.mxu0 0
    %2398 = vmatprep.subr.bf16.mxu0 0
    %2399 = vmatpush1.bf16.msra.mxu0 0
    %2400 = vmatprep.subr.bf16.mxu0 0
    %2401 = vmatpush1.bf16.msra.mxu0 0
    %2402 = vmatprep.subr.bf16.mxu0 0
    %2403 = vmatpush1.bf16.msra.mxu0 0
    %2404 = vmatprep.subr.bf16.mxu0 %v2321
    %2405 = vmatpush1.bf16.msra.mxu0 %v2320
    %2406 = vmatprep.subr.bf16.mxu0 %v2316
    %2407 = vmatpush1.bf16.msra.mxu0 %v2315
    %2408 = vmatprep.subr.bf16.mxu0 0
    %2409 = vmatpush2.bf16.msra.mxu0 0
    %2410 = vmatprep.subr.bf16.mxu0 0
    %2411 = vmatpush2.bf16.msra.mxu0 0
    %2412 = vmatprep.subr.bf16.mxu0 0
    %2413 = vmatpush2.bf16.msra.mxu0 0
    %2414 = vmatprep.subr.bf16.mxu0 0
    %2415 = vmatpush2.bf16.msra.mxu0 0
    %2416 = vmatprep.subr.bf16.mxu0 0
    %2417 = vmatpush2.bf16.msra.mxu0 0
    %2418 = vmatprep.subr.bf16.mxu0 0
    %2419 = vmatpush2.bf16.msra.mxu0 0
    %2420 = vmatprep.subr.bf16.mxu0 0
    %2421 = vmatpush2.bf16.msra.mxu0 0
    %2422 = vmatprep.subr.bf16.mxu0 0
    %2423 = vmatpush2.bf16.msra.mxu0 0
    %2424 = vmatprep.mubr.bf16.mxu0 0
    %2425 = vmatmul.mubr.bf16.gmra.mxu0 %v2334
    %v2426 = vpop.f32.mrf.mxu0
    %v2427 = vadd.f32 0.0, %v2426
    %v2428 = vpop.f32.mrf.mxu0
    %v2429 = vadd.f32 0.0, %v2428
    %v2430 = vpop.f32.mrf.mxu0
    %v2431 = vadd.f32 0.0, %v2430
    %v2432 = vpop.f32.mrf.mxu0
    %v2433 = vadd.f32 0.0, %v2432
    %2434 = vmatprep.mubr.bf16.mxu0 0
    %2435 = vmatmul.mubr.bf16.gmra.mxu0 %v2337
    %v2436 = vpop.f32.mrf.mxu0
    %v2437 = vadd.f32 0.0, %v2436
    %v2438 = vpop.f32.mrf.mxu0
    %v2439 = vadd.f32 0.0, %v2438
    %v2440 = vpop.f32.mrf.mxu0
    %v2441 = vadd.f32 0.0, %v2440
    %v2442 = vpop.f32.mrf.mxu0
    %v2443 = vadd.f32 0.0, %v2442
    %2444 = vdwg.mxu0
    %2445 = vmatprep.subr.bf16.mxu0 0
    %2446 = vmatpush1.bf16.msra.mxu0 0
    %2447 = vmatprep.subr.bf16.mxu0 0
    %2448 = vmatpush1.bf16.msra.mxu0 0
    %2449 = vmatprep.subr.bf16.mxu0 0
    %2450 = vmatpush1.bf16.msra.mxu0 0
    %2451 = vmatprep.subr.bf16.mxu0 0
    %2452 = vmatpush1.bf16.msra.mxu0 0
    %2453 = vmatprep.subr.bf16.mxu0 0
    %2454 = vmatpush1.bf16.msra.mxu0 0
    %2455 = vmatprep.subr.bf16.mxu0 0
    %2456 = vmatpush1.bf16.msra.mxu0 0
    %2457 = vmatprep.subr.bf16.mxu0 0
    %2458 = vmatpush1.bf16.msra.mxu0 %v2322
    %2459 = vmatprep.subr.bf16.mxu0 0
    %2460 = vmatpush1.bf16.msra.mxu0 %v2317
    %2461 = vmatprep.subr.bf16.mxu0 0
    %2462 = vmatpush2.bf16.msra.mxu0 0
    %2463 = vmatprep.subr.bf16.mxu0 0
    %2464 = vmatpush2.bf16.msra.mxu0 0
    %2465 = vmatprep.subr.bf16.mxu0 0
    %2466 = vmatpush2.bf16.msra.mxu0 0
    %2467 = vmatprep.subr.bf16.mxu0 0
    %2468 = vmatpush2.bf16.msra.mxu0 0
    %2469 = vmatprep.subr.bf16.mxu0 0
    %2470 = vmatpush2.bf16.msra.mxu0 0
    %2471 = vmatprep.subr.bf16.mxu0 0
    %2472 = vmatpush2.bf16.msra.mxu0 0
    %2473 = vmatprep.subr.bf16.mxu0 0
    %2474 = vmatpush2.bf16.msra.mxu0 0
    %2475 = vmatprep.subr.bf16.mxu0 0
    %2476 = vmatpush2.bf16.msra.mxu0 0
    %2477 = vmatprep.mubr.bf16.mxu0 0
    %2478 = vmatmul.mubr.bf16.gmra.mxu0 %v2334
    %v2479 = vpop.f32.mrf.mxu0
    %v2480 = vadd.f32 0.0, %v2479
    %v2481 = vpop.f32.mrf.mxu0
    %v2482 = vpop.f32.mrf.mxu0
    %v2483 = vadd.f32 0.0, %v2482
    %v2484 = vpop.f32.mrf.mxu0
    %2485 = vmatprep.mubr.bf16.mxu0 0
    %2486 = vmatmul.mubr.bf16.gmra.mxu0 %v2337
    %v2487 = vpop.f32.mrf.mxu0
    %v2488 = vadd.f32 0.0, %v2487
    %v2489 = vpop.f32.mrf.mxu0
    %v2490 = vpop.f32.mrf.mxu0
    %v2491 = vadd.f32 0.0, %v2490
    %v2492 = vpop.f32.mrf.mxu0
    %2493 = vdwg.mxu0
    %v2494 = vmul.f32 %v2374, %v43
    %v2495 = vmul.f32 %v2378, %v44
    %v2496 = vmul.f32 %v2384, %v45
    %v2497 = vmul.f32 %v2388, %v46
    %v2498 = vmul.f32 %v2429, %v47
    %v2499 = vmul.f32 %v2433, %v48
    %v2500 = vmul.f32 %v2439, %v49
    %v2501 = vmul.f32 %v2443, %v50
    %v2502 = vadd.f32 %v2494, %v2498
    %v2503 = vadd.f32 %v2495, %v2499
    %v2504 = vadd.f32 %v2496, %v2500
    %v2505 = vadd.f32 %v2497, %v2501
    %v2506 = vmul.f32 %v2376, %v43
    %v2507 = vmul.f32 %v2380, %v44
    %v2508 = vmul.f32 %v2386, %v45
    %v2509 = vmul.f32 %v2390, %v46
    %v2510 = vmul.f32 %v2480, %v47
    %v2511 = vmul.f32 %v2483, %v48
    %v2512 = vmul.f32 %v2488, %v49
    %v2513 = vmul.f32 %v2491, %v50
    %v2514 = vadd.f32 %v2506, %v2510
    %v2515 = vadd.f32 %v2507, %v2511
    %v2516 = vadd.f32 %v2508, %v2512
    %v2517 = vadd.f32 %v2509, %v2513
    %v2518 = vpack.c.bf16 %v2503, %v2502
    %v2519 = vpack.c.bf16 %v2505, %v2504
    %2522 = vrot.lane.b32.xlu0 %v2518, 120
    %v2523 = vpop.permute.xlu0 %2522
    %2524 = vrot.lane.b32.xlu0 %v2519, 120
    %v2525 = vpop.permute.xlu0 %2524
    %2526 = vrot.lane.b32.xlu0 %v2518, 112
    %v2527 = vpop.permute.xlu0 %2526
    %2528 = vrot.lane.b32.xlu0 %v2519, 112
    %v2529 = vpop.permute.xlu0 %2528
    %2530 = vrot.lane.b32.xlu0 %v2518, 104
    %v2531 = vpop.permute.xlu0 %2530
    %2532 = vrot.lane.b32.xlu0 %v2519, 104
    %v2533 = vpop.permute.xlu0 %2532
    %v2534 = vpack.c.bf16 %v2515, %v2514
    %v2535 = vpack.c.bf16 %v2517, %v2516
    %2538 = vrot.lane.b32.xlu0 %v2534, 120
    %v2539 = vpop.permute.xlu0 %2538
    %2540 = vrot.lane.b32.xlu0 %v2535, 120
    %v2541 = vpop.permute.xlu0 %2540
    %2544 = vrot.lane.b32.xlu0 %v2534, 112
    %v2545 = vpop.permute.xlu0 %2544
    %2546 = vrot.lane.b32.xlu0 %v2535, 112
    %v2547 = vpop.permute.xlu0 %2546
    %2550 = vrot.lane.b32.xlu0 %v2534, 104
    %v2551 = vpop.permute.xlu0 %2550
    %2552 = vrot.lane.b32.xlu0 %v2535, 104
    %v2553 = vpop.permute.xlu0 %2552
    %2556 = vxpose.xlu0.c.b16.start [1/8] %v2534, 128
    %2557 = vxpose.xlu0.c.b16.cont [2/8] %v2535, 128
    %2558 = vxpose.xlu0.c.b16.cont [3/8] 0, 128
    %2559 = vxpose.xlu0.c.b16.cont [4/8] 0, 128
    %2560 = vxpose.xlu0.c.b16.cont [5/8] 0, 128
    %2561 = vxpose.xlu0.c.b16.cont [6/8] 0, 128
    %2562 = vxpose.xlu0.c.b16.cont [7/8] 0, 128
    %2563 = vxpose.xlu0.c.b16.end [8/8] 0, 128
    %v2564 = vpop.trf.xlu0
    %v2565 = vpop.trf.xlu0
    %v2566 = vpop.trf.xlu0
    %v2567 = vpop.trf.xlu0
    %v2568 = vpop.trf.xlu0
    %v2569 = vpop.trf.xlu0
    %v2570 = vpop.trf.xlu0
    %v2571 = vpop.trf.xlu0
    %2572 = vxpose.xlu0.c.b16.start [1/8] %v2539, 128
    %2573 = vxpose.xlu0.c.b16.cont [2/8] %v2541, 128
    %2574 = vxpose.xlu0.c.b16.cont [3/8] 0, 128
    %2575 = vxpose.xlu0.c.b16.cont [4/8] 0, 128
    %2576 = vxpose.xlu0.c.b16.cont [5/8] 0, 128
    %2577 = vxpose.xlu0.c.b16.cont [6/8] 0, 128
    %2578 = vxpose.xlu0.c.b16.cont [7/8] 0, 128
    %2579 = vxpose.xlu0.c.b16.end [8/8] 0, 128
    %v2580 = vpop.trf.xlu0
    %v2581 = vpop.trf.xlu0
    %v2582 = vpop.trf.xlu0
    %v2583 = vpop.trf.xlu0
    %v2584 = vpop.trf.xlu0
    %v2585 = vpop.trf.xlu0
    %v2586 = vpop.trf.xlu0
    %v2587 = vpop.trf.xlu0
    %2588 = vxpose.xlu0.c.b16.start [1/8] %v2545, 128
    %2589 = vxpose.xlu0.c.b16.cont [2/8] %v2547, 128
    %2590 = vxpose.xlu0.c.b16.cont [3/8] 0, 128
    %2591 = vxpose.xlu0.c.b16.cont [4/8] 0, 128
    %2592 = vxpose.xlu0.c.b16.cont [5/8] 0, 128
    %2593 = vxpose.xlu0.c.b16.cont [6/8] 0, 128
    %2594 = vxpose.xlu0.c.b16.cont [7/8] 0, 128
    %2595 = vxpose.xlu0.c.b16.end [8/8] 0, 128
    %v2596 = vpop.trf.xlu0
    %v2597 = vpop.trf.xlu0
    %v2598 = vpop.trf.xlu0
    %v2599 = vpop.trf.xlu0
    %v2600 = vpop.trf.xlu0
    %v2601 = vpop.trf.xlu0
    %v2602 = vpop.trf.xlu0
    %v2603 = vpop.trf.xlu0
    %2604 = vxpose.xlu0.c.b16.start [1/8] %v2551, 128
    %2605 = vxpose.xlu0.c.b16.cont [2/8] %v2553, 128
    %2606 = vxpose.xlu0.c.b16.cont [3/8] 0, 128
    %2607 = vxpose.xlu0.c.b16.cont [4/8] 0, 128
    %2608 = vxpose.xlu0.c.b16.cont [5/8] 0, 128
    %2609 = vxpose.xlu0.c.b16.cont [6/8] 0, 128
    %2610 = vxpose.xlu0.c.b16.cont [7/8] 0, 128
    %2611 = vxpose.xlu0.c.b16.end [8/8] 0, 128
    %v2612 = vpop.trf.xlu0
    %v2613 = vpop.trf.xlu0
    %v2614 = vpop.trf.xlu0
    %v2615 = vpop.trf.xlu0
    %v2616 = vpop.trf.xlu0
    %v2617 = vpop.trf.xlu0
    %v2618 = vpop.trf.xlu0
    %v2619 = vpop.trf.xlu0
    %v2621 = vsel %vm457, %v2518, 0
    %v2624 = vsel %vm457, %v2519, 0
    %v2627 = vsel %vm464, %v2564, 0
    %2629 = vmatprep.subr.bf16.mxu0 0
    %2630 = vmatpush1.bf16.msra.mxu0 0
    %2631 = vmatprep.subr.bf16.mxu0 0
    %2632 = vmatpush1.bf16.msra.mxu0 0
    %2633 = vmatprep.subr.bf16.mxu0 0
    %2634 = vmatpush1.bf16.msra.mxu0 0
    %2635 = vmatprep.subr.bf16.mxu0 0
    %2636 = vmatpush1.bf16.msra.mxu0 0
    %2637 = vmatprep.subr.bf16.mxu0 0
    %2638 = vmatpush1.bf16.msra.mxu0 0
    %2639 = vmatprep.subr.bf16.mxu0 0
    %2640 = vmatpush1.bf16.msra.mxu0 0
    %2641 = vmatprep.subr.bf16.mxu0 0
    %2642 = vmatpush1.bf16.msra.mxu0 0
    %2643 = vmatprep.subr.bf16.mxu0 0
    %2644 = vmatpush1.bf16.msra.mxu0 %v2627
    %2645 = vmatprep.subr.bf16.mxu0 0
    %2646 = vmatpush2.bf16.msra.mxu0 0
    %2647 = vmatprep.subr.bf16.mxu0 0
    %2648 = vmatpush2.bf16.msra.mxu0 0
    %2649 = vmatprep.subr.bf16.mxu0 0
    %2650 = vmatpush2.bf16.msra.mxu0 0
    %2651 = vmatprep.subr.bf16.mxu0 0
    %2652 = vmatpush2.bf16.msra.mxu0 0
    %2653 = vmatprep.subr.bf16.mxu0 0
    %2654 = vmatpush2.bf16.msra.mxu0 0
    %2655 = vmatprep.subr.bf16.mxu0 0
    %2656 = vmatpush2.bf16.msra.mxu0 0
    %2657 = vmatprep.subr.bf16.mxu0 0
    %2658 = vmatpush2.bf16.msra.mxu0 0
    %2659 = vmatprep.subr.bf16.mxu0 0
    %2660 = vmatpush2.bf16.msra.mxu0 0
    %2661 = vmatprep.mubr.bf16.mxu0 0
    %2662 = vmatmul.mubr.bf16.gmra.mxu0 %v2621
    %v2663 = vpop.f32.mrf.mxu0
    %v2664 = vadd.f32 %v51, %v2663
    %v2665 = vpop.f32.mrf.mxu0
    %v2666 = vpop.f32.mrf.mxu0
    %v2667 = vadd.f32 %v52, %v2666
    %v2668 = vpop.f32.mrf.mxu0
    %2669 = vmatprep.mubr.bf16.mxu0 0
    %2670 = vmatmul.mubr.bf16.gmra.mxu0 %v2624
    %v2671 = vpop.f32.mrf.mxu0
    %v2672 = vadd.f32 %v53, %v2671
    %v2673 = vpop.f32.mrf.mxu0
    %v2674 = vpop.f32.mrf.mxu0
    %v2675 = vadd.f32 %v54, %v2674
    %v2676 = vpop.f32.mrf.mxu0
    %2677 = vdwg.mxu0
    %v2679 = vsel %vm457, %v2523, 0
    %v2682 = vsel %vm457, %v2525, 0
    %v2685 = vsel %vm464, %v2580, 0
    %2687 = vmatprep.subr.bf16.mxu0 0
    %2688 = vmatpush1.bf16.msra.mxu0 0
    %2689 = vmatprep.subr.bf16.mxu0 0
    %2690 = vmatpush1.bf16.msra.mxu0 0
    %2691 = vmatprep.subr.bf16.mxu0 0
    %2692 = vmatpush1.bf16.msra.mxu0 0
    %2693 = vmatprep.subr.bf16.mxu0 0
    %2694 = vmatpush1.bf16.msra.mxu0 0
    %2695 = vmatprep.subr.bf16.mxu0 0
    %2696 = vmatpush1.bf16.msra.mxu0 0
    %2697 = vmatprep.subr.bf16.mxu0 0
    %2698 = vmatpush1.bf16.msra.mxu0 0
    %2699 = vmatprep.subr.bf16.mxu0 0
    %2700 = vmatpush1.bf16.msra.mxu0 0
    %2701 = vmatprep.subr.bf16.mxu0 0
    %2702 = vmatpush1.bf16.msra.mxu0 %v2685
    %2703 = vmatprep.subr.bf16.mxu0 0
    %2704 = vmatpush2.bf16.msra.mxu0 0
    %2705 = vmatprep.subr.bf16.mxu0 0
    %2706 = vmatpush2.bf16.msra.mxu0 0
    %2707 = vmatprep.subr.bf16.mxu0 0
    %2708 = vmatpush2.bf16.msra.mxu0 0
    %2709 = vmatprep.subr.bf16.mxu0 0
    %2710 = vmatpush2.bf16.msra.mxu0 0
    %2711 = vmatprep.subr.bf16.mxu0 0
    %2712 = vmatpush2.bf16.msra.mxu0 0
    %2713 = vmatprep.subr.bf16.mxu0 0
    %2714 = vmatpush2.bf16.msra.mxu0 0
    %2715 = vmatprep.subr.bf16.mxu0 0
    %2716 = vmatpush2.bf16.msra.mxu0 0
    %2717 = vmatprep.subr.bf16.mxu0 0
    %2718 = vmatpush2.bf16.msra.mxu0 0
    %2719 = vmatprep.mubr.bf16.mxu0 0
    %2720 = vmatmul.mubr.bf16.gmra.mxu0 %v2679
    %v2721 = vpop.f32.mrf.mxu0
    %v2722 = vadd.f32 %v51, %v2721
    %v2723 = vpop.f32.mrf.mxu0
    %v2724 = vpop.f32.mrf.mxu0
    %v2725 = vadd.f32 %v52, %v2724
    %v2726 = vpop.f32.mrf.mxu0
    %2727 = vmatprep.mubr.bf16.mxu0 0
    %2728 = vmatmul.mubr.bf16.gmra.mxu0 %v2682
    %v2729 = vpop.f32.mrf.mxu0
    %v2730 = vadd.f32 %v53, %v2729
    %v2731 = vpop.f32.mrf.mxu0
    %v2732 = vpop.f32.mrf.mxu0
    %v2733 = vadd.f32 %v54, %v2732
    %v2734 = vpop.f32.mrf.mxu0
    %2735 = vdwg.mxu0
    %v2737 = vsel %vm457, %v2527, 0
    %v2740 = vsel %vm457, %v2529, 0
    %v2743 = vsel %vm464, %v2596, 0
    %2745 = vmatprep.subr.bf16.mxu0 0
    %2746 = vmatpush1.bf16.msra.mxu0 0
    %2747 = vmatprep.subr.bf16.mxu0 0
    %2748 = vmatpush1.bf16.msra.mxu0 0
    %2749 = vmatprep.subr.bf16.mxu0 0
    %2750 = vmatpush1.bf16.msra.mxu0 0
    %2751 = vmatprep.subr.bf16.mxu0 0
    %2752 = vmatpush1.bf16.msra.mxu0 0
    %2753 = vmatprep.subr.bf16.mxu0 0
    %2754 = vmatpush1.bf16.msra.mxu0 0
    %2755 = vmatprep.subr.bf16.mxu0 0
    %2756 = vmatpush1.bf16.msra.mxu0 0
    %2757 = vmatprep.subr.bf16.mxu0 0
    %2758 = vmatpush1.bf16.msra.mxu0 0
    %2759 = vmatprep.subr.bf16.mxu0 0
    %2760 = vmatpush1.bf16.msra.mxu0 %v2743
    %2761 = vmatprep.subr.bf16.mxu0 0
    %2762 = vmatpush2.bf16.msra.mxu0 0
    %2763 = vmatprep.subr.bf16.mxu0 0
    %2764 = vmatpush2.bf16.msra.mxu0 0
    %2765 = vmatprep.subr.bf16.mxu0 0
    %2766 = vmatpush2.bf16.msra.mxu0 0
    %2767 = vmatprep.subr.bf16.mxu0 0
    %2768 = vmatpush2.bf16.msra.mxu0 0
    %2769 = vmatprep.subr.bf16.mxu0 0
    %2770 = vmatpush2.bf16.msra.mxu0 0
    %2771 = vmatprep.subr.bf16.mxu0 0
    %2772 = vmatpush2.bf16.msra.mxu0 0
    %2773 = vmatprep.subr.bf16.mxu0 0
    %2774 = vmatpush2.bf16.msra.mxu0 0
    %2775 = vmatprep.subr.bf16.mxu0 0
    %2776 = vmatpush2.bf16.msra.mxu0 0
    %2777 = vmatprep.mubr.bf16.mxu0 0
    %2778 = vmatmul.mubr.bf16.gmra.mxu0 %v2737
    %v2779 = vpop.f32.mrf.mxu0
    %v2780 = vadd.f32 %v51, %v2779
    %v2781 = vpop.f32.mrf.mxu0
    %v2782 = vpop.f32.mrf.mxu0
    %v2783 = vadd.f32 %v52, %v2782
    %v2784 = vpop.f32.mrf.mxu0
    %2785 = vmatprep.mubr.bf16.mxu0 0
    %2786 = vmatmul.mubr.bf16.gmra.mxu0 %v2740
    %v2787 = vpop.f32.mrf.mxu0
    %v2788 = vadd.f32 %v53, %v2787
    %v2789 = vpop.f32.mrf.mxu0
    %v2790 = vpop.f32.mrf.mxu0
    %v2791 = vadd.f32 %v54, %v2790
    %v2792 = vpop.f32.mrf.mxu0
    %2793 = vdwg.mxu0
    %v2795 = vsel %vm457, %v2531, 0
    %v2798 = vsel %vm457, %v2533, 0
    %v2801 = vsel %vm464, %v2612, 0
    %2803 = vmatprep.subr.bf16.mxu0 0
    %2804 = vmatpush1.bf16.msra.mxu0 0
    %2805 = vmatprep.subr.bf16.mxu0 0
    %2806 = vmatpush1.bf16.msra.mxu0 0
    %2807 = vmatprep.subr.bf16.mxu0 0
    %2808 = vmatpush1.bf16.msra.mxu0 0
    %2809 = vmatprep.subr.bf16.mxu0 0
    %2810 = vmatpush1.bf16.msra.mxu0 0
    %2811 = vmatprep.subr.bf16.mxu0 0
    %2812 = vmatpush1.bf16.msra.mxu0 0
    %2813 = vmatprep.subr.bf16.mxu0 0
    %2814 = vmatpush1.bf16.msra.mxu0 0
    %2815 = vmatprep.subr.bf16.mxu0 0
    %2816 = vmatpush1.bf16.msra.mxu0 0
    %2817 = vmatprep.subr.bf16.mxu0 0
    %2818 = vmatpush1.bf16.msra.mxu0 %v2801
    %2819 = vmatprep.subr.bf16.mxu0 0
    %2820 = vmatpush2.bf16.msra.mxu0 0
    %2821 = vmatprep.subr.bf16.mxu0 0
    %2822 = vmatpush2.bf16.msra.mxu0 0
    %2823 = vmatprep.subr.bf16.mxu0 0
    %2824 = vmatpush2.bf16.msra.mxu0 0
    %2825 = vmatprep.subr.bf16.mxu0 0
    %2826 = vmatpush2.bf16.msra.mxu0 0
    %2827 = vmatprep.subr.bf16.mxu0 0
    %2828 = vmatpush2.bf16.msra.mxu0 0
    %2829 = vmatprep.subr.bf16.mxu0 0
    %2830 = vmatpush2.bf16.msra.mxu0 0
    %2831 = vmatprep.subr.bf16.mxu0 0
    %2832 = vmatpush2.bf16.msra.mxu0 0
    %2833 = vmatprep.subr.bf16.mxu0 0
    %2834 = vmatpush2.bf16.msra.mxu0 0
    %2835 = vmatprep.mubr.bf16.mxu0 0
    %2836 = vmatmul.mubr.bf16.gmra.mxu0 %v2795
    %v2837 = vpop.f32.mrf.mxu0
    %v2838 = vadd.f32 %v51, %v2837
    %v2839 = vpop.f32.mrf.mxu0
    %v2840 = vpop.f32.mrf.mxu0
    %v2841 = vadd.f32 %v52, %v2840
    %v2842 = vpop.f32.mrf.mxu0
    %2843 = vmatprep.mubr.bf16.mxu0 0
    %2844 = vmatmul.mubr.bf16.gmra.mxu0 %v2798
    %v2845 = vpop.f32.mrf.mxu0
    %v2846 = vadd.f32 %v53, %v2845
    %v2847 = vpop.f32.mrf.mxu0
    %v2848 = vpop.f32.mrf.mxu0
    %v2849 = vadd.f32 %v54, %v2848
    %v2850 = vpop.f32.mrf.mxu0
    %2851 = vdwg.mxu0
    %v2852 = vsel %vm64, %v2664, -inf
    %2853 = vmax.xlane.f32.xlu0 %v2852
    %v2854 = vpop.xlane.xlu0 %2853
    %v2855 = vsel %vm64, %v2667, -inf
    %2856 = vmax.xlane.f32.xlu0 %v2855
    %v2857 = vpop.xlane.xlu0 %2856
    %v2858 = vsel %vm64, %v2672, -inf
    %2859 = vmax.xlane.f32.xlu0 %v2858
    %v2860 = vpop.xlane.xlu0 %2859
    %v2861 = vsel %vm64, %v2675, -inf
    %2862 = vmax.xlane.f32.xlu0 %v2861
    %v2863 = vpop.xlane.xlu0 %2862
    %v2864 = vsel %vm64, %v2722, -inf
    %2865 = vmax.xlane.f32.xlu0 %v2864
    %v2866 = vpop.xlane.xlu0 %2865
    %v2867 = vsel %vm64, %v2725, -inf
    %2868 = vmax.xlane.f32.xlu0 %v2867
    %v2869 = vpop.xlane.xlu0 %2868
    %v2870 = vsel %vm64, %v2730, -inf
    %2871 = vmax.xlane.f32.xlu0 %v2870
    %v2872 = vpop.xlane.xlu0 %2871
    %v2873 = vsel %vm64, %v2733, -inf
    %2874 = vmax.xlane.f32.xlu0 %v2873
    %v2875 = vpop.xlane.xlu0 %2874
    %v2876 = vsel %vm64, %v2780, -inf
    %2877 = vmax.xlane.f32.xlu0 %v2876
    %v2878 = vpop.xlane.xlu0 %2877
    %v2879 = vsel %vm64, %v2783, -inf
    %2880 = vmax.xlane.f32.xlu0 %v2879
    %v2881 = vpop.xlane.xlu0 %2880
    %v2882 = vsel %vm64, %v2788, -inf
    %2883 = vmax.xlane.f32.xlu0 %v2882
    %v2884 = vpop.xlane.xlu0 %2883
    %v2885 = vsel %vm64, %v2791, -inf
    %2886 = vmax.xlane.f32.xlu0 %v2885
    %v2887 = vpop.xlane.xlu0 %2886
    %v2888 = vsel %vm64, %v2838, -inf
    %2889 = vmax.xlane.f32.xlu0 %v2888
    %v2890 = vpop.xlane.xlu0 %2889
    %v2891 = vsel %vm64, %v2841, -inf
    %2892 = vmax.xlane.f32.xlu0 %v2891
    %v2893 = vpop.xlane.xlu0 %2892
    %v2894 = vsel %vm64, %v2846, -inf
    %2895 = vmax.xlane.f32.xlu0 %v2894
    %v2896 = vpop.xlane.xlu0 %2895
    %v2897 = vsel %vm64, %v2849, -inf
    %2898 = vmax.xlane.f32.xlu0 %v2897
    %v2899 = vpop.xlane.xlu0 %2898
    %v2900 = vsub.f32 %v2664, %v2854
    %v2901 = vsub.f32 %v2667, %v2857
    %v2902 = vsub.f32 %v2672, %v2860
    %v2903 = vsub.f32 %v2675, %v2863
    %v2904 = vsub.f32 %v2722, %v2866
    %v2905 = vsub.f32 %v2725, %v2869
    %v2906 = vsub.f32 %v2730, %v2872
    %v2907 = vsub.f32 %v2733, %v2875
    %v2908 = vsub.f32 %v2780, %v2878
    %v2909 = vsub.f32 %v2783, %v2881
    %v2910 = vsub.f32 %v2788, %v2884
    %v2911 = vsub.f32 %v2791, %v2887
    %v2912 = vsub.f32 %v2838, %v2890
    %v2913 = vsub.f32 %v2841, %v2893
    %v2914 = vsub.f32 %v2846, %v2896
    %v2915 = vsub.f32 %v2849, %v2899
    %v2916 = vmul.f32 %v2900, 1.442695
    %v2917 = vpow.pop %v2916
    %v2918 = vmul.f32 %v2901, 1.442695
    %v2919 = vpow.pop %v2918
    %v2920 = vmul.f32 %v2902, 1.442695
    %v2921 = vpow.pop %v2920
    %v2922 = vmul.f32 %v2903, 1.442695
    %v2923 = vpow.pop %v2922
    %v2924 = vmul.f32 %v2904, 1.442695
    %v2925 = vpow.pop %v2924
    %v2926 = vmul.f32 %v2905, 1.442695
    %v2927 = vpow.pop %v2926
    %v2928 = vmul.f32 %v2906, 1.442695
    %v2929 = vpow.pop %v2928
    %v2930 = vmul.f32 %v2907, 1.442695
    %v2931 = vpow.pop %v2930
    %v2932 = vmul.f32 %v2908, 1.442695
    %v2933 = vpow.pop %v2932
    %v2934 = vmul.f32 %v2909, 1.442695
    %v2935 = vpow.pop %v2934
    %v2936 = vmul.f32 %v2910, 1.442695
    %v2937 = vpow.pop %v2936
    %v2938 = vmul.f32 %v2911, 1.442695
    %v2939 = vpow.pop %v2938
    %v2940 = vmul.f32 %v2912, 1.442695
    %v2941 = vpow.pop %v2940
    %v2942 = vmul.f32 %v2913, 1.442695
    %v2943 = vpow.pop %v2942
    %v2944 = vmul.f32 %v2914, 1.442695
    %v2945 = vpow.pop %v2944
    %v2946 = vmul.f32 %v2915, 1.442695
    %v2947 = vpow.pop %v2946
    %v2948 = vsel %vm64, %v2917, 0.0
    %2949 = vadd.xlane.f32.xlu0 %v2948
    %v2950 = vpop.xlane.xlu0 %2949
    %v2951 = vsel %vm64, %v2919, 0.0
    %2952 = vadd.xlane.f32.xlu0 %v2951
    %v2953 = vpop.xlane.xlu0 %2952
    %v2954 = vsel %vm64, %v2921, 0.0
    %2955 = vadd.xlane.f32.xlu0 %v2954
    %v2956 = vpop.xlane.xlu0 %2955
    %v2957 = vsel %vm64, %v2923, 0.0
    %2958 = vadd.xlane.f32.xlu0 %v2957
    %v2959 = vpop.xlane.xlu0 %2958
    %v2960 = vsel %vm64, %v2925, 0.0
    %2961 = vadd.xlane.f32.xlu0 %v2960
    %v2962 = vpop.xlane.xlu0 %2961
    %v2963 = vsel %vm64, %v2927, 0.0
    %2964 = vadd.xlane.f32.xlu0 %v2963
    %v2965 = vpop.xlane.xlu0 %2964
    %v2966 = vsel %vm64, %v2929, 0.0
    %2967 = vadd.xlane.f32.xlu0 %v2966
    %v2968 = vpop.xlane.xlu0 %2967
    %v2969 = vsel %vm64, %v2931, 0.0
    %2970 = vadd.xlane.f32.xlu0 %v2969
    %v2971 = vpop.xlane.xlu0 %2970
    %v2972 = vsel %vm64, %v2933, 0.0
    %2973 = vadd.xlane.f32.xlu0 %v2972
    %v2974 = vpop.xlane.xlu0 %2973
    %v2975 = vsel %vm64, %v2935, 0.0
    %2976 = vadd.xlane.f32.xlu0 %v2975
    %v2977 = vpop.xlane.xlu0 %2976
    %v2978 = vsel %vm64, %v2937, 0.0
    %2979 = vadd.xlane.f32.xlu0 %v2978
    %v2980 = vpop.xlane.xlu0 %2979
    %v2981 = vsel %vm64, %v2939, 0.0
    %2982 = vadd.xlane.f32.xlu0 %v2981
    %v2983 = vpop.xlane.xlu0 %2982
    %v2984 = vsel %vm64, %v2941, 0.0
    %2985 = vadd.xlane.f32.xlu0 %v2984
    %v2986 = vpop.xlane.xlu0 %2985
    %v2987 = vsel %vm64, %v2943, 0.0
    %2988 = vadd.xlane.f32.xlu0 %v2987
    %v2989 = vpop.xlane.xlu0 %2988
    %v2990 = vsel %vm64, %v2945, 0.0
    %2991 = vadd.xlane.f32.xlu0 %v2990
    %v2992 = vpop.xlane.xlu0 %2991
    %v2993 = vsel %vm64, %v2947, 0.0
    %2994 = vadd.xlane.f32.xlu0 %v2993
    %v2995 = vpop.xlane.xlu0 %2994
    %v2996 = vrcp.pop %v2950
    %v2997 = vrcp.pop %v2953
    %v2998 = vrcp.pop %v2956
    %v2999 = vrcp.pop %v2959
    %v3000 = vrcp.pop %v2962
    %v3001 = vrcp.pop %v2965
    %v3002 = vrcp.pop %v2968
    %v3003 = vrcp.pop %v2971
    %v3004 = vrcp.pop %v2974
    %v3005 = vrcp.pop %v2977
    %v3006 = vrcp.pop %v2980
    %v3007 = vrcp.pop %v2983
    %v3008 = vrcp.pop %v2986
    %v3009 = vrcp.pop %v2989
    %v3010 = vrcp.pop %v2992
    %v3011 = vrcp.pop %v2995
    %v3012 = vmul.f32 %v2917, %v2996
    %v3013 = vmul.f32 %v2919, %v2997
    %v3014 = vmul.f32 %v2921, %v2998
    %v3015 = vmul.f32 %v2923, %v2999
    %v3016 = vmul.f32 %v2925, %v3000
    %v3017 = vmul.f32 %v2927, %v3001
    %v3018 = vmul.f32 %v2929, %v3002
    %v3019 = vmul.f32 %v2931, %v3003
    %v3020 = vmul.f32 %v2933, %v3004
    %v3021 = vmul.f32 %v2935, %v3005
    %v3022 = vmul.f32 %v2937, %v3006
    %v3023 = vmul.f32 %v2939, %v3007
    %v3024 = vmul.f32 %v2941, %v3008
    %v3025 = vmul.f32 %v2943, %v3009
    %v3026 = vmul.f32 %v2945, %v3010
    %v3027 = vmul.f32 %v2947, %v3011
    %v3028 = vpack.c.bf16 %v3013, %v3012
    %v3029 = vpack.c.bf16 %v3015, %v3014
    %v3030 = vpack.c.bf16 %v3017, %v3016
    %v3031 = vpack.c.bf16 %v3019, %v3018
    %v3032 = vpack.c.bf16 %v3021, %v3020
    %v3033 = vpack.c.bf16 %v3023, %v3022
    %v3034 = vpack.c.bf16 %v3025, %v3024
    %v3035 = vpack.c.bf16 %v3027, %v3026
    %v3036 = vpack.c.bf16 %v2431, %v2427
    %v3037 = vpack.c.bf16 %v2441, %v2437
    %3040 = vrot.lane.b32.xlu0 %v3036, 120
    %v3041 = vpop.permute.xlu0 %3040
    %3042 = vrot.lane.b32.xlu0 %v3037, 120
    %v3043 = vpop.permute.xlu0 %3042
    %3046 = vrot.lane.b32.xlu0 %v3036, 112
    %v3047 = vpop.permute.xlu0 %3046
    %3048 = vrot.lane.b32.xlu0 %v3037, 112
    %v3049 = vpop.permute.xlu0 %3048
    %3052 = vrot.lane.b32.xlu0 %v3036, 104
    %v3053 = vpop.permute.xlu0 %3052
    %3054 = vrot.lane.b32.xlu0 %v3037, 104
    %v3055 = vpop.permute.xlu0 %3054
    %3058 = vxpose.xlu0.c.b16.start [1/8] %v3036, 128
    %3059 = vxpose.xlu0.c.b16.cont [2/8] %v3037, 128
    %3060 = vxpose.xlu0.c.b16.cont [3/8] 0, 128
    %3061 = vxpose.xlu0.c.b16.cont [4/8] 0, 128
    %3062 = vxpose.xlu0.c.b16.cont [5/8] 0, 128
    %3063 = vxpose.xlu0.c.b16.cont [6/8] 0, 128
    %3064 = vxpose.xlu0.c.b16.cont [7/8] 0, 128
    %3065 = vxpose.xlu0.c.b16.end [8/8] 0, 128
    %v3066 = vpop.trf.xlu0
    %v3067 = vpop.trf.xlu0
    %v3068 = vpop.trf.xlu0
    %v3069 = vpop.trf.xlu0
    %v3070 = vpop.trf.xlu0
    %v3071 = vpop.trf.xlu0
    %v3072 = vpop.trf.xlu0
    %v3073 = vpop.trf.xlu0
    %3074 = vxpose.xlu0.c.b16.start [1/8] %v3041, 128
    %3075 = vxpose.xlu0.c.b16.cont [2/8] %v3043, 128
    %3076 = vxpose.xlu0.c.b16.cont [3/8] 0, 128
    %3077 = vxpose.xlu0.c.b16.cont [4/8] 0, 128
    %3078 = vxpose.xlu0.c.b16.cont [5/8] 0, 128
    %3079 = vxpose.xlu0.c.b16.cont [6/8] 0, 128
    %3080 = vxpose.xlu0.c.b16.cont [7/8] 0, 128
    %3081 = vxpose.xlu0.c.b16.end [8/8] 0, 128
    %v3082 = vpop.trf.xlu0
    %v3083 = vpop.trf.xlu0
    %v3084 = vpop.trf.xlu0
    %v3085 = vpop.trf.xlu0
    %v3086 = vpop.trf.xlu0
    %v3087 = vpop.trf.xlu0
    %v3088 = vpop.trf.xlu0
    %v3089 = vpop.trf.xlu0
    %3090 = vxpose.xlu0.c.b16.start [1/8] %v3047, 128
    %3091 = vxpose.xlu0.c.b16.cont [2/8] %v3049, 128
    %3092 = vxpose.xlu0.c.b16.cont [3/8] 0, 128
    %3093 = vxpose.xlu0.c.b16.cont [4/8] 0, 128
    %3094 = vxpose.xlu0.c.b16.cont [5/8] 0, 128
    %3095 = vxpose.xlu0.c.b16.cont [6/8] 0, 128
    %3096 = vxpose.xlu0.c.b16.cont [7/8] 0, 128
    %3097 = vxpose.xlu0.c.b16.end [8/8] 0, 128
    %v3098 = vpop.trf.xlu0
    %v3099 = vpop.trf.xlu0
    %v3100 = vpop.trf.xlu0
    %v3101 = vpop.trf.xlu0
    %v3102 = vpop.trf.xlu0
    %v3103 = vpop.trf.xlu0
    %v3104 = vpop.trf.xlu0
    %v3105 = vpop.trf.xlu0
    %3106 = vxpose.xlu0.c.b16.start [1/8] %v3053, 128
    %3107 = vxpose.xlu0.c.b16.cont [2/8] %v3055, 128
    %3108 = vxpose.xlu0.c.b16.cont [3/8] 0, 128
    %3109 = vxpose.xlu0.c.b16.cont [4/8] 0, 128
    %3110 = vxpose.xlu0.c.b16.cont [5/8] 0, 128
    %3111 = vxpose.xlu0.c.b16.cont [6/8] 0, 128
    %3112 = vxpose.xlu0.c.b16.cont [7/8] 0, 128
    %3113 = vxpose.xlu0.c.b16.end [8/8] 0, 128
    %v3114 = vpop.trf.xlu0
    %v3115 = vpop.trf.xlu0
    %v3116 = vpop.trf.xlu0
    %v3117 = vpop.trf.xlu0
    %v3118 = vpop.trf.xlu0
    %v3119 = vpop.trf.xlu0
    %v3120 = vpop.trf.xlu0
    %v3121 = vpop.trf.xlu0
    %v3123 = vsel %vm64, %v3066, 0
    %v3126 = vsel %vm64, %v3028, 0
    %v3129 = vsel %vm64, %v3029, 0
    %3131 = vmatprep.subr.bf16.mxu0 0
    %3132 = vmatpush1.bf16.xpose.msra.mxu0 0
    %3133 = vmatprep.subr.bf16.mxu0 0
    %3134 = vmatpush1.bf16.xpose.msra.mxu0 0
    %3135 = vmatprep.subr.bf16.mxu0 0
    %3136 = vmatpush1.bf16.xpose.msra.mxu0 0
    %3137 = vmatprep.subr.bf16.mxu0 0
    %3138 = vmatpush1.bf16.xpose.msra.mxu0 0
    %3139 = vmatprep.subr.bf16.mxu0 0
    %3140 = vmatpush1.bf16.xpose.msra.mxu0 0
    %3141 = vmatprep.subr.bf16.mxu0 0
    %3142 = vmatpush1.bf16.xpose.msra.mxu0 0
    %3143 = vmatprep.subr.bf16.mxu0 0
    %3144 = vmatpush1.bf16.xpose.msra.mxu0 %v3129
    %3145 = vmatprep.subr.bf16.mxu0 0
    %3146 = vmatpush1.bf16.xpose.msra.mxu0 %v3126
    %3147 = vmatprep.subr.bf16.mxu0 0
    %3148 = vmatpush2.bf16.xpose.msra.mxu0 0
    %3149 = vmatprep.subr.bf16.mxu0 0
    %3150 = vmatpush2.bf16.xpose.msra.mxu0 0
    %3151 = vmatprep.subr.bf16.mxu0 0
    %3152 = vmatpush2.bf16.xpose.msra.mxu0 0
    %3153 = vmatprep.subr.bf16.mxu0 0
    %3154 = vmatpush2.bf16.xpose.msra.mxu0 0
    %3155 = vmatprep.subr.bf16.mxu0 0
    %3156 = vmatpush2.bf16.xpose.msra.mxu0 0
    %3157 = vmatprep.subr.bf16.mxu0 0
    %3158 = vmatpush2.bf16.xpose.msra.mxu0 0
    %3159 = vmatprep.subr.bf16.mxu0 0
    %3160 = vmatpush2.bf16.xpose.msra.mxu0 0
    %3161 = vmatprep.subr.bf16.mxu0 0
    %3162 = vmatpush2.bf16.xpose.msra.mxu0 0
    %3163 = vmatprep.mubr.bf16.mxu0 0
    %3164 = vmatmul.mubr.bf16.gmra.mxu0 %v3123
    %v3165 = vpop.f32.mrf.mxu0
    %v3166 = vadd.f32 0.0, %v3165
    %v3167 = vpop.f32.mrf.mxu0
    %v3168 = vpop.f32.mrf.mxu0
    %v3169 = vpop.f32.mrf.mxu0
    %3170 = vdwg.mxu0
    %v3172 = vsel %vm64, %v3082, 0
    %v3175 = vsel %vm64, %v3030, 0
    %v3178 = vsel %vm64, %v3031, 0
    %3180 = vmatprep.subr.bf16.mxu0 0
    %3181 = vmatpush1.bf16.xpose.msra.mxu0 0
    %3182 = vmatprep.subr.bf16.mxu0 0
    %3183 = vmatpush1.bf16.xpose.msra.mxu0 0
    %3184 = vmatprep.subr.bf16.mxu0 0
    %3185 = vmatpush1.bf16.xpose.msra.mxu0 0
    %3186 = vmatprep.subr.bf16.mxu0 0
    %3187 = vmatpush1.bf16.xpose.msra.mxu0 0
    %3188 = vmatprep.subr.bf16.mxu0 0
    %3189 = vmatpush1.bf16.xpose.msra.mxu0 0
    %3190 = vmatprep.subr.bf16.mxu0 0
    %3191 = vmatpush1.bf16.xpose.msra.mxu0 0
    %3192 = vmatprep.subr.bf16.mxu0 0
    %3193 = vmatpush1.bf16.xpose.msra.mxu0 %v3178
    %3194 = vmatprep.subr.bf16.mxu0 0
    %3195 = vmatpush1.bf16.xpose.msra.mxu0 %v3175
    %3196 = vmatprep.subr.bf16.mxu0 0
    %3197 = vmatpush2.bf16.xpose.msra.mxu0 0
    %3198 = vmatprep.subr.bf16.mxu0 0
    %3199 = vmatpush2.bf16.xpose.msra.mxu0 0
    %3200 = vmatprep.subr.bf16.mxu0 0
    %3201 = vmatpush2.bf16.xpose.msra.mxu0 0
    %3202 = vmatprep.subr.bf16.mxu0 0
    %3203 = vmatpush2.bf16.xpose.msra.mxu0 0
    %3204 = vmatprep.subr.bf16.mxu0 0
    %3205 = vmatpush2.bf16.xpose.msra.mxu0 0
    %3206 = vmatprep.subr.bf16.mxu0 0
    %3207 = vmatpush2.bf16.xpose.msra.mxu0 0
    %3208 = vmatprep.subr.bf16.mxu0 0
    %3209 = vmatpush2.bf16.xpose.msra.mxu0 0
    %3210 = vmatprep.subr.bf16.mxu0 0
    %3211 = vmatpush2.bf16.xpose.msra.mxu0 0
    %3212 = vmatprep.mubr.bf16.mxu0 0
    %3213 = vmatmul.mubr.bf16.gmra.mxu0 %v3172
    %v3214 = vpop.f32.mrf.mxu0
    %v3215 = vadd.f32 0.0, %v3214
    %v3216 = vpop.f32.mrf.mxu0
    %v3217 = vpop.f32.mrf.mxu0
    %v3218 = vpop.f32.mrf.mxu0
    %3219 = vdwg.mxu0
    %v3221 = vsel %vm64, %v3098, 0
    %v3224 = vsel %vm64, %v3032, 0
    %v3227 = vsel %vm64, %v3033, 0
    %3229 = vmatprep.subr.bf16.mxu0 0
    %3230 = vmatpush1.bf16.xpose.msra.mxu0 0
    %3231 = vmatprep.subr.bf16.mxu0 0
    %3232 = vmatpush1.bf16.xpose.msra.mxu0 0
    %3233 = vmatprep.subr.bf16.mxu0 0
    %3234 = vmatpush1.bf16.xpose.msra.mxu0 0
    %3235 = vmatprep.subr.bf16.mxu0 0
    %3236 = vmatpush1.bf16.xpose.msra.mxu0 0
    %3237 = vmatprep.subr.bf16.mxu0 0
    %3238 = vmatpush1.bf16.xpose.msra.mxu0 0
    %3239 = vmatprep.subr.bf16.mxu0 0
    %3240 = vmatpush1.bf16.xpose.msra.mxu0 0
    %3241 = vmatprep.subr.bf16.mxu0 0
    %3242 = vmatpush1.bf16.xpose.msra.mxu0 %v3227
    %3243 = vmatprep.subr.bf16.mxu0 0
    %3244 = vmatpush1.bf16.xpose.msra.mxu0 %v3224
    %3245 = vmatprep.subr.bf16.mxu0 0
    %3246 = vmatpush2.bf16.xpose.msra.mxu0 0
    %3247 = vmatprep.subr.bf16.mxu0 0
    %3248 = vmatpush2.bf16.xpose.msra.mxu0 0
    %3249 = vmatprep.subr.bf16.mxu0 0
    %3250 = vmatpush2.bf16.xpose.msra.mxu0 0
    %3251 = vmatprep.subr.bf16.mxu0 0
    %3252 = vmatpush2.bf16.xpose.msra.mxu0 0
    %3253 = vmatprep.subr.bf16.mxu0 0
    %3254 = vmatpush2.bf16.xpose.msra.mxu0 0
    %3255 = vmatprep.subr.bf16.mxu0 0
    %3256 = vmatpush2.bf16.xpose.msra.mxu0 0
    %3257 = vmatprep.subr.bf16.mxu0 0
    %3258 = vmatpush2.bf16.xpose.msra.mxu0 0
    %3259 = vmatprep.subr.bf16.mxu0 0
    %3260 = vmatpush2.bf16.xpose.msra.mxu0 0
    %3261 = vmatprep.mubr.bf16.mxu0 0
    %3262 = vmatmul.mubr.bf16.gmra.mxu0 %v3221
    %v3263 = vpop.f32.mrf.mxu0
    %v3264 = vadd.f32 0.0, %v3263
    %v3265 = vpop.f32.mrf.mxu0
    %v3266 = vpop.f32.mrf.mxu0
    %v3267 = vpop.f32.mrf.mxu0
    %3268 = vdwg.mxu0
    %v3270 = vsel %vm64, %v3114, 0
    %v3273 = vsel %vm64, %v3034, 0
    %v3276 = vsel %vm64, %v3035, 0
    %3278 = vmatprep.subr.bf16.mxu0 0
    %3279 = vmatpush1.bf16.xpose.msra.mxu0 0
    %3280 = vmatprep.subr.bf16.mxu0 0
    %3281 = vmatpush1.bf16.xpose.msra.mxu0 0
    %3282 = vmatprep.subr.bf16.mxu0 0
    %3283 = vmatpush1.bf16.xpose.msra.mxu0 0
    %3284 = vmatprep.subr.bf16.mxu0 0
    %3285 = vmatpush1.bf16.xpose.msra.mxu0 0
    %3286 = vmatprep.subr.bf16.mxu0 0
    %3287 = vmatpush1.bf16.xpose.msra.mxu0 0
    %3288 = vmatprep.subr.bf16.mxu0 0
    %3289 = vmatpush1.bf16.xpose.msra.mxu0 0
    %3290 = vmatprep.subr.bf16.mxu0 0
    %3291 = vmatpush1.bf16.xpose.msra.mxu0 %v3276
    %3292 = vmatprep.subr.bf16.mxu0 0
    %3293 = vmatpush1.bf16.xpose.msra.mxu0 %v3273
    %3294 = vmatprep.subr.bf16.mxu0 0
    %3295 = vmatpush2.bf16.xpose.msra.mxu0 0
    %3296 = vmatprep.subr.bf16.mxu0 0
    %3297 = vmatpush2.bf16.xpose.msra.mxu0 0
    %3298 = vmatprep.subr.bf16.mxu0 0
    %3299 = vmatpush2.bf16.xpose.msra.mxu0 0
    %3300 = vmatprep.subr.bf16.mxu0 0
    %3301 = vmatpush2.bf16.xpose.msra.mxu0 0
    %3302 = vmatprep.subr.bf16.mxu0 0
    %3303 = vmatpush2.bf16.xpose.msra.mxu0 0
    %3304 = vmatprep.subr.bf16.mxu0 0
    %3305 = vmatpush2.bf16.xpose.msra.mxu0 0
    %3306 = vmatprep.subr.bf16.mxu0 0
    %3307 = vmatpush2.bf16.xpose.msra.mxu0 0
    %3308 = vmatprep.subr.bf16.mxu0 0
    %3309 = vmatpush2.bf16.xpose.msra.mxu0 0
    %3310 = vmatprep.mubr.bf16.mxu0 0
    %3311 = vmatmul.mubr.bf16.gmra.mxu0 %v3270
    %v3312 = vpop.f32.mrf.mxu0
    %v3313 = vadd.f32 0.0, %v3312
    %v3314 = vpop.f32.mrf.mxu0
    %v3315 = vpop.f32.mrf.mxu0
    %v3316 = vpop.f32.mrf.mxu0
    %3317 = vdwg.mxu0
    %3318 = vxpose.xlu0.b32.start [1/16] %v3166, 128
    %3319 = vxpose.xlu0.b32.cont [2/16] 0.0, 128
    %3320 = vxpose.xlu0.b32.cont [3/16] 0.0, 128
    %3321 = vxpose.xlu0.b32.cont [4/16] 0.0, 128
    %3322 = vxpose.xlu0.b32.cont [5/16] 0.0, 128
    %3323 = vxpose.xlu0.b32.cont [6/16] 0.0, 128
    %3324 = vxpose.xlu0.b32.cont [7/16] 0.0, 128
    %3325 = vxpose.xlu0.b32.cont [8/16] 0.0, 128
    %3326 = vxpose.xlu0.b32.cont [9/16] 0.0, 128
    %3327 = vxpose.xlu0.b32.cont [10/16] 0.0, 128
    %3328 = vxpose.xlu0.b32.cont [11/16] 0.0, 128
    %3329 = vxpose.xlu0.b32.cont [12/16] 0.0, 128
    %3330 = vxpose.xlu0.b32.cont [13/16] 0.0, 128
    %3331 = vxpose.xlu0.b32.cont [14/16] 0.0, 128
    %3332 = vxpose.xlu0.b32.cont [15/16] 0.0, 128
    %3333 = vxpose.xlu0.b32.end [16/16] 0.0, 128
    %v3334 = vpop.trf.xlu0
    %v3335 = vpop.trf.xlu0
    %v3336 = vpop.trf.xlu0
    %v3337 = vpop.trf.xlu0
    %v3338 = vpop.trf.xlu0
    %v3339 = vpop.trf.xlu0
    %v3340 = vpop.trf.xlu0
    %v3341 = vpop.trf.xlu0
    %v3342 = vpop.trf.xlu0
    %v3343 = vpop.trf.xlu0
    %v3344 = vpop.trf.xlu0
    %v3345 = vpop.trf.xlu0
    %v3346 = vpop.trf.xlu0
    %v3347 = vpop.trf.xlu0
    %v3348 = vpop.trf.xlu0
    %v3349 = vpop.trf.xlu0
    %3350 = vxpose.xlu0.b32.start [1/16] %v3215, 128
    %3351 = vxpose.xlu0.b32.cont [2/16] 0.0, 128
    %3352 = vxpose.xlu0.b32.cont [3/16] 0.0, 128
    %3353 = vxpose.xlu0.b32.cont [4/16] 0.0, 128
    %3354 = vxpose.xlu0.b32.cont [5/16] 0.0, 128
    %3355 = vxpose.xlu0.b32.cont [6/16] 0.0, 128
    %3356 = vxpose.xlu0.b32.cont [7/16] 0.0, 128
    %3357 = vxpose.xlu0.b32.cont [8/16] 0.0, 128
    %3358 = vxpose.xlu0.b32.cont [9/16] 0.0, 128
    %3359 = vxpose.xlu0.b32.cont [10/16] 0.0, 128
    %3360 = vxpose.xlu0.b32.cont [11/16] 0.0, 128
    %3361 = vxpose.xlu0.b32.cont [12/16] 0.0, 128
    %3362 = vxpose.xlu0.b32.cont [13/16] 0.0, 128
    %3363 = vxpose.xlu0.b32.cont [14/16] 0.0, 128
    %3364 = vxpose.xlu0.b32.cont [15/16] 0.0, 128
    %3365 = vxpose.xlu0.b32.end [16/16] 0.0, 128
    %v3366 = vpop.trf.xlu0
    %v3367 = vpop.trf.xlu0
    %v3368 = vpop.trf.xlu0
    %v3369 = vpop.trf.xlu0
    %v3370 = vpop.trf.xlu0
    %v3371 = vpop.trf.xlu0
    %v3372 = vpop.trf.xlu0
    %v3373 = vpop.trf.xlu0
    %v3374 = vpop.trf.xlu0
    %v3375 = vpop.trf.xlu0
    %v3376 = vpop.trf.xlu0
    %v3377 = vpop.trf.xlu0
    %v3378 = vpop.trf.xlu0
    %v3379 = vpop.trf.xlu0
    %v3380 = vpop.trf.xlu0
    %v3381 = vpop.trf.xlu0
    %3382 = vxpose.xlu0.b32.start [1/16] %v3264, 128
    %3383 = vxpose.xlu0.b32.cont [2/16] 0.0, 128
    %3384 = vxpose.xlu0.b32.cont [3/16] 0.0, 128
    %3385 = vxpose.xlu0.b32.cont [4/16] 0.0, 128
    %3386 = vxpose.xlu0.b32.cont [5/16] 0.0, 128
    %3387 = vxpose.xlu0.b32.cont [6/16] 0.0, 128
    %3388 = vxpose.xlu0.b32.cont [7/16] 0.0, 128
    %3389 = vxpose.xlu0.b32.cont [8/16] 0.0, 128
    %3390 = vxpose.xlu0.b32.cont [9/16] 0.0, 128
    %3391 = vxpose.xlu0.b32.cont [10/16] 0.0, 128
    %3392 = vxpose.xlu0.b32.cont [11/16] 0.0, 128
    %3393 = vxpose.xlu0.b32.cont [12/16] 0.0, 128
    %3394 = vxpose.xlu0.b32.cont [13/16] 0.0, 128
    %3395 = vxpose.xlu0.b32.cont [14/16] 0.0, 128
    %3396 = vxpose.xlu0.b32.cont [15/16] 0.0, 128
    %3397 = vxpose.xlu0.b32.end [16/16] 0.0, 128
    %v3398 = vpop.trf.xlu0
    %v3399 = vpop.trf.xlu0
    %v3400 = vpop.trf.xlu0
    %v3401 = vpop.trf.xlu0
    %v3402 = vpop.trf.xlu0
    %v3403 = vpop.trf.xlu0
    %v3404 = vpop.trf.xlu0
    %v3405 = vpop.trf.xlu0
    %v3406 = vpop.trf.xlu0
    %v3407 = vpop.trf.xlu0
    %v3408 = vpop.trf.xlu0
    %v3409 = vpop.trf.xlu0
    %v3410 = vpop.trf.xlu0
    %v3411 = vpop.trf.xlu0
    %v3412 = vpop.trf.xlu0
    %v3413 = vpop.trf.xlu0
    %3414 = vxpose.xlu0.b32.start [1/16] %v3313, 128
    %3415 = vxpose.xlu0.b32.cont [2/16] 0.0, 128
    %3416 = vxpose.xlu0.b32.cont [3/16] 0.0, 128
    %3417 = vxpose.xlu0.b32.cont [4/16] 0.0, 128
    %3418 = vxpose.xlu0.b32.cont [5/16] 0.0, 128
    %3419 = vxpose.xlu0.b32.cont [6/16] 0.0, 128
    %3420 = vxpose.xlu0.b32.cont [7/16] 0.0, 128
    %3421 = vxpose.xlu0.b32.cont [8/16] 0.0, 128
    %3422 = vxpose.xlu0.b32.cont [9/16] 0.0, 128
    %3423 = vxpose.xlu0.b32.cont [10/16] 0.0, 128
    %3424 = vxpose.xlu0.b32.cont [11/16] 0.0, 128
    %3425 = vxpose.xlu0.b32.cont [12/16] 0.0, 128
    %3426 = vxpose.xlu0.b32.cont [13/16] 0.0, 128
    %3427 = vxpose.xlu0.b32.cont [14/16] 0.0, 128
    %3428 = vxpose.xlu0.b32.cont [15/16] 0.0, 128
    %3429 = vxpose.xlu0.b32.end [16/16] 0.0, 128
    %v3430 = vpop.trf.xlu0
    %v3431 = vpop.trf.xlu0
    %v3432 = vpop.trf.xlu0
    %v3433 = vpop.trf.xlu0
    %v3434 = vpop.trf.xlu0
    %v3435 = vpop.trf.xlu0
    %v3436 = vpop.trf.xlu0
    %v3437 = vpop.trf.xlu0
    %v3438 = vpop.trf.xlu0
    %v3439 = vpop.trf.xlu0
    %v3440 = vpop.trf.xlu0
    %v3441 = vpop.trf.xlu0
    %v3442 = vpop.trf.xlu0
    %v3443 = vpop.trf.xlu0
    %v3444 = vpop.trf.xlu0
    %v3445 = vpop.trf.xlu0
    %v3446 = vcombine.low %v3334, %v3398
    %v3447 = vcombine.high %v3334, %v3398
    %v3449 = vunpack.c.l.s4 1983009808
    %v3450 = vunpack.c.0.s8 %v3449
    %v3451 = vlaneseq
    %v3452 = vshrl.u32 %v3451, 7
    %v3453 = vsub.s32 %v3450, %v3452
    %v3454 = vrot.slane %v3446, %v3453
    %v3456 = vunpack.c.l.s4 1983009808
    %v3457 = vunpack.c.0.s8 %v3456
    %v3458 = vlaneseq
    %v3459 = vshrl.u32 %v3458, 7
    %v3460 = vsub.s32 %v3457, %v3459
    %v3461 = vrot.slane %v3447, %v3460
    %v3462 = vcombine.low %v3366, %v3430
    %v3463 = vcombine.high %v3366, %v3430
    %v3465 = vunpack.c.l.s4 1983009808
    %v3466 = vunpack.c.0.s8 %v3465
    %v3467 = vlaneseq
    %v3468 = vshrl.u32 %v3467, 7
    %v3469 = vsub.s32 %v3466, %v3468
    %v3470 = vrot.slane %v3462, %v3469
    %v3472 = vunpack.c.l.s4 1983009808
    %v3473 = vunpack.c.0.s8 %v3472
    %v3474 = vlaneseq
    %v3475 = vshrl.u32 %v3474, 7
    %v3476 = vsub.s32 %v3473, %v3475
    %v3477 = vrot.slane %v3463, %v3476
    %v3478 = vcombine.low %v3454, %v3470
    %v3479 = vcombine.high %v3454, %v3470
    %v3481 = vunpack.c.l.s4 1934713408
    %v3482 = vunpack.c.0.s8 %v3481
    %v3483 = vlaneseq
    %v3484 = vshrl.u32 %v3483, 7
    %v3485 = vsub.s32 %v3482, %v3484
    %v3486 = vrot.slane %v3478, %v3485
    %v3488 = vunpack.c.l.s4 1934713408
    %v3489 = vunpack.c.0.s8 %v3488
    %v3490 = vlaneseq
    %v3491 = vshrl.u32 %v3490, 7
    %v3492 = vsub.s32 %v3489, %v3491
    %v3493 = vrot.slane %v3479, %v3492
    %v3494 = vcombine.low %v3461, %v3477
    %v3495 = vcombine.high %v3461, %v3477
    %v3497 = vunpack.c.l.s4 1934713408
    %v3498 = vunpack.c.0.s8 %v3497
    %v3499 = vlaneseq
    %v3500 = vshrl.u32 %v3499, 7
    %v3501 = vsub.s32 %v3498, %v3500
    %v3502 = vrot.slane %v3494, %v3501
    %v3504 = vunpack.c.l.s4 1934713408
    %v3505 = vunpack.c.0.s8 %v3504
    %v3506 = vlaneseq
    %v3507 = vshrl.u32 %v3506, 7
    %v3508 = vsub.s32 %v3505, %v3507
    %v3509 = vrot.slane %v3495, %v3508
    %v3510 = vcombine.high %v3486, 0.0
    %v3511 = vcombine.high %v3493, 0.0
    %v3512 = vcombine.high %v3502, 0.0
    %v3513 = vcombine.high %v3509, 0.0
    %v3514 = vcombine.low %v3335, %v3399
    %v3515 = vcombine.high %v3335, %v3399
    %v3517 = vunpack.c.l.s4 1983009808
    %v3518 = vunpack.c.0.s8 %v3517
    %v3519 = vlaneseq
    %v3520 = vshrl.u32 %v3519, 7
    %v3521 = vsub.s32 %v3518, %v3520
    %v3522 = vrot.slane %v3514, %v3521
    %v3524 = vunpack.c.l.s4 1983009808
    %v3525 = vunpack.c.0.s8 %v3524
    %v3526 = vlaneseq
    %v3527 = vshrl.u32 %v3526, 7
    %v3528 = vsub.s32 %v3525, %v3527
    %v3529 = vrot.slane %v3515, %v3528
    %v3530 = vcombine.low %v3367, %v3431
    %v3531 = vcombine.high %v3367, %v3431
    %v3533 = vunpack.c.l.s4 1983009808
    %v3534 = vunpack.c.0.s8 %v3533
    %v3535 = vlaneseq
    %v3536 = vshrl.u32 %v3535, 7
    %v3537 = vsub.s32 %v3534, %v3536
    %v3538 = vrot.slane %v3530, %v3537
    %v3540 = vunpack.c.l.s4 1983009808
    %v3541 = vunpack.c.0.s8 %v3540
    %v3542 = vlaneseq
    %v3543 = vshrl.u32 %v3542, 7
    %v3544 = vsub.s32 %v3541, %v3543
    %v3545 = vrot.slane %v3531, %v3544
    %v3546 = vcombine.low %v3522, %v3538
    %v3547 = vcombine.high %v3522, %v3538
    %v3549 = vunpack.c.l.s4 1934713408
    %v3550 = vunpack.c.0.s8 %v3549
    %v3551 = vlaneseq
    %v3552 = vshrl.u32 %v3551, 7
    %v3553 = vsub.s32 %v3550, %v3552
    %v3554 = vrot.slane %v3546, %v3553
    %v3556 = vunpack.c.l.s4 1934713408
    %v3557 = vunpack.c.0.s8 %v3556
    %v3558 = vlaneseq
    %v3559 = vshrl.u32 %v3558, 7
    %v3560 = vsub.s32 %v3557, %v3559
    %v3561 = vrot.slane %v3547, %v3560
    %v3562 = vcombine.low %v3529, %v3545
    %v3563 = vcombine.high %v3529, %v3545
    %v3565 = vunpack.c.l.s4 1934713408
    %v3566 = vunpack.c.0.s8 %v3565
    %v3567 = vlaneseq
    %v3568 = vshrl.u32 %v3567, 7
    %v3569 = vsub.s32 %v3566, %v3568
    %v3570 = vrot.slane %v3562, %v3569
    %v3572 = vunpack.c.l.s4 1934713408
    %v3573 = vunpack.c.0.s8 %v3572
    %v3574 = vlaneseq
    %v3575 = vshrl.u32 %v3574, 7
    %v3576 = vsub.s32 %v3573, %v3575
    %v3577 = vrot.slane %v3563, %v3576
    %v3578 = vcombine.high %v3554, 0.0
    %v3579 = vcombine.high %v3561, 0.0
    %v3580 = vcombine.high %v3570, 0.0
    %v3581 = vcombine.high %v3577, 0.0
    %v3582 = vcombine.low %v3336, %v3400
    %v3583 = vcombine.high %v3336, %v3400
    %v3585 = vunpack.c.l.s4 1983009808
    %v3586 = vunpack.c.0.s8 %v3585
    %v3587 = vlaneseq
    %v3588 = vshrl.u32 %v3587, 7
    %v3589 = vsub.s32 %v3586, %v3588
    %v3590 = vrot.slane %v3582, %v3589
    %v3592 = vunpack.c.l.s4 1983009808
    %v3593 = vunpack.c.0.s8 %v3592
    %v3594 = vlaneseq
    %v3595 = vshrl.u32 %v3594, 7
    %v3596 = vsub.s32 %v3593, %v3595
    %v3597 = vrot.slane %v3583, %v3596
    %v3598 = vcombine.low %v3368, %v3432
    %v3599 = vcombine.high %v3368, %v3432
    %v3601 = vunpack.c.l.s4 1983009808
    %v3602 = vunpack.c.0.s8 %v3601
    %v3603 = vlaneseq
    %v3604 = vshrl.u32 %v3603, 7
    %v3605 = vsub.s32 %v3602, %v3604
    %v3606 = vrot.slane %v3598, %v3605
    %v3608 = vunpack.c.l.s4 1983009808
    %v3609 = vunpack.c.0.s8 %v3608
    %v3610 = vlaneseq
    %v3611 = vshrl.u32 %v3610, 7
    %v3612 = vsub.s32 %v3609, %v3611
    %v3613 = vrot.slane %v3599, %v3612
    %v3614 = vcombine.low %v3590, %v3606
    %v3615 = vcombine.high %v3590, %v3606
    %v3617 = vunpack.c.l.s4 1934713408
    %v3618 = vunpack.c.0.s8 %v3617
    %v3619 = vlaneseq
    %v3620 = vshrl.u32 %v3619, 7
    %v3621 = vsub.s32 %v3618, %v3620
    %v3622 = vrot.slane %v3614, %v3621
    %v3624 = vunpack.c.l.s4 1934713408
    %v3625 = vunpack.c.0.s8 %v3624
    %v3626 = vlaneseq
    %v3627 = vshrl.u32 %v3626, 7
    %v3628 = vsub.s32 %v3625, %v3627
    %v3629 = vrot.slane %v3615, %v3628
    %v3630 = vcombine.low %v3597, %v3613
    %v3631 = vcombine.high %v3597, %v3613
    %v3633 = vunpack.c.l.s4 1934713408
    %v3634 = vunpack.c.0.s8 %v3633
    %v3635 = vlaneseq
    %v3636 = vshrl.u32 %v3635, 7
    %v3637 = vsub.s32 %v3634, %v3636
    %v3638 = vrot.slane %v3630, %v3637
    %v3640 = vunpack.c.l.s4 1934713408
    %v3641 = vunpack.c.0.s8 %v3640
    %v3642 = vlaneseq
    %v3643 = vshrl.u32 %v3642, 7
    %v3644 = vsub.s32 %v3641, %v3643
    %v3645 = vrot.slane %v3631, %v3644
    %v3646 = vcombine.high %v3622, 0.0
    %v3647 = vcombine.high %v3629, 0.0
    %v3648 = vcombine.high %v3638, 0.0
    %v3649 = vcombine.high %v3645, 0.0
    %v3650 = vcombine.low %v3337, %v3401
    %v3651 = vcombine.high %v3337, %v3401
    %v3653 = vunpack.c.l.s4 1983009808
    %v3654 = vunpack.c.0.s8 %v3653
    %v3655 = vlaneseq
    %v3656 = vshrl.u32 %v3655, 7
    %v3657 = vsub.s32 %v3654, %v3656
    %v3658 = vrot.slane %v3650, %v3657
    %v3660 = vunpack.c.l.s4 1983009808
    %v3661 = vunpack.c.0.s8 %v3660
    %v3662 = vlaneseq
    %v3663 = vshrl.u32 %v3662, 7
    %v3664 = vsub.s32 %v3661, %v3663
    %v3665 = vrot.slane %v3651, %v3664
    %v3666 = vcombine.low %v3369, %v3433
    %v3667 = vcombine.high %v3369, %v3433
    %v3669 = vunpack.c.l.s4 1983009808
    %v3670 = vunpack.c.0.s8 %v3669
    %v3671 = vlaneseq
    %v3672 = vshrl.u32 %v3671, 7
    %v3673 = vsub.s32 %v3670, %v3672
    %v3674 = vrot.slane %v3666, %v3673
    %v3676 = vunpack.c.l.s4 1983009808
    %v3677 = vunpack.c.0.s8 %v3676
    %v3678 = vlaneseq
    %v3679 = vshrl.u32 %v3678, 7
    %v3680 = vsub.s32 %v3677, %v3679
    %v3681 = vrot.slane %v3667, %v3680
    %v3682 = vcombine.low %v3658, %v3674
    %v3683 = vcombine.high %v3658, %v3674
    %v3685 = vunpack.c.l.s4 1934713408
    %v3686 = vunpack.c.0.s8 %v3685
    %v3687 = vlaneseq
    %v3688 = vshrl.u32 %v3687, 7
    %v3689 = vsub.s32 %v3686, %v3688
    %v3690 = vrot.slane %v3682, %v3689
    %v3692 = vunpack.c.l.s4 1934713408
    %v3693 = vunpack.c.0.s8 %v3692
    %v3694 = vlaneseq
    %v3695 = vshrl.u32 %v3694, 7
    %v3696 = vsub.s32 %v3693, %v3695
    %v3697 = vrot.slane %v3683, %v3696
    %v3698 = vcombine.low %v3665, %v3681
    %v3699 = vcombine.high %v3665, %v3681
    %v3701 = vunpack.c.l.s4 1934713408
    %v3702 = vunpack.c.0.s8 %v3701
    %v3703 = vlaneseq
    %v3704 = vshrl.u32 %v3703, 7
    %v3705 = vsub.s32 %v3702, %v3704
    %v3706 = vrot.slane %v3698, %v3705
    %v3708 = vunpack.c.l.s4 1934713408
    %v3709 = vunpack.c.0.s8 %v3708
    %v3710 = vlaneseq
    %v3711 = vshrl.u32 %v3710, 7
    %v3712 = vsub.s32 %v3709, %v3711
    %v3713 = vrot.slane %v3699, %v3712
    %v3714 = vcombine.high %v3690, 0.0
    %v3715 = vcombine.high %v3697, 0.0
    %v3716 = vcombine.high %v3706, 0.0
    %v3717 = vcombine.high %v3713, 0.0
    %v3718 = vcombine.low %v3486, %v3493
    %v3720 = vunpack.c.l.s4 1983009808
    %v3721 = vunpack.c.0.s8 %v3720
    %v3722 = vlaneseq
    %v3723 = vshrl.u32 %v3722, 7
    %v3724 = vsub.s32 %v3721, %v3723
    %v3725 = vrot.slane %v3718, %v3724
    %v3726 = vcombine.low %v3510, %v3511
    %v3728 = vunpack.c.l.s4 1983009808
    %v3729 = vunpack.c.0.s8 %v3728
    %v3730 = vlaneseq
    %v3731 = vshrl.u32 %v3730, 7
    %v3732 = vsub.s32 %v3729, %v3731
    %v3733 = vrot.slane %v3726, %v3732
    %v3734 = vcombine.low %v3502, %v3509
    %v3736 = vunpack.c.l.s4 1983009808
    %v3737 = vunpack.c.0.s8 %v3736
    %v3738 = vlaneseq
    %v3739 = vshrl.u32 %v3738, 7
    %v3740 = vsub.s32 %v3737, %v3739
    %v3741 = vrot.slane %v3734, %v3740
    %v3742 = vcombine.low %v3512, %v3513
    %v3744 = vunpack.c.l.s4 1983009808
    %v3745 = vunpack.c.0.s8 %v3744
    %v3746 = vlaneseq
    %v3747 = vshrl.u32 %v3746, 7
    %v3748 = vsub.s32 %v3745, %v3747
    %v3749 = vrot.slane %v3742, %v3748
    %v3750 = vcombine.low %v3725, %v3733
    %v3751 = vcombine.high %v3725, %v3733
    %v3753 = vunpack.c.l.s4 1934713408
    %v3754 = vunpack.c.0.s8 %v3753
    %v3755 = vlaneseq
    %v3756 = vshrl.u32 %v3755, 7
    %v3757 = vsub.s32 %v3754, %v3756
    %v3758 = vrot.slane %v3750, %v3757
    %v3760 = vunpack.c.l.s4 1934713408
    %v3761 = vunpack.c.0.s8 %v3760
    %v3762 = vlaneseq
    %v3763 = vshrl.u32 %v3762, 7
    %v3764 = vsub.s32 %v3761, %v3763
    %v3765 = vrot.slane %v3751, %v3764
    %v3766 = vcombine.low %v3741, %v3749
    %v3767 = vcombine.high %v3741, %v3749
    %v3769 = vunpack.c.l.s4 1934713408
    %v3770 = vunpack.c.0.s8 %v3769
    %v3771 = vlaneseq
    %v3772 = vshrl.u32 %v3771, 7
    %v3773 = vsub.s32 %v3770, %v3772
    %v3774 = vrot.slane %v3766, %v3773
    %v3776 = vunpack.c.l.s4 1934713408
    %v3777 = vunpack.c.0.s8 %v3776
    %v3778 = vlaneseq
    %v3779 = vshrl.u32 %v3778, 7
    %v3780 = vsub.s32 %v3777, %v3779
    %v3781 = vrot.slane %v3767, %v3780
    %v3782 = vcombine.low %v3758, %v3774
    %v3783 = vcombine.high %v3758, %v3774
    %v3784 = vcombine.low %v3765, %v3781
    %v3785 = vcombine.high %v3765, %v3781
    %v3786 = vcombine.low %v3554, %v3561
    %v3788 = vunpack.c.l.s4 1983009808
    %v3789 = vunpack.c.0.s8 %v3788
    %v3790 = vlaneseq
    %v3791 = vshrl.u32 %v3790, 7
    %v3792 = vsub.s32 %v3789, %v3791
    %v3793 = vrot.slane %v3786, %v3792
    %v3794 = vcombine.low %v3578, %v3579
    %v3796 = vunpack.c.l.s4 1983009808
    %v3797 = vunpack.c.0.s8 %v3796
    %v3798 = vlaneseq
    %v3799 = vshrl.u32 %v3798, 7
    %v3800 = vsub.s32 %v3797, %v3799
    %v3801 = vrot.slane %v3794, %v3800
    %v3802 = vcombine.low %v3570, %v3577
    %v3804 = vunpack.c.l.s4 1983009808
    %v3805 = vunpack.c.0.s8 %v3804
    %v3806 = vlaneseq
    %v3807 = vshrl.u32 %v3806, 7
    %v3808 = vsub.s32 %v3805, %v3807
    %v3809 = vrot.slane %v3802, %v3808
    %v3810 = vcombine.low %v3580, %v3581
    %v3812 = vunpack.c.l.s4 1983009808
    %v3813 = vunpack.c.0.s8 %v3812
    %v3814 = vlaneseq
    %v3815 = vshrl.u32 %v3814, 7
    %v3816 = vsub.s32 %v3813, %v3815
    %v3817 = vrot.slane %v3810, %v3816
    %v3818 = vcombine.low %v3793, %v3801
    %v3819 = vcombine.high %v3793, %v3801
    %v3821 = vunpack.c.l.s4 1934713408
    %v3822 = vunpack.c.0.s8 %v3821
    %v3823 = vlaneseq
    %v3824 = vshrl.u32 %v3823, 7
    %v3825 = vsub.s32 %v3822, %v3824
    %v3826 = vrot.slane %v3818, %v3825
    %v3828 = vunpack.c.l.s4 1934713408
    %v3829 = vunpack.c.0.s8 %v3828
    %v3830 = vlaneseq
    %v3831 = vshrl.u32 %v3830, 7
    %v3832 = vsub.s32 %v3829, %v3831
    %v3833 = vrot.slane %v3819, %v3832
    %v3834 = vcombine.low %v3809, %v3817
    %v3835 = vcombine.high %v3809, %v3817
    %v3837 = vunpack.c.l.s4 1934713408
    %v3838 = vunpack.c.0.s8 %v3837
    %v3839 = vlaneseq
    %v3840 = vshrl.u32 %v3839, 7
    %v3841 = vsub.s32 %v3838, %v3840
    %v3842 = vrot.slane %v3834, %v3841
    %v3844 = vunpack.c.l.s4 1934713408
    %v3845 = vunpack.c.0.s8 %v3844
    %v3846 = vlaneseq
    %v3847 = vshrl.u32 %v3846, 7
    %v3848 = vsub.s32 %v3845, %v3847
    %v3849 = vrot.slane %v3835, %v3848
    %v3850 = vcombine.low %v3826, %v3842
    %v3851 = vcombine.high %v3826, %v3842
    %v3852 = vcombine.low %v3833, %v3849
    %v3853 = vcombine.high %v3833, %v3849
    %v3854 = vcombine.low %v3622, %v3629
    %v3856 = vunpack.c.l.s4 1983009808
    %v3857 = vunpack.c.0.s8 %v3856
    %v3858 = vlaneseq
    %v3859 = vshrl.u32 %v3858, 7
    %v3860 = vsub.s32 %v3857, %v3859
    %v3861 = vrot.slane %v3854, %v3860
    %v3862 = vcombine.low %v3646, %v3647
    %v3864 = vunpack.c.l.s4 1983009808
    %v3865 = vunpack.c.0.s8 %v3864
    %v3866 = vlaneseq
    %v3867 = vshrl.u32 %v3866, 7
    %v3868 = vsub.s32 %v3865, %v3867
    %v3869 = vrot.slane %v3862, %v3868
    %v3870 = vcombine.low %v3638, %v3645
    %v3872 = vunpack.c.l.s4 1983009808
    %v3873 = vunpack.c.0.s8 %v3872
    %v3874 = vlaneseq
    %v3875 = vshrl.u32 %v3874, 7
    %v3876 = vsub.s32 %v3873, %v3875
    %v3877 = vrot.slane %v3870, %v3876
    %v3878 = vcombine.low %v3648, %v3649
    %v3880 = vunpack.c.l.s4 1983009808
    %v3881 = vunpack.c.0.s8 %v3880
    %v3882 = vlaneseq
    %v3883 = vshrl.u32 %v3882, 7
    %v3884 = vsub.s32 %v3881, %v3883
    %v3885 = vrot.slane %v3878, %v3884
    %v3886 = vcombine.low %v3861, %v3869
    %v3887 = vcombine.high %v3861, %v3869
    %v3889 = vunpack.c.l.s4 1934713408
    %v3890 = vunpack.c.0.s8 %v3889
    %v3891 = vlaneseq
    %v3892 = vshrl.u32 %v3891, 7
    %v3893 = vsub.s32 %v3890, %v3892
    %v3894 = vrot.slane %v3886, %v3893
    %v3896 = vunpack.c.l.s4 1934713408
    %v3897 = vunpack.c.0.s8 %v3896
    %v3898 = vlaneseq
    %v3899 = vshrl.u32 %v3898, 7
    %v3900 = vsub.s32 %v3897, %v3899
    %v3901 = vrot.slane %v3887, %v3900
    %v3902 = vcombine.low %v3877, %v3885
    %v3903 = vcombine.high %v3877, %v3885
    %v3905 = vunpack.c.l.s4 1934713408
    %v3906 = vunpack.c.0.s8 %v3905
    %v3907 = vlaneseq
    %v3908 = vshrl.u32 %v3907, 7
    %v3909 = vsub.s32 %v3906, %v3908
    %v3910 = vrot.slane %v3902, %v3909
    %v3912 = vunpack.c.l.s4 1934713408
    %v3913 = vunpack.c.0.s8 %v3912
    %v3914 = vlaneseq
    %v3915 = vshrl.u32 %v3914, 7
    %v3916 = vsub.s32 %v3913, %v3915
    %v3917 = vrot.slane %v3903, %v3916
    %v3918 = vcombine.low %v3894, %v3910
    %v3919 = vcombine.high %v3894, %v3910
    %v3920 = vcombine.low %v3901, %v3917
    %v3921 = vcombine.high %v3901, %v3917
    %v3922 = vcombine.low %v3690, %v3697
    %v3924 = vunpack.c.l.s4 1983009808
    %v3925 = vunpack.c.0.s8 %v3924
    %v3926 = vlaneseq
    %v3927 = vshrl.u32 %v3926, 7
    %v3928 = vsub.s32 %v3925, %v3927
    %v3929 = vrot.slane %v3922, %v3928
    %v3930 = vcombine.low %v3714, %v3715
    %v3932 = vunpack.c.l.s4 1983009808
    %v3933 = vunpack.c.0.s8 %v3932
    %v3934 = vlaneseq
    %v3935 = vshrl.u32 %v3934, 7
    %v3936 = vsub.s32 %v3933, %v3935
    %v3937 = vrot.slane %v3930, %v3936
    %v3938 = vcombine.low %v3706, %v3713
    %v3940 = vunpack.c.l.s4 1983009808
    %v3941 = vunpack.c.0.s8 %v3940
    %v3942 = vlaneseq
    %v3943 = vshrl.u32 %v3942, 7
    %v3944 = vsub.s32 %v3941, %v3943
    %v3945 = vrot.slane %v3938, %v3944
    %v3946 = vcombine.low %v3716, %v3717
    %v3948 = vunpack.c.l.s4 1983009808
    %v3949 = vunpack.c.0.s8 %v3948
    %v3950 = vlaneseq
    %v3951 = vshrl.u32 %v3950, 7
    %v3952 = vsub.s32 %v3949, %v3951
    %v3953 = vrot.slane %v3946, %v3952
    %v3954 = vcombine.low %v3929, %v3937
    %v3955 = vcombine.high %v3929, %v3937
    %v3957 = vunpack.c.l.s4 1934713408
    %v3958 = vunpack.c.0.s8 %v3957
    %v3959 = vlaneseq
    %v3960 = vshrl.u32 %v3959, 7
    %v3961 = vsub.s32 %v3958, %v3960
    %v3962 = vrot.slane %v3954, %v3961
    %v3964 = vunpack.c.l.s4 1934713408
    %v3965 = vunpack.c.0.s8 %v3964
    %v3966 = vlaneseq
    %v3967 = vshrl.u32 %v3966, 7
    %v3968 = vsub.s32 %v3965, %v3967
    %v3969 = vrot.slane %v3955, %v3968
    %v3970 = vcombine.low %v3945, %v3953
    %v3971 = vcombine.high %v3945, %v3953
    %v3973 = vunpack.c.l.s4 1934713408
    %v3974 = vunpack.c.0.s8 %v3973
    %v3975 = vlaneseq
    %v3976 = vshrl.u32 %v3975, 7
    %v3977 = vsub.s32 %v3974, %v3976
    %v3978 = vrot.slane %v3970, %v3977
    %v3980 = vunpack.c.l.s4 1934713408
    %v3981 = vunpack.c.0.s8 %v3980
    %v3982 = vlaneseq
    %v3983 = vshrl.u32 %v3982, 7
    %v3984 = vsub.s32 %v3981, %v3983
    %v3985 = vrot.slane %v3971, %v3984
    %v3986 = vcombine.low %v3962, %v3978
    %v3987 = vcombine.high %v3962, %v3978
    %v3988 = vcombine.low %v3969, %v3985
    %v3989 = vcombine.high %v3969, %v3985
    %3994 = vrot.lane.b32.xlu0 %v3783, 8
    %v3995 = vpop.permute.xlu0 %3994
    %3996 = vrot.lane.b32.xlu0 %v3851, 8
    %v3997 = vpop.permute.xlu0 %3996
    %3998 = vrot.lane.b32.xlu0 %v3919, 8
    %v3999 = vpop.permute.xlu0 %3998
    %4000 = vrot.lane.b32.xlu0 %v3987, 8
    %v4001 = vpop.permute.xlu0 %4000
    %4010 = vrot.lane.b32.xlu0 %v3784, 16
    %v4011 = vpop.permute.xlu0 %4010
    %4012 = vrot.lane.b32.xlu0 %v3852, 16
    %v4013 = vpop.permute.xlu0 %4012
    %4014 = vrot.lane.b32.xlu0 %v3920, 16
    %v4015 = vpop.permute.xlu0 %4014
    %4016 = vrot.lane.b32.xlu0 %v3988, 16
    %v4017 = vpop.permute.xlu0 %4016
    %4026 = vrot.lane.b32.xlu0 %v3785, 24
    %v4027 = vpop.permute.xlu0 %4026
    %4028 = vrot.lane.b32.xlu0 %v3853, 24
    %v4029 = vpop.permute.xlu0 %4028
    %4030 = vrot.lane.b32.xlu0 %v3921, 24
    %v4031 = vpop.permute.xlu0 %4030
    %4032 = vrot.lane.b32.xlu0 %v3989, 24
    %v4033 = vpop.permute.xlu0 %4032
    %v4038 = vsel %vm457, %v3782, %v3995
    %v4039 = vsel %vm457, %v3850, %v3997
    %v4040 = vsel %vm457, %v3918, %v3999
    %v4041 = vsel %vm457, %v3986, %v4001
    %v4042 = vsel %vm1881, %v4038, %v4011
    %v4043 = vsel %vm1881, %v4039, %v4013
    %v4044 = vsel %vm1881, %v4040, %v4015
    %v4045 = vsel %vm1881, %v4041, %v4017
    %v4046 = vsel %vm1886, %v4042, %v4027
    %v4047 = vsel %vm1886, %v4043, %v4029
    %v4048 = vsel %vm1886, %v4044, %v4031
    %v4049 = vsel %vm1886, %v4045, %v4033
    %v4050 = vpack.c.bf16 %v4047, %v4046
    %v4051 = vpack.c.bf16 %v4049, %v4048
    %s4052 = scalar_lea.vmem %s6, 16
    %v4053 = vld [vmem:[%s4052] sm:$0xf]
    %v4054 = vld [vmem:[%s4052 + $0x4] sm:$0xf]
    %v4055 = vld [vmem:[%s4052 + $0x8] sm:$0xf]
    %v4056 = vld [vmem:[%s4052 + $0xc] sm:$0xf]
    %v4061 = vunpack.c.l.b16 %v4053
    %v4062 = vunpack.c.l.b16 %v4054
    %v4063 = vunpack.c.l.b16 %v4055
    %v4064 = vunpack.c.l.b16 %v4056
    %v4065 = vpack.c.b16 %v4062, %v4061
    %v4066 = vpack.c.b16 %v4064, %v4063
    %v4070 = vsel %vm64, %v4050, 0
    %v4073 = vsel %vm64, %v4051, 0
    %4075 = vmatprep.subr.bf16.mxu0 0
    %4076 = vmatpush1.bf16.msra.mxu0 0
    %4077 = vmatprep.subr.bf16.mxu0 0
    %4078 = vmatpush1.bf16.msra.mxu0 0
    %4079 = vmatprep.subr.bf16.mxu0 0
    %4080 = vmatpush1.bf16.msra.mxu0 0
    %4081 = vmatprep.subr.bf16.mxu0 0
    %4082 = vmatpush1.bf16.msra.mxu0 0
    %4083 = vmatprep.subr.bf16.mxu0 0
    %4084 = vmatpush1.bf16.msra.mxu0 0
    %4085 = vmatprep.subr.bf16.mxu0 0
    %4086 = vmatpush1.bf16.msra.mxu0 0
    %4087 = vmatprep.subr.bf16.mxu0 0
    %4088 = vmatpush1.bf16.msra.mxu0 %v4066
    %4089 = vmatprep.subr.bf16.mxu0 0
    %4090 = vmatpush1.bf16.msra.mxu0 %v4065
    %4091 = vmatprep.subr.bf16.mxu0 0
    %4092 = vmatpush2.bf16.msra.mxu0 0
    %4093 = vmatprep.subr.bf16.mxu0 0
    %4094 = vmatpush2.bf16.msra.mxu0 0
    %4095 = vmatprep.subr.bf16.mxu0 0
    %4096 = vmatpush2.bf16.msra.mxu0 0
    %4097 = vmatprep.subr.bf16.mxu0 0
    %4098 = vmatpush2.bf16.msra.mxu0 0
    %4099 = vmatprep.subr.bf16.mxu0 0
    %4100 = vmatpush2.bf16.msra.mxu0 0
    %4101 = vmatprep.subr.bf16.mxu0 0
    %4102 = vmatpush2.bf16.msra.mxu0 0
    %4103 = vmatprep.subr.bf16.mxu0 0
    %4104 = vmatpush2.bf16.msra.mxu0 0
    %4105 = vmatprep.subr.bf16.mxu0 0
    %4106 = vmatpush2.bf16.msra.mxu0 0
    %4107 = vmatprep.mubr.bf16.mxu0 0
    %4108 = vmatmul.mubr.bf16.gmra.mxu0 %v4070
    %v4109 = vpop.f32.mrf.mxu0
    %v4110 = vadd.f32 0.0, %v4109
    %v4111 = vpop.f32.mrf.mxu0
    %v4112 = vpop.f32.mrf.mxu0
    %v4113 = vadd.f32 0.0, %v4112
    %v4114 = vpop.f32.mrf.mxu0
    %4115 = vmatprep.mubr.bf16.mxu0 0
    %4116 = vmatmul.mubr.bf16.gmra.mxu0 %v4073
    %v4117 = vpop.f32.mrf.mxu0
    %v4118 = vadd.f32 0.0, %v4117
    %v4119 = vpop.f32.mrf.mxu0
    %v4120 = vpop.f32.mrf.mxu0
    %v4121 = vadd.f32 0.0, %v4120
    %v4122 = vpop.f32.mrf.mxu0
    %4123 = vdwg.mxu0
    %v4124 = vadd.f32 %v2218, %v4110
    %v4125 = vadd.f32 %v2219, %v4113
    %v4126 = vadd.f32 %v2220, %v4118
    %v4127 = vadd.f32 %v2221, %v4121
    %s4128 = scalar_lea.vmem %s7, 1
    %v4129 = vld [vmem:[%s4128] sm:$0x1]
    %v4130 = vmul.f32 %v4124, %v4124
    %v4131 = vmul.f32 %v4125, %v4125
    %v4132 = vmul.f32 %v4126, %v4126
    %v4133 = vmul.f32 %v4127, %v4127
    %v4134 = vsel %vm64, %v4130, 0.0
    %4135 = vadd.xlane.f32.xlu0 %v4134
    %v4136 = vpop.xlane.xlu0 %4135
    %v4137 = vsel %vm64, %v4131, 0.0
    %4138 = vadd.xlane.f32.xlu0 %v4137
    %v4139 = vpop.xlane.xlu0 %4138
    %v4140 = vsel %vm64, %v4132, 0.0
    %4141 = vadd.xlane.f32.xlu0 %v4140
    %v4142 = vpop.xlane.xlu0 %4141
    %v4143 = vsel %vm64, %v4133, 0.0
    %4144 = vadd.xlane.f32.xlu0 %v4143
    %v4145 = vpop.xlane.xlu0 %4144
    %v4146 = vmul.f32 %v4136, %v77
    %v4147 = vmul.f32 %v4139, %v77
    %v4148 = vmul.f32 %v4142, %v77
    %v4149 = vmul.f32 %v4145, %v77
    %v4150 = vadd.f32 %v4146, 1e-06
    %v4151 = vadd.f32 %v4147, 1e-06
    %v4152 = vadd.f32 %v4148, 1e-06
    %v4153 = vadd.f32 %v4149, 1e-06
    %v4154 = vrsqrt.pop %v4150
    %v4155 = vrsqrt.pop %v4151
    %v4156 = vrsqrt.pop %v4152
    %v4157 = vrsqrt.pop %v4153
    %v4158 = vmul.f32 %v4124, %v4154
    %v4159 = vmul.f32 %v4125, %v4155
    %v4160 = vmul.f32 %v4126, %v4156
    %v4161 = vmul.f32 %v4127, %v4157
    %v4163 = vlaneseq
    %v4164 = vshrl.u32 %v4163, 7
    %v4165 = vsub.s32 0, %v4164
    %v4166 = vrot.slane %v4129, %v4165
    %v4168 = vmul.f32 %v4158, %v4166
    %v4169 = vmul.f32 %v4159, %v4166
    %v4170 = vmul.f32 %v4160, %v4166
    %v4171 = vmul.f32 %v4161, %v4166
    %v4172 = vpack.c.bf16 %v4169, %v4168
    %v4173 = vpack.c.bf16 %v4171, %v4170
    %s4174 = scalar_lea.vmem %s8, 32
    %v4175 = vld [vmem:[%s4174] sm:$0xff]
    %v4176 = vld [vmem:[%s4174 + $0x8] sm:$0xff]
    %v4177 = vld [vmem:[%s4174 + $0x10] sm:$0xff]
    %v4178 = vld [vmem:[%s4174 + $0x18] sm:$0xff]
    %v4183 = vunpack.c.l.b16 %v4175
    %v4184 = vunpack.c.h.b16 %v4175
    %v4185 = vunpack.c.l.b16 %v4176
    %v4186 = vunpack.c.h.b16 %v4176
    %v4187 = vunpack.c.l.b16 %v4177
    %v4188 = vunpack.c.h.b16 %v4177
    %v4189 = vunpack.c.l.b16 %v4178
    %v4190 = vunpack.c.h.b16 %v4178
    %v4191 = vpack.c.b16 %v4185, %v4183
    %v4192 = vpack.c.b16 %v4186, %v4184
    %v4193 = vpack.c.b16 %v4189, %v4187
    %v4194 = vpack.c.b16 %v4190, %v4188
    %v4200 = vsel %vm64, %v4172, 0
    %v4203 = vsel %vm64, %v4173, 0
    %4205 = vmatprep.subr.bf16.mxu0 0
    %4206 = vmatpush1.bf16.msra.mxu0 0
    %4207 = vmatprep.subr.bf16.mxu0 0
    %4208 = vmatpush1.bf16.msra.mxu0 0
    %4209 = vmatprep.subr.bf16.mxu0 0
    %4210 = vmatpush1.bf16.msra.mxu0 0
    %4211 = vmatprep.subr.bf16.mxu0 0
    %4212 = vmatpush1.bf16.msra.mxu0 0
    %4213 = vmatprep.subr.bf16.mxu0 0
    %4214 = vmatpush1.bf16.msra.mxu0 0
    %4215 = vmatprep.subr.bf16.mxu0 0
    %4216 = vmatpush1.bf16.msra.mxu0 0
    %4217 = vmatprep.subr.bf16.mxu0 %v4194
    %4218 = vmatpush1.bf16.msra.mxu0 %v4193
    %4219 = vmatprep.subr.bf16.mxu0 %v4192
    %4220 = vmatpush1.bf16.msra.mxu0 %v4191
    %4221 = vmatprep.subr.bf16.mxu0 0
    %4222 = vmatpush2.bf16.msra.mxu0 0
    %4223 = vmatprep.subr.bf16.mxu0 0
    %4224 = vmatpush2.bf16.msra.mxu0 0
    %4225 = vmatprep.subr.bf16.mxu0 0
    %4226 = vmatpush2.bf16.msra.mxu0 0
    %4227 = vmatprep.subr.bf16.mxu0 0
    %4228 = vmatpush2.bf16.msra.mxu0 0
    %4229 = vmatprep.subr.bf16.mxu0 0
    %4230 = vmatpush2.bf16.msra.mxu0 0
    %4231 = vmatprep.subr.bf16.mxu0 0
    %4232 = vmatpush2.bf16.msra.mxu0 0
    %4233 = vmatprep.subr.bf16.mxu0 0
    %4234 = vmatpush2.bf16.msra.mxu0 0
    %4235 = vmatprep.subr.bf16.mxu0 0
    %4236 = vmatpush2.bf16.msra.mxu0 0
    %4237 = vmatprep.mubr.bf16.mxu0 0
    %4238 = vmatmul.mubr.bf16.gmra.mxu0 %v4200
    %v4239 = vpop.f32.mrf.mxu0
    %v4240 = vadd.f32 0.0, %v4239
    %v4241 = vpop.f32.mrf.mxu0
    %v4242 = vadd.f32 0.0, %v4241
    %v4243 = vpop.f32.mrf.mxu0
    %v4244 = vadd.f32 0.0, %v4243
    %v4245 = vpop.f32.mrf.mxu0
    %v4246 = vadd.f32 0.0, %v4245
    %4247 = vmatprep.mubr.bf16.mxu0 0
    %4248 = vmatmul.mubr.bf16.gmra.mxu0 %v4203
    %v4249 = vpop.f32.mrf.mxu0
    %v4250 = vadd.f32 0.0, %v4249
    %v4251 = vpop.f32.mrf.mxu0
    %v4252 = vadd.f32 0.0, %v4251
    %v4253 = vpop.f32.mrf.mxu0
    %v4254 = vadd.f32 0.0, %v4253
    %v4255 = vpop.f32.mrf.mxu0
    %v4256 = vadd.f32 0.0, %v4255
    %4257 = vdwg.mxu0
    %v4258 = vxor.u32 %v4240, 2147483648
    %v4259 = vxor.u32 %v4244, 2147483648
    %v4260 = vxor.u32 %v4250, 2147483648
    %v4261 = vxor.u32 %v4254, 2147483648
    %v4262 = vmul.f32 %v4258, 1.442695
    %v4263 = vpow.pop %v4262
    %v4264 = vmul.f32 %v4259, 1.442695
    %v4265 = vpow.pop %v4264
    %v4266 = vmul.f32 %v4260, 1.442695
    %v4267 = vpow.pop %v4266
    %v4268 = vmul.f32 %v4261, 1.442695
    %v4269 = vpow.pop %v4268
    %v4270 = vadd.f32 %v4263, 1.0
    %v4271 = vadd.f32 %v4265, 1.0
    %v4272 = vadd.f32 %v4267, 1.0
    %v4273 = vadd.f32 %v4269, 1.0
    %v4274 = vrcp.pop %v4270
    %v4275 = vmul.f32 1.0, %v4274
    %v4276 = vrcp.pop %v4271
    %v4277 = vmul.f32 1.0, %v4276
    %v4278 = vrcp.pop %v4272
    %v4279 = vmul.f32 1.0, %v4278
    %v4280 = vrcp.pop %v4273
    %v4281 = vmul.f32 1.0, %v4280
    %v4282 = vmul.f32 %v4240, %v4275
    %v4283 = vmul.f32 %v4244, %v4277
    %v4284 = vmul.f32 %v4250, %v4279
    %v4285 = vmul.f32 %v4254, %v4281
    %v4286 = vmul.f32 %v4282, %v4242
    %v4287 = vmul.f32 %v4283, %v4246
    %v4288 = vmul.f32 %v4284, %v4252
    %v4289 = vmul.f32 %v4285, %v4256
    %v4290 = vpack.c.bf16 %v4287, %v4286
    %v4291 = vpack.c.bf16 %v4289, %v4288
    %s4292 = scalar_lea.vmem %s9, 32
    %v4293 = vld [vmem:[%s4292] sm:$0xf]
    %v4294 = vld [vmem:[%s4292 + $0x4] sm:$0xf]
    %v4295 = vld [vmem:[%s4292 + $0x8] sm:$0xf]
    %v4296 = vld [vmem:[%s4292 + $0xc] sm:$0xf]
    %v4297 = vld [vmem:[%s4292 + $0x10] sm:$0xf]
    %v4298 = vld [vmem:[%s4292 + $0x14] sm:$0xf]
    %v4299 = vld [vmem:[%s4292 + $0x18] sm:$0xf]
    %v4300 = vld [vmem:[%s4292 + $0x1c] sm:$0xf]
    %v4309 = vunpack.c.l.b16 %v4293
    %v4310 = vunpack.c.l.b16 %v4294
    %v4311 = vunpack.c.l.b16 %v4295
    %v4312 = vunpack.c.l.b16 %v4296
    %v4313 = vunpack.c.l.b16 %v4297
    %v4314 = vunpack.c.l.b16 %v4298
    %v4315 = vunpack.c.l.b16 %v4299
    %v4316 = vunpack.c.l.b16 %v4300
    %v4317 = vpack.c.b16 %v4310, %v4309
    %v4318 = vpack.c.b16 %v4312, %v4311
    %v4319 = vpack.c.b16 %v4314, %v4313
    %v4320 = vpack.c.b16 %v4316, %v4315
    %v4326 = vsel %vm2162, %v4290, 0
    %v4329 = vsel %vm2162, %v4291, 0
    %4331 = vmatprep.subr.bf16.mxu0 0
    %4332 = vmatpush1.bf16.msra.mxu0 0
    %4333 = vmatprep.subr.bf16.mxu0 0
    %4334 = vmatpush1.bf16.msra.mxu0 0
    %4335 = vmatprep.subr.bf16.mxu0 0
    %4336 = vmatpush1.bf16.msra.mxu0 0
    %4337 = vmatprep.subr.bf16.mxu0 0
    %4338 = vmatpush1.bf16.msra.mxu0 0
    %4339 = vmatprep.subr.bf16.mxu0 0
    %4340 = vmatpush1.bf16.msra.mxu0 %v4320
    %4341 = vmatprep.subr.bf16.mxu0 0
    %4342 = vmatpush1.bf16.msra.mxu0 %v4319
    %4343 = vmatprep.subr.bf16.mxu0 0
    %4344 = vmatpush1.bf16.msra.mxu0 %v4318
    %4345 = vmatprep.subr.bf16.mxu0 0
    %4346 = vmatpush1.bf16.msra.mxu0 %v4317
    %4347 = vmatprep.subr.bf16.mxu0 0
    %4348 = vmatpush2.bf16.msra.mxu0 0
    %4349 = vmatprep.subr.bf16.mxu0 0
    %4350 = vmatpush2.bf16.msra.mxu0 0
    %4351 = vmatprep.subr.bf16.mxu0 0
    %4352 = vmatpush2.bf16.msra.mxu0 0
    %4353 = vmatprep.subr.bf16.mxu0 0
    %4354 = vmatpush2.bf16.msra.mxu0 0
    %4355 = vmatprep.subr.bf16.mxu0 0
    %4356 = vmatpush2.bf16.msra.mxu0 0
    %4357 = vmatprep.subr.bf16.mxu0 0
    %4358 = vmatpush2.bf16.msra.mxu0 0
    %4359 = vmatprep.subr.bf16.mxu0 0
    %4360 = vmatpush2.bf16.msra.mxu0 0
    %4361 = vmatprep.subr.bf16.mxu0 0
    %4362 = vmatpush2.bf16.msra.mxu0 0
    %4363 = vmatprep.mubr.bf16.mxu0 0
    %4364 = vmatmul.mubr.bf16.gmra.mxu0 %v4326
    %v4365 = vpop.f32.mrf.mxu0
    %v4366 = vadd.f32 0.0, %v4365
    %v4367 = vpop.f32.mrf.mxu0
    %v4368 = vpop.f32.mrf.mxu0
    %v4369 = vadd.f32 0.0, %v4368
    %v4370 = vpop.f32.mrf.mxu0
    %4371 = vmatprep.mubr.bf16.mxu0 0
    %4372 = vmatmul.mubr.bf16.gmra.mxu0 %v4329
    %v4373 = vpop.f32.mrf.mxu0
    %v4374 = vadd.f32 0.0, %v4373
    %v4375 = vpop.f32.mrf.mxu0
    %v4376 = vpop.f32.mrf.mxu0
    %v4377 = vadd.f32 0.0, %v4376
    %v4378 = vpop.f32.mrf.mxu0
    %4379 = vdwg.mxu0
    %v4380 = vadd.f32 %v4124, %v4366
    %v4381 = vadd.f32 %v4125, %v4369
    %v4382 = vadd.f32 %v4126, %v4374
    %v4383 = vadd.f32 %v4127, %v4377
    %v4384 = vld [vmem:[%s10] sm:$0x1]
    %v4385 = vmul.f32 %v4380, %v4380
    %v4386 = vmul.f32 %v4381, %v4381
    %v4387 = vmul.f32 %v4382, %v4382
    %v4388 = vmul.f32 %v4383, %v4383
    %v4389 = vsel %vm64, %v4385, 0.0
    %4390 = vadd.xlane.f32.xlu0 %v4389
    %v4391 = vpop.xlane.xlu0 %4390
    %v4392 = vsel %vm64, %v4386, 0.0
    %4393 = vadd.xlane.f32.xlu0 %v4392
    %v4394 = vpop.xlane.xlu0 %4393
    %v4395 = vsel %vm64, %v4387, 0.0
    %4396 = vadd.xlane.f32.xlu0 %v4395
    %v4397 = vpop.xlane.xlu0 %4396
    %v4398 = vsel %vm64, %v4388, 0.0
    %4399 = vadd.xlane.f32.xlu0 %v4398
    %v4400 = vpop.xlane.xlu0 %4399
    %v4401 = vmul.f32 %v4391, %v77
    %v4402 = vmul.f32 %v4394, %v77
    %v4403 = vmul.f32 %v4397, %v77
    %v4404 = vmul.f32 %v4400, %v77
    %v4405 = vadd.f32 %v4401, 1e-06
    %v4406 = vadd.f32 %v4402, 1e-06
    %v4407 = vadd.f32 %v4403, 1e-06
    %v4408 = vadd.f32 %v4404, 1e-06
    %v4409 = vrsqrt.pop %v4405
    %v4410 = vrsqrt.pop %v4406
    %v4411 = vrsqrt.pop %v4407
    %v4412 = vrsqrt.pop %v4408
    %v4413 = vmul.f32 %v4380, %v4409
    %v4414 = vmul.f32 %v4381, %v4410
    %v4415 = vmul.f32 %v4382, %v4411
    %v4416 = vmul.f32 %v4383, %v4412
    %v4418 = vlaneseq
    %v4419 = vshrl.u32 %v4418, 7
    %v4420 = vsub.s32 0, %v4419
    %v4421 = vrot.slane %v4384, %v4420
    %v4423 = vmul.f32 %v4413, %v4421
    %v4424 = vmul.f32 %v4414, %v4421
    %v4425 = vmul.f32 %v4415, %v4421
    %v4426 = vmul.f32 %v4416, %v4421
    %v4427 = vpack.c.bf16 %v4424, %v4423
    %v4428 = vpack.c.bf16 %v4426, %v4425
    %v4429 = vld [vmem:[%s11] sm:$0xf]
    %v4430 = vld [vmem:[%s11 + $0x4] sm:$0xf]
    %v4431 = vld [vmem:[%s11 + $0x8] sm:$0xf]
    %v4432 = vld [vmem:[%s11 + $0xc] sm:$0xf]
    %v4437 = vunpack.c.l.b16 %v4429
    %v4438 = vunpack.c.l.b16 %v4430
    %v4439 = vunpack.c.l.b16 %v4431
    %v4440 = vunpack.c.l.b16 %v4432
    %v4441 = vpack.c.b16 %v4438, %v4437
    %v4442 = vpack.c.b16 %v4440, %v4439
    %v4446 = vsel %vm64, %v4427, 0
    %v4449 = vsel %vm64, %v4428, 0
    %4451 = vmatprep.subr.bf16.mxu0 0
    %4452 = vmatpush1.bf16.msra.mxu0 0
    %4453 = vmatprep.subr.bf16.mxu0 0
    %4454 = vmatpush1.bf16.msra.mxu0 0
    %4455 = vmatprep.subr.bf16.mxu0 0
    %4456 = vmatpush1.bf16.msra.mxu0 0
    %4457 = vmatprep.subr.bf16.mxu0 0
    %4458 = vmatpush1.bf16.msra.mxu0 0
    %4459 = vmatprep.subr.bf16.mxu0 0
    %4460 = vmatpush1.bf16.msra.mxu0 0
    %4461 = vmatprep.subr.bf16.mxu0 0
    %4462 = vmatpush1.bf16.msra.mxu0 0
    %4463 = vmatprep.subr.bf16.mxu0 0
    %4464 = vmatpush1.bf16.msra.mxu0 %v4442
    %4465 = vmatprep.subr.bf16.mxu0 0
    %4466 = vmatpush1.bf16.msra.mxu0 %v4441
    %4467 = vmatprep.subr.bf16.mxu0 0
    %4468 = vmatpush2.bf16.msra.mxu0 0
    %4469 = vmatprep.subr.bf16.mxu0 0
    %4470 = vmatpush2.bf16.msra.mxu0 0
    %4471 = vmatprep.subr.bf16.mxu0 0
    %4472 = vmatpush2.bf16.msra.mxu0 0
    %4473 = vmatprep.subr.bf16.mxu0 0
    %4474 = vmatpush2.bf16.msra.mxu0 0
    %4475 = vmatprep.subr.bf16.mxu0 0
    %4476 = vmatpush2.bf16.msra.mxu0 0
    %4477 = vmatprep.subr.bf16.mxu0 0
    %4478 = vmatpush2.bf16.msra.mxu0 0
    %4479 = vmatprep.subr.bf16.mxu0 0
    %4480 = vmatpush2.bf16.msra.mxu0 0
    %4481 = vmatprep.subr.bf16.mxu0 0
    %4482 = vmatpush2.bf16.msra.mxu0 0
    %4483 = vmatprep.mubr.bf16.mxu0 0
    %4484 = vmatmul.mubr.bf16.gmra.mxu0 %v4446
    %v4485 = vpop.f32.mrf.mxu0
    %v4486 = vadd.f32 0.0, %v4485
    %v4487 = vpop.f32.mrf.mxu0
    %v4488 = vpop.f32.mrf.mxu0
    %v4489 = vadd.f32 0.0, %v4488
    %v4490 = vpop.f32.mrf.mxu0
    %4491 = vmatprep.mubr.bf16.mxu0 0
    %4492 = vmatmul.mubr.bf16.gmra.mxu0 %v4449
    %v4493 = vpop.f32.mrf.mxu0
    %v4494 = vadd.f32 0.0, %v4493
    %v4495 = vpop.f32.mrf.mxu0
    %v4496 = vpop.f32.mrf.mxu0
    %v4497 = vadd.f32 0.0, %v4496
    %v4498 = vpop.f32.mrf.mxu0
    %4499 = vdwg.mxu0
    %4500 = vst [vmem:[#allocation2] sm:$0xff] %v4486
    %4501 = vst [vmem:[#allocation2 + $0x8] sm:$0xff] %v4489
    %4502 = vst [vmem:[#allocation2 + $0x10] sm:$0xff] %v4494
    %4503 = vst [vmem:[#allocation2 + $0x18] sm:$0xff] %v4497
    // Predicated region
    $region50: #{llama_forward.1} parent=1 // pred_check
      _
    $region51: #{llama_forward.1} parent=1 // pred_check_branch
      %4505 = sbr.rel (0) target = $region53
    $region52: #{llama_forward.1} parent=1 // pred_region
      %s4507 = ssub.s32 512, 512
      %4508 = vsyncadd [#allocation3], %s4507
      %s4509 = sshll.u32 [#allocation2], 4
      %s4510 = int_to_ptr.vmem [resolvable:$true] %s4509
      %4515 = dma.vmem_to_hbm [thread:$0]  %s4510, 512, %s12, [#allocation3], 128, 128, 8
    $region53: #{llama_forward.1} parent=1 // pred_fallthru
      _
    // Predicated region
    $region54: #{llama_forward.1} parent=1 // pred_check
      _
    $region55: #{llama_forward.1} parent=1 // pred_check_branch
      %4517 = sbr.rel (0) target = $region57
    $region56: #{llama_forward.1} parent=1 // pred_region
      %4518 = dma.done [#allocation3], 512
    $region57: #{llama_forward.1} parent=1 // pred_fallthru
      _
    %4519 = vsyncpa [#allocation3], 1

</llo_original>
